<compile_context>
chip_gen: v7x
topology: tpu7x:2x2x1
jax: 0.10.0
libtpu: 0.0.40
codegen_flags: <defaults>
</compile_context>

<pallas_src>
import functools
from collections import namedtuple

import numpy as np
import jax
import jax.numpy as jnp
from jax.experimental import pallas as pl
from jax.experimental.pallas import tpu as pltpu


# ----------------------------------------------------------------------------
# generation-aware limits
# ----------------------------------------------------------------------------
def _default_vmem_limit_bytes():
    """~75% of physical VMEM of the current chip (v5e/v6e: 96 MiB, v7x: 48 MiB)."""
    try:
        cap = getattr(pltpu.get_tpu_info(), "vmem_capacity_bytes", None)
        if cap:
            return int(cap) * 3 // 4
    except Exception:
        pass
    return 32 * 1024 * 1024


_VMEM_LIMIT = _default_vmem_limit_bytes()
# per-step working-set budget used to size the conv row tile
_ROW_BUDGET = max(4 << 20, min(12 << 20, _VMEM_LIMIT // 5))


# ----------------------------------------------------------------------------
# small helpers
# ----------------------------------------------------------------------------
def _largest_divisor(n, limit):
    for d in range(min(n, limit), 0, -1):
        if n % d == 0:
            return d
    return 1


def _largest_aligned_divisor(n, limit, align):
    for d in range(min(n, limit), 0, -1):
        if n % d == 0 and d % align == 0:
            return d
    return n


def _pick_row_tile(h, w, cin, cout, budget_bytes, row_cap=None):
    """Largest row tile whose per-step VMEM footprint fits the budget."""
    # per output row: bf16 dx-expanded window + f32 acc + double-buffered
    # bf16 in/out pipeline blocks
    row_bytes = w * (3 * cin * 2 + cout * 4 + 2 * cin * 2 + 2 * cout * 2)
    cap = max(1, int(budget_bytes // max(row_bytes, 1)))
    if row_cap is not None:
        cap = min(cap, row_cap)
    cap = max(1, min(cap, h))
    best = 1
    for th in range(cap, 0, -1):
        if h % th:
            continue
        if th != h and (th * w) % 8 != 0:   # keep block sublane dim 8-aligned
            continue
        best = th
        break
    # degenerate-divisor guard (e.g. prime H): fall back to whole-H tiles
    if best == 1 and h > 1 and h * row_bytes <= 2 * budget_bytes:
        best = h
    return best


# ----------------------------------------------------------------------------
# 3x3 conv (padding=1, stride=1) + bias + optional ReLU, row-tiled.
#
# Per grid step (image i, row tile j) the kernel assembles a dx-expanded bf16
# window in VMEM:
#   xbuf[(u, c), dx*cin + ci] = x[j*th - 1 + u, c - 1 + dx, ci]   (0 outside)
# stored flat as ((th+2)*w, 3*cin).  The conv is then 3 MXU matmuls (one per
# dy) of depth K = 3*cin accumulated into an f32 scratch, followed by the
# bias / ReLU epilogue.  Inputs and outputs are UNPADDED activations.
# ----------------------------------------------------------------------------
def _conv3x3_kernel(xm_ref, xa_ref, xb_ref, edge_ref, w_ref, b_ref, o_ref,
                    xbuf_ref, acc_ref, *, th, w, cin, fuse_relu):
    # xm_ref  : (1, th*w, cin)     tile rows (flattened over columns), bf16
    # xa_ref  : (1, 1, w, cin)     row directly above the tile (clamped)
    # xb_ref  : (1, 1, w, cin)     row directly below the tile (clamped)
    # edge_ref: (L-1, 1)           {0,1} mask, 0 where dest col wraps a row
    # w_ref   : (3, 3*cin, cout)   per-dy weight slabs (dx-major, ci-minor)
    # b_ref   : (1, cout)          f32 bias
    # o_ref   : (1, th*w, cout)    output tile (unpadded)
    # xbuf_ref: ((th+2)*w, 3*cin)  bf16 dx-expanded window scratch
    # acc_ref : (th*w, cout)       f32 accumulator scratch
    L = (th + 2) * w
    c0, c1, c2, c3 = 0, cin, 2 * cin, 3 * cin
    dt = xm_ref.dtype

    # ---- middle (dx=1) slab: window rows = [above, tile rows..., below] ----
    xbuf_ref[pl.ds(0, w), c1:c2] = xa_ref[0, 0]
    xbuf_ref[pl.ds(w, th * w), c1:c2] = xm_ref[0]
    xbuf_ref[pl.ds((th + 1) * w, w), c1:c2] = xb_ref[0, 0]

    j = pl.program_id(1)

    @pl.when(j == 0)
    def _():                     # image top boundary -> zero the above halo
        xbuf_ref[pl.ds(0, w), c1:c2] = jnp.zeros((w, cin), dt)

    @pl.when(j == pl.num_programs(1) - 1)
    def _():                     # image bottom boundary -> zero the below halo
        xbuf_ref[pl.ds((th + 1) * w, w), c1:c2] = jnp.zeros((w, cin), dt)

    # ---- dx=0 / dx=2 slabs: column-shifted copies of the middle slab; the
    #      precomputed edge mask zeroes positions that would wrap image rows.
    edge = edge_ref[...]                                        # (L-1, 1)
    xbuf_ref[pl.ds(1, L - 1), c0:c1] = xbuf_ref[pl.ds(0, L - 1), c1:c2] * edge
    xbuf_ref[pl.ds(0, 1), c0:c1] = jnp.zeros((1, cin), dt)
    xbuf_ref[pl.ds(0, L - 1), c2:c3] = xbuf_ref[pl.ds(1, L - 1), c1:c2] * edge
    xbuf_ref[pl.ds(L - 1, 1), c2:c3] = jnp.zeros((1, cin), dt)

    # ---- 3 matmuls with contraction depth K = 3*cin, f32 accumulation ----
    for dy in range(3):
        lhs = xbuf_ref[pl.ds(dy * w, th * w), :]                # bf16, no cast
        contrib = jnp.dot(lhs, w_ref[dy], preferred_element_type=jnp.float32)
        if dy == 0:
            acc_ref[...] = contrib
        else:
            acc_ref[...] += contrib

    y = acc_ref[...] + b_ref[...]
    if fuse_relu:
        y = jnp.maximum(y, 0.0)
    o_ref[0] = y.astype(o_ref.dtype)


def conv3x3(x, w, b, *, fuse_relu=True, row_cap=None):
    # x: (N, H, W, Cin) NHWC (unpadded) ; w: (3, 3, Cin, Cout) ; b: (Cout,)
    n, h, wdt, cin = x.shape
    cout = w.shape[-1]
    th = _pick_row_tile(h, wdt, cin, cout, _ROW_BUDGET, row_cap)
    t = h // th
    L = (th + 2) * wdt

    x_flat = x.reshape(n, h * wdt, cin)                 # free row-major view
    w3 = w.reshape(3, 3 * cin, cout).astype(x.dtype)    # per-dy (3*cin, cout)
    bf = b.reshape(1, cout).astype(jnp.float32)
    # edge[i] = 0 iff destination flat row (i+1) is the first column of an
    # image row (shared by the dx=0 and dx=2 shifted-slab copies)
    edge = jnp.asarray((np.arange(1, L) % wdt != 0).astype(np.float32),
                       dtype=x.dtype).reshape(L - 1, 1)

    kernel = functools.partial(_conv3x3_kernel, th=th, w=wdt, cin=cin,
                               fuse_relu=fuse_relu)

    def build_and_call(single_buffer_consts):
        const_kw = {}
        if single_buffer_consts:
            const_kw = dict(pipeline_mode=pl.Buffered(1))
        in_specs = [
            pl.BlockSpec((1, th * wdt, cin), lambda i, j: (i, j, 0)),
            pl.BlockSpec((1, 1, wdt, cin),
                         lambda i, j: (i, jnp.maximum(j * th - 1, 0), 0, 0)),
            pl.BlockSpec((1, 1, wdt, cin),
                         lambda i, j: (i, jnp.minimum((j + 1) * th, h - 1), 0, 0)),
            pl.BlockSpec((L - 1, 1), lambda i, j: (0, 0), **const_kw),
            pl.BlockSpec((3, 3 * cin, cout), lambda i, j: (0, 0, 0), **const_kw),
            pl.BlockSpec((1, cout), lambda i, j: (0, 0), **const_kw),
        ]
        return pl.pallas_call(
            kernel,
            grid=(n, t),
            in_specs=in_specs,
            out_specs=pl.BlockSpec((1, th * wdt, cout), lambda i, j: (i, j, 0)),
            out_shape=jax.ShapeDtypeStruct((n, h * wdt, cout), x.dtype),
            scratch_shapes=[
                pltpu.VMEM(((th + 2) * wdt, 3 * cin), x.dtype),   # bf16 window
                pltpu.VMEM((th * wdt, cout), jnp.float32),        # f32 acc
            ],
            compiler_params=pltpu.CompilerParams(
                dimension_semantics=("parallel", "parallel"),
                vmem_limit_bytes=_VMEM_LIMIT,
            ),
        )(x_flat, x, x, edge, w3, bf)

    try:
        y = build_and_call(True)
    except Exception:
        # TODO(synk): pl.Buffered(1) single-buffering rejected by this jax
        # version; fall back to default double-buffered constant operands.
        y = build_and_call(False)
    return y.reshape(n, h, wdt, cout)


# ----------------------------------------------------------------------------
# First conv (tiny Cin): im2col to K = 9*Cin and one fused matmul+bias+ReLU.
# ----------------------------------------------------------------------------
def _matmul_bias_act_kernel(x_ref, w_ref, b_ref, o_ref, *, fuse_relu):
    y = jnp.dot(x_ref[0], w_ref[...], preferred_element_type=jnp.float32)
    y = y + b_ref[...]
    if fuse_relu:
        y = jnp.maximum(y, 0.0)
    o_ref[0] = y.astype(o_ref.dtype)


def conv3x3_im2col(x, w, b, *, fuse_relu=True, row_tile=4096):
    n, h, wdt, cin = x.shape
    cout = w.shape[-1]
    k = 9 * cin
    xp = jnp.pad(x, ((0, 0), (1, 1), (1, 1), (0, 0)))
    cols = [xp[:, dy:dy + h, dx:dx + wdt, :]
            for dy in range(3) for dx in range(3)]
    xc = jnp.concatenate(cols, axis=-1).reshape(n, h * wdt, k)
    tm = _largest_aligned_divisor(h * wdt, row_tile, 8)
    t = (h * wdt) // tm
    wf = w.reshape(k, cout).astype(x.dtype)
    bf = b.reshape(1, cout).astype(jnp.float32)

    y = pl.pallas_call(
        functools.partial(_matmul_bias_act_kernel, fuse_relu=fuse_relu),
        grid=(n, t),
        in_specs=[
            pl.BlockSpec((1, tm, k), lambda i, j: (i, j, 0)),
            pl.BlockSpec((k, cout), lambda i, j: (0, 0)),
            pl.BlockSpec((1, cout), lambda i, j: (0, 0)),
        ],
        out_specs=pl.BlockSpec((1, tm, cout), lambda i, j: (i, j, 0)),
        out_shape=jax.ShapeDtypeStruct((n, h * wdt, cout), x.dtype),
        compiler_params=pltpu.CompilerParams(
            dimension_semantics=("parallel", "parallel"),
            vmem_limit_bytes=_VMEM_LIMIT,
        ),
    )(xc, wf, bf)
    return y.reshape(n, h, wdt, cout)


# ----------------------------------------------------------------------------
# 2x2 max-pool (stride 2) on a lane-dense (W/2, 2*C) view (pure reshape).
# ----------------------------------------------------------------------------
def _maxpool_kernel(x_ref, o_ref, *, c):
    a = jnp.maximum(x_ref[0, :, 0, :, :], x_ref[0, :, 1, :, :])   # H-pair max
    o_ref[0] = jnp.maximum(a[:, :, :c], a[:, :, c:])              # W-pair max


def maxpool2x2(x, *, row_tile=32):
    n, h, w, c = x.shape
    h2, w2 = h // 2, w // 2
    x = x[:, :2 * h2, :2 * w2, :]
    xr = x.reshape(n, h2, 2, w2, 2 * c)      # same linear order, no relayout
    th2 = _largest_divisor(h2, row_tile)
    t = h2 // th2
    return pl.pallas_call(
        functools.partial(_maxpool_kernel, c=c),
        grid=(n, t),
        in_specs=[pl.BlockSpec((1, th2, 2, w2, 2 * c),
                               lambda i, j: (i, j, 0, 0, 0))],
        out_specs=pl.BlockSpec((1, th2, w2, c), lambda i, j: (i, j, 0, 0)),
        out_shape=jax.ShapeDtypeStruct((n, h2, w2, c), x.dtype),
        compiler_params=pltpu.CompilerParams(
            dimension_semantics=("parallel", "parallel")),
    )(xr)


# ----------------------------------------------------------------------------
# list(vgg16(pretrained=True).features)[:23] layer structure
# ----------------------------------------------------------------------------
VGG16_FEATURES_CFG = [
    ("conv", 3, 64), ("relu",), ("conv", 64, 64), ("relu",), ("pool",),
    ("conv", 64, 128), ("relu",), ("conv", 128, 128), ("relu",), ("pool",),
    ("conv", 128, 256), ("relu",), ("conv", 256, 256), ("relu",),
    ("conv", 256, 256), ("relu",), ("pool",),
    ("conv", 256, 512), ("relu",), ("conv", 512, 512), ("relu",),
    ("conv", 512, 512), ("relu",),
]  # indices 0 .. 22, identical ordering to torchvision vgg16.features[:23]


class LossModel:
    """JAX/Pallas port of the PyTorch LossModel (frozen VGG16 feature loss)."""

    def __init__(self, loss_layers_idx, loss_layer_names, key,
                 compute_dtype=jnp.bfloat16):
        self.loss_layers_idx = set(int(i) for i in loss_layers_idx)
        self.loss_layer_names = list(loss_layer_names)
        self.layer_weights = np.array([0.5, 0.6, 0.9, 1])
        self.compute_dtype = compute_dtype
        self.params = {}
        # TODO(synk): pretrained torchvision VGG16 weights cannot be loaded
        # here; these are deterministic He-initialized stand-ins.
        for ii, layer in enumerate(VGG16_FEATURES_CFG):
            if layer[0] == "conv":
                _, cin, cout = layer
                key, kw = jax.random.split(key)
                w = jax.random.normal(kw, (3, 3, cin, cout), jnp.float32)
                w = (w * np.float32(np.sqrt(2.0 / (9 * cin)))).astype(compute_dtype)
                b = jnp.zeros((cout,), jnp.float32)
                self.params[ii] = (w, b)

    def __call__(self, x_nchw):
        # NCHW in (PyTorch convention) -> NHWC / bf16 internally -> NCHW f32 out.
        x = jnp.transpose(x_nchw, (0, 2, 3, 1)).astype(self.compute_dtype)
        results = []
        cfg = VGG16_FEATURES_CFG
        ii = 0
        while ii < len(cfg):
            kind = cfg[ii][0]
            if kind == "conv":
                w, b = self.params[ii]
                cin = cfg[ii][1]
                # fuse the following ReLU unless the conv output itself must
                # be captured pre-activation
                fuse = (ii + 1 < len(cfg) and cfg[ii + 1][0] == "relu"
                        and ii not in self.loss_layers_idx)
                if cin <= 8:
                    x = conv3x3_im2col(x, w, b, fuse_relu=fuse)
                else:
                    x = conv3x3(x, w, b, fuse_relu=fuse)
                if ii in self.loss_layers_idx:
                    results.append(x)
                if fuse:
                    ii += 1                     # the ReLU layer was consumed
                    if ii in self.loss_layers_idx:
                        results.append(x)
            elif kind == "relu":
                # Only reached when the preceding conv is a pre-activation
                # capture layer; plain-JAX glue is sufficient here.
                x = jnp.maximum(x, 0)
                if ii in self.loss_layers_idx:
                    results.append(x)
            else:  # pool
                x = maxpool2x2(x)
                if ii in self.loss_layers_idx:
                    results.append(x)
            ii += 1

        # layer-weight scale fused into the output transpose / f32 cast
        out = []
        for r, wgt in zip(results, self.layer_weights):
            r = jnp.transpose(r, (0, 3, 1, 2)).astype(jnp.float32)
            out.append(r * jnp.float32(wgt))
        VggOutputs = namedtuple("VggOutputs", self.loss_layer_names)
        return VggOutputs(*out)


if __name__ == "__main__":
    key = jax.random.PRNGKey(0)
    key, kx = jax.random.split(key)

    # --- numerical sanity checks of the kernels vs plain JAX ----------------
    kc1, kc2, kc3, kc4, kc5 = jax.random.split(jax.random.PRNGKey(42), 5)
    xt = jax.random.normal(kc1, (2, 16, 16, 64), jnp.float32)
    wt = jax.random.normal(kc2, (3, 3, 64, 128), jnp.float32) * 0.05
    bt = jax.random.normal(kc3, (128,), jnp.float32) * 0.1
    xt_b = xt.astype(jnp.bfloat16).astype(jnp.float32)
    wt_b = wt.astype(jnp.bfloat16).astype(jnp.float32)
    # row_cap=4 forces 4 row tiles -> exercises the top/bottom halo handling
    got = conv3x3(xt.astype(jnp.bfloat16), wt.astype(jnp.bfloat16), bt,
                  fuse_relu=True, row_cap=4).astype(jnp.float32)
    ref = jax.lax.conv_general_dilated(
        xt_b, wt_b, (1, 1), "SAME",
        dimension_numbers=("NHWC", "HWIO", "NHWC"))
    ref = jnp.maximum(ref + bt, 0.0)
    assert float(jnp.max(jnp.abs(got - ref))) < 0.25, "conv3x3 mismatch"

    x3 = jax.random.normal(kc4, (1, 8, 8, 3), jnp.float32)
    w3 = jax.random.normal(kc5, (3, 3, 3, 64), jnp.float32) * 0.2
    b3 = jnp.zeros((64,), jnp.float32)
    got3 = conv3x3_im2col(x3.astype(jnp.bfloat16), w3.astype(jnp.bfloat16), b3,
                          fuse_relu=False).astype(jnp.float32)
    ref3 = jax.lax.conv_general_dilated(
        x3.astype(jnp.bfloat16).astype(jnp.float32),
        w3.astype(jnp.bfloat16).astype(jnp.float32),
        (1, 1), "SAME", dimension_numbers=("NHWC", "HWIO", "NHWC"))
    assert float(jnp.max(jnp.abs(got3 - ref3))) < 0.25, "im2col conv mismatch"

    pool_got = maxpool2x2(xt.astype(jnp.bfloat16)).astype(jnp.float32)
    pool_ref = jnp.max(xt_b.reshape(2, 8, 2, 8, 2, 64), axis=(2, 4))
    assert float(jnp.max(jnp.abs(pool_got - pool_ref))) < 1e-2, "pool mismatch"

    # --- full model ----------------------------------------------------------
    model = LossModel(
        loss_layers_idx=(3, 8, 15, 22),                       # relu1_2..relu4_3
        loss_layer_names=("relu1_2", "relu2_2", "relu3_3", "relu4_3"),
        key=key,
    )

    # Small input consistent with the module: NCHW, 3 channels (VGG RGB input).
    x = jax.random.normal(kx, (2, 3, 16, 16), jnp.float32)

    out = model(x)
    for r in out:
        jax.block_until_ready(r)

    assert out.relu1_2.shape == (2, 64, 16, 16)
    assert out.relu2_2.shape == (2, 128, 8, 8)
    assert out.relu3_3.shape == (2, 256, 4, 4)
    assert out.relu4_3.shape == (2, 512, 2, 2)
    assert all(r.dtype == jnp.float32 for r in out)

    print("KERNEL_OK")
</pallas_src>

<mosaic_0001>
module attributes {stable_mosaic.version = 11 : i64} {
  func.func @_conv3x3_kernel(%arg0: i32, %arg1: i32, %arg2: memref<1x64x64xbf16, #tpu.memory_space<vmem>>, %arg3: memref<1x1x16x64xbf16, #tpu.memory_space<vmem>>, %arg4: memref<1x1x16x64xbf16, #tpu.memory_space<vmem>>, %arg5: memref<95x1xbf16, #tpu.memory_space<vmem>>, %arg6: memref<3x192x128xbf16, #tpu.memory_space<vmem>>, %arg7: memref<1x128xf32, #tpu.memory_space<vmem>>, %arg8: memref<1x64x128xbf16, #tpu.memory_space<vmem>>, %arg9: memref<96x192xbf16, #tpu.memory_space<vmem>>, %arg10: memref<64x128xf32, #tpu.memory_space<vmem>>) attributes {dimension_semantics = [#tpu.dimension_semantics<parallel>, #tpu.dimension_semantics<parallel>], iteration_bounds = array<i64: 2, 4>, scalar_prefetch = 0 : i64, scratch_operands = 2 : i64, tpu.core_type = #tpu.core_type<tc>, window_params = [{transform_indices = @transform_0, window_bounds = array<i64: 1, 64, 64>}, {transform_indices = @transform_1, window_bounds = array<i64: 1, 1, 16, 64>}, {transform_indices = @transform_2, window_bounds = array<i64: 1, 1, 16, 64>}, {pipeline_mode = #tpu.pipeline_mode<synchronous>, transform_indices = @transform_3, window_bounds = array<i64: 95, 1>}, {pipeline_mode = #tpu.pipeline_mode<synchronous>, transform_indices = @transform_4, window_bounds = array<i64: 3, 192, 128>}, {pipeline_mode = #tpu.pipeline_mode<synchronous>, transform_indices = @transform_5, window_bounds = array<i64: 1, 128>}, {transform_indices = @transform_6, window_bounds = array<i64: 1, 64, 128>}]} {
    %c0 = arith.constant 0 : index
    %c0_0 = arith.constant 0 : index
    %c0_1 = arith.constant 0 : index
    %c0_2 = arith.constant 0 : index
    %0 = vector.load %arg3[%c0, %c0_0, %c0_1, %c0_2] : memref<1x1x16x64xbf16, #tpu.memory_space<vmem>>, vector<1x1x16x64xbf16>
    %1 = vector.shape_cast %0 : vector<1x1x16x64xbf16> to vector<16x64xbf16>
    %c0_3 = arith.constant 0 : index
    %c64 = arith.constant 64 : index
    %2 = vector.load %arg9[%c0_3, %c64] : memref<96x192xbf16, #tpu.memory_space<vmem>>, vector<16x64xbf16>
    tpu.vector_store %arg9[%c0_3, %c64], %1 {strides = array<i32>} : memref<96x192xbf16, #tpu.memory_space<vmem>>, vector<16x64xbf16>,
    %c0_4 = arith.constant 0 : index
    %c0_5 = arith.constant 0 : index
    %c0_6 = arith.constant 0 : index
    %3 = vector.load %arg2[%c0_4, %c0_5, %c0_6] : memref<1x64x64xbf16, #tpu.memory_space<vmem>>, vector<1x64x64xbf16>
    %4 = vector.shape_cast %3 : vector<1x64x64xbf16> to vector<64x64xbf16>
    %c16 = arith.constant 16 : index
    %c64_7 = arith.constant 64 : index
    %5 = vector.load %arg9[%c16, %c64_7] : memref<96x192xbf16, #tpu.memory_space<vmem>>, vector<64x64xbf16>
    tpu.vector_store %arg9[%c16, %c64_7], %4 {strides = array<i32>} : memref<96x192xbf16, #tpu.memory_space<vmem>>, vector<64x64xbf16>,
    %c0_8 = arith.constant 0 : index
    %c0_9 = arith.constant 0 : index
    %c0_10 = arith.constant 0 : index
    %c0_11 = arith.constant 0 : index
    %6 = vector.load %arg4[%c0_8, %c0_9, %c0_10, %c0_11] : memref<1x1x16x64xbf16, #tpu.memory_space<vmem>>, vector<1x1x16x64xbf16>
    %7 = vector.shape_cast %6 : vector<1x1x16x64xbf16> to vector<16x64xbf16>
    %c80 = arith.constant 80 : index
    %c64_12 = arith.constant 64 : index
    %8 = vector.load %arg9[%c80, %c64_12] : memref<96x192xbf16, #tpu.memory_space<vmem>>, vector<16x64xbf16>
    tpu.vector_store %arg9[%c80, %c64_12], %7 {strides = array<i32>} : memref<96x192xbf16, #tpu.memory_space<vmem>>, vector<16x64xbf16>,
    %c0_i32 = arith.constant 0 : i32
    %9 = arith.cmpi eq, %arg1, %c0_i32 : i32
    %10 = arith.extui %9 : i1 to i32
    %c0_i32_13 = arith.constant 0 : i32
    %11 = arith.cmpi ne, %10, %c0_i32_13 : i32
    scf.if %11 {
      %cst_61 = arith.constant 0.000000e+00 : bf16
      %57 = vector.broadcast %cst_61 : bf16 to vector<16x64xbf16>
      %c0_62 = arith.constant 0 : index
      %c64_63 = arith.constant 64 : index
      %58 = vector.load %arg9[%c0_62, %c64_63] : memref<96x192xbf16, #tpu.memory_space<vmem>>, vector<16x64xbf16>
      tpu.vector_store %arg9[%c0_62, %c64_63], %57 {strides = array<i32>} : memref<96x192xbf16, #tpu.memory_space<vmem>>, vector<16x64xbf16>,
    } else {
    }
    %c3_i32 = arith.constant 3 : i32
    %12 = arith.cmpi eq, %arg1, %c3_i32 : i32
    %13 = arith.extui %12 : i1 to i32
    %c0_i32_14 = arith.constant 0 : i32
    %14 = arith.cmpi ne, %13, %c0_i32_14 : i32
    scf.if %14 {
      %cst_61 = arith.constant 0.000000e+00 : bf16
      %57 = vector.broadcast %cst_61 : bf16 to vector<16x64xbf16>
      %c80_62 = arith.constant 80 : index
      %c64_63 = arith.constant 64 : index
      %58 = vector.load %arg9[%c80_62, %c64_63] : memref<96x192xbf16, #tpu.memory_space<vmem>>, vector<16x64xbf16>
      tpu.vector_store %arg9[%c80_62, %c64_63], %57 {strides = array<i32>} : memref<96x192xbf16, #tpu.memory_space<vmem>>, vector<16x64xbf16>,
    } else {
    }
    %c0_15 = arith.constant 0 : index
    %c0_16 = arith.constant 0 : index
    %15 = vector.load %arg5[%c0_15, %c0_16] : memref<95x1xbf16, #tpu.memory_space<vmem>>, vector<95x1xbf16>
    %c0_17 = arith.constant 0 : index
    %c64_18 = arith.constant 64 : index
    %16 = vector.load %arg9[%c0_17, %c64_18] : memref<96x192xbf16, #tpu.memory_space<vmem>>, vector<95x64xbf16>
    %17 = vector.broadcast %15 : vector<95x1xbf16> to vector<95x64xbf16>
    %18 = arith.mulf %16, %17 : vector<95x64xbf16>
    %c1 = arith.constant 1 : index
    %c0_19 = arith.constant 0 : index
    %19 = vector.load %arg9[%c1, %c0_19] : memref<96x192xbf16, #tpu.memory_space<vmem>>, vector<95x64xbf16>
    tpu.vector_store %arg9[%c1, %c0_19], %18 {strides = array<i32>} : memref<96x192xbf16, #tpu.memory_space<vmem>>, vector<95x64xbf16>,
    %cst = arith.constant 0.000000e+00 : bf16
    %20 = vector.broadcast %cst : bf16 to vector<1x64xbf16>
    %c0_20 = arith.constant 0 : index
    %c0_21 = arith.constant 0 : index
    %21 = vector.load %arg9[%c0_20, %c0_21] : memref<96x192xbf16, #tpu.memory_space<vmem>>, vector<1x64xbf16>
    tpu.vector_store %arg9[%c0_20, %c0_21], %20 {strides = array<i32>} : memref<96x192xbf16, #tpu.memory_space<vmem>>, vector<1x64xbf16>,
    %c1_22 = arith.constant 1 : index
    %c64_23 = arith.constant 64 : index
    %22 = vector.load %arg9[%c1_22, %c64_23] : memref<96x192xbf16, #tpu.memory_space<vmem>>, vector<95x64xbf16>
    %23 = vector.broadcast %15 : vector<95x1xbf16> to vector<95x64xbf16>
    %24 = arith.mulf %22, %23 : vector<95x64xbf16>
    %c0_24 = arith.constant 0 : index
    %c128 = arith.constant 128 : index
    %25 = vector.load %arg9[%c0_24, %c128] : memref<96x192xbf16, #tpu.memory_space<vmem>>, vector<95x64xbf16>
    tpu.vector_store %arg9[%c0_24, %c128], %24 {strides = array<i32>} : memref<96x192xbf16, #tpu.memory_space<vmem>>, vector<95x64xbf16>,
    %cst_25 = arith.constant 0.000000e+00 : bf16
    %26 = vector.broadcast %cst_25 : bf16 to vector<1x64xbf16>
    %c95 = arith.constant 95 : index
    %c128_26 = arith.constant 128 : index
    %27 = vector.load %arg9[%c95, %c128_26] : memref<96x192xbf16, #tpu.memory_space<vmem>>, vector<1x64xbf16>
    tpu.vector_store %arg9[%c95, %c128_26], %26 {strides = array<i32>} : memref<96x192xbf16, #tpu.memory_space<vmem>>, vector<1x64xbf16>,
    %c0_27 = arith.constant 0 : index
    %c0_28 = arith.constant 0 : index
    %28 = vector.load %arg9[%c0_27, %c0_28] : memref<96x192xbf16, #tpu.memory_space<vmem>>, vector<64x192xbf16>
    %c0_29 = arith.constant 0 : index
    %c0_30 = arith.constant 0 : index
    %c0_31 = arith.constant 0 : index
    %29 = vector.load %arg6[%c0_29, %c0_30, %c0_31] : memref<3x192x128xbf16, #tpu.memory_space<vmem>>, vector<1x192x128xbf16>
    %30 = vector.shape_cast %29 : vector<1x192x128xbf16> to vector<192x128xbf16>
    %cst_32 = arith.constant dense<0.000000e+00> : vector<64x128xf32>
    %31 = tpu.matmul %28, %30, %cst_32 {dimension_numbers = #tpu.dot_dimension_numbers<[1], [0], [0], [1], [0, 0, 1, 1], [], []>} : vector<64x192xbf16>, vector<192x128xbf16>, vector<64x128xf32> -> vector<64x128xf32>
    %c0_33 = arith.constant 0 : index
    %c0_34 = arith.constant 0 : index
    %32 = vector.load %arg10[%c0_33, %c0_34] : memref<64x128xf32, #tpu.memory_space<vmem>>, vector<64x128xf32>
    tpu.vector_store %arg10[%c0_33, %c0_34], %31 {strides = array<i32>} : memref<64x128xf32, #tpu.memory_space<vmem>>, vector<64x128xf32>,
    %c16_35 = arith.constant 16 : index
    %c0_36 = arith.constant 0 : index
    %33 = vector.load %arg9[%c16_35, %c0_36] : memref<96x192xbf16, #tpu.memory_space<vmem>>, vector<64x192xbf16>
    %c1_37 = arith.constant 1 : index
    %c0_38 = arith.constant 0 : index
    %c0_39 = arith.constant 0 : index
    %34 = vector.load %arg6[%c1_37, %c0_38, %c0_39] : memref<3x192x128xbf16, #tpu.memory_space<vmem>>, vector<1x192x128xbf16>
    %35 = vector.shape_cast %34 : vector<1x192x128xbf16> to vector<192x128xbf16>
    %cst_40 = arith.constant dense<0.000000e+00> : vector<64x128xf32>
    %36 = tpu.matmul %33, %35, %cst_40 {dimension_numbers = #tpu.dot_dimension_numbers<[1], [0], [0], [1], [0, 0, 1, 1], [], []>} : vector<64x192xbf16>, vector<192x128xbf16>, vector<64x128xf32> -> vector<64x128xf32>
    %c0_41 = arith.constant 0 : index
    %c0_42 = arith.constant 0 : index
    %37 = vector.load %arg10[%c0_41, %c0_42] : memref<64x128xf32, #tpu.memory_space<vmem>>, vector<64x128xf32>
    %38 = arith.addf %37, %36 : vector<64x128xf32>
    %c0_43 = arith.constant 0 : index
    %c0_44 = arith.constant 0 : index
    %39 = vector.load %arg10[%c0_43, %c0_44] : memref<64x128xf32, #tpu.memory_space<vmem>>, vector<64x128xf32>
    tpu.vector_store %arg10[%c0_43, %c0_44], %38 {strides = array<i32>} : memref<64x128xf32, #tpu.memory_space<vmem>>, vector<64x128xf32>,
    %c32 = arith.constant 32 : index
    %c0_45 = arith.constant 0 : index
    %40 = vector.load %arg9[%c32, %c0_45] : memref<96x192xbf16, #tpu.memory_space<vmem>>, vector<64x192xbf16>
    %c2 = arith.constant 2 : index
    %c0_46 = arith.constant 0 : index
    %c0_47 = arith.constant 0 : index
    %41 = vector.load %arg6[%c2, %c0_46, %c0_47] : memref<3x192x128xbf16, #tpu.memory_space<vmem>>, vector<1x192x128xbf16>
    %42 = vector.shape_cast %41 : vector<1x192x128xbf16> to vector<192x128xbf16>
    %cst_48 = arith.constant dense<0.000000e+00> : vector<64x128xf32>
    %43 = tpu.matmul %40, %42, %cst_48 {dimension_numbers = #tpu.dot_dimension_numbers<[1], [0], [0], [1], [0, 0, 1, 1], [], []>} : vector<64x192xbf16>, vector<192x128xbf16>, vector<64x128xf32> -> vector<64x128xf32>
    %c0_49 = arith.constant 0 : index
    %c0_50 = arith.constant 0 : index
    %44 = vector.load %arg10[%c0_49, %c0_50] : memref<64x128xf32, #tpu.memory_space<vmem>>, vector<64x128xf32>
    %45 = arith.addf %44, %43 : vector<64x128xf32>
    %c0_51 = arith.constant 0 : index
    %c0_52 = arith.constant 0 : index
    %46 = vector.load %arg10[%c0_51, %c0_52] : memref<64x128xf32, #tpu.memory_space<vmem>>, vector<64x128xf32>
    tpu.vector_store %arg10[%c0_51, %c0_52], %45 {strides = array<i32>} : memref<64x128xf32, #tpu.memory_space<vmem>>, vector<64x128xf32>,
    %c0_53 = arith.constant 0 : index
    %c0_54 = arith.constant 0 : index
    %47 = vector.load %arg10[%c0_53, %c0_54] : memref<64x128xf32, #tpu.memory_space<vmem>>, vector<64x128xf32>
    %c0_55 = arith.constant 0 : index
    %c0_56 = arith.constant 0 : index
    %48 = vector.load %arg7[%c0_55, %c0_56] : memref<1x128xf32, #tpu.memory_space<vmem>>, vector<1x128xf32>
    %49 = vector.broadcast %48 : vector<1x128xf32> to vector<64x128xf32>
    %50 = arith.addf %47, %49 : vector<64x128xf32>
    %cst_57 = arith.constant 0.000000e+00 : f32
    %51 = vector.broadcast %cst_57 : f32 to vector<64x128xf32>
    %52 = arith.maximumf %50, %51 : vector<64x128xf32>
    %53 = arith.truncf %52 : vector<64x128xf32> to vector<64x128xbf16>
    %c0_58 = arith.constant 0 : index
    %c0_59 = arith.constant 0 : index
    %c0_60 = arith.constant 0 : index
    %54 = vector.load %arg8[%c0_58, %c0_59, %c0_60] : memref<1x64x128xbf16, #tpu.memory_space<vmem>>, vector<1x64x128xbf16>
    %55 = vector.shape_cast %54 : vector<1x64x128xbf16> to vector<64x128xbf16>
    %56 = vector.shape_cast %53 : vector<64x128xbf16> to vector<1x64x128xbf16>
    tpu.vector_store %arg8[%c0_58, %c0_59, %c0_60], %56 {strides = array<i32>} : memref<1x64x128xbf16, #tpu.memory_space<vmem>>, vector<1x64x128xbf16>,
    return
  }
  func.func @transform_0(%arg0: i32, %arg1: i32) -> (i32, i32, i32) {
    %c0_i32 = arith.constant 0 : i32
    %c0_i32_0 = arith.constant 0 : i32
    return %arg0, %arg1, %c0_i32 : i32, i32, i32
  }
  func.func @transform_1(%arg0: i32, %arg1: i32) -> (i32, i32, i32, i32) {
    %c4_i32 = arith.constant 4 : i32
    %0 = arith.muli %arg1, %c4_i32 : i32
    %c1_i32 = arith.constant 1 : i32
    %1 = arith.subi %0, %c1_i32 : i32
    %c0_i32 = arith.constant 0 : i32
    %2 = arith.maxsi %1, %c0_i32 : i32
    %c0_i32_0 = arith.constant 0 : i32
    %c0_i32_1 = arith.constant 0 : i32
    %c0_i32_2 = arith.constant 0 : i32
    return %arg0, %2, %c0_i32_0, %c0_i32_1 : i32, i32, i32, i32
  }
  func.func @transform_2(%arg0: i32, %arg1: i32) -> (i32, i32, i32, i32) {
    %c1_i32 = arith.constant 1 : i32
    %0 = arith.addi %arg1, %c1_i32 : i32
    %c4_i32 = arith.constant 4 : i32
    %1 = arith.muli %0, %c4_i32 : i32
    %c15_i32 = arith.constant 15 : i32
    %2 = arith.minsi %1, %c15_i32 : i32
    %c0_i32 = arith.constant 0 : i32
    %c0_i32_0 = arith.constant 0 : i32
    %c0_i32_1 = arith.constant 0 : i32
    return %arg0, %2, %c0_i32, %c0_i32_0 : i32, i32, i32, i32
  }
  func.func @transform_3(%arg0: i32, %arg1: i32) -> (i32, i32) {
    %c0_i32 = arith.constant 0 : i32
    %c0_i32_0 = arith.constant 0 : i32
    %c0_i32_1 = arith.constant 0 : i32
    return %c0_i32, %c0_i32_0 : i32, i32
  }
  func.func @transform_4(%arg0: i32, %arg1: i32) -> (i32, i32, i32) {
    %c0_i32 = arith.constant 0 : i32
    %c0_i32_0 = arith.constant 0 : i32
    %c0_i32_1 = arith.constant 0 : i32
    %c0_i32_2 = arith.constant 0 : i32
    return %c0_i32, %c0_i32_0, %c0_i32_1 : i32, i32, i32
  }
  func.func @transform_5(%arg0: i32, %arg1: i32) -> (i32, i32) {
    %c0_i32 = arith.constant 0 : i32
    %c0_i32_0 = arith.constant 0 : i32
    %c0_i32_1 = arith.constant 0 : i32
    return %c0_i32, %c0_i32_0 : i32, i32
  }
  func.func @transform_6(%arg0: i32, %arg1: i32) -> (i32, i32, i32) {
    %c0_i32 = arith.constant 0 : i32
    %c0_i32_0 = arith.constant 0 : i32
    return %arg0, %arg1, %c0_i32 : i32, i32, i32
  }
}

module attributes {stable_mosaic.version = 11 : i64} {
  func.func @_conv3x3_kernel(%arg0: i32, %arg1: i32, %arg2: memref<1x64x64xbf16, #tpu.memory_space<vmem>>, %arg3: memref<1x1x16x64xbf16, #tpu.memory_space<vmem>>, %arg4: memref<1x1x16x64xbf16, #tpu.memory_space<vmem>>, %arg5: memref<95x1xbf16, #tpu.memory_space<vmem>>, %arg6: memref<3x192x128xbf16, #tpu.memory_space<vmem>>, %arg7: memref<1x128xf32, #tpu.memory_space<vmem>>, %arg8: memref<1x64x128xbf16, #tpu.memory_space<vmem>>, %arg9: memref<96x192xbf16, #tpu.memory_space<vmem>>, %arg10: memref<64x128xf32, #tpu.memory_space<vmem>>) attributes {dimension_semantics = [#tpu.dimension_semantics<parallel>, #tpu.dimension_semantics<parallel>], iteration_bounds = array<i64: 2, 4>, scalar_prefetch = 0 : i64, scratch_operands = 2 : i64, tpu.core_type = #tpu.core_type<tc>, window_params = [{transform_indices = @transform_0, window_bounds = array<i64: 1, 64, 64>}, {transform_indices = @transform_1, window_bounds = array<i64: 1, 1, 16, 64>}, {transform_indices = @transform_2, window_bounds = array<i64: 1, 1, 16, 64>}, {pipeline_mode = #tpu.pipeline_mode<synchronous>, transform_indices = @transform_3, window_bounds = array<i64: 95, 1>}, {pipeline_mode = #tpu.pipeline_mode<synchronous>, transform_indices = @transform_4, window_bounds = array<i64: 3, 192, 128>}, {pipeline_mode = #tpu.pipeline_mode<synchronous>, transform_indices = @transform_5, window_bounds = array<i64: 1, 128>}, {transform_indices = @transform_6, window_bounds = array<i64: 1, 64, 128>}]} {
    %c0 = arith.constant 0 : index
    %c0_0 = arith.constant 0 : index
    %c0_1 = arith.constant 0 : index
    %c0_2 = arith.constant 0 : index
    %0 = vector.load %arg3[%c0, %c0_0, %c0_1, %c0_2] : memref<1x1x16x64xbf16, #tpu.memory_space<vmem>>, vector<1x1x16x64xbf16>
    %1 = vector.shape_cast %0 : vector<1x1x16x64xbf16> to vector<16x64xbf16>
    %c0_3 = arith.constant 0 : index
    %c64 = arith.constant 64 : index
    %2 = vector.load %arg9[%c0_3, %c64] : memref<96x192xbf16, #tpu.memory_space<vmem>>, vector<16x64xbf16>
    tpu.vector_store %arg9[%c0_3, %c64], %1 {strides = array<i32>} : memref<96x192xbf16, #tpu.memory_space<vmem>>, vector<16x64xbf16>,
    %c0_4 = arith.constant 0 : index
    %c0_5 = arith.constant 0 : index
    %c0_6 = arith.constant 0 : index
    %3 = vector.load %arg2[%c0_4, %c0_5, %c0_6] : memref<1x64x64xbf16, #tpu.memory_space<vmem>>, vector<1x64x64xbf16>
    %4 = vector.shape_cast %3 : vector<1x64x64xbf16> to vector<64x64xbf16>
    %c16 = arith.constant 16 : index
    %c64_7 = arith.constant 64 : index
    %5 = vector.load %arg9[%c16, %c64_7] : memref<96x192xbf16, #tpu.memory_space<vmem>>, vector<64x64xbf16>
    tpu.vector_store %arg9[%c16, %c64_7], %4 {strides = array<i32>} : memref<96x192xbf16, #tpu.memory_space<vmem>>, vector<64x64xbf16>,
    %c0_8 = arith.constant 0 : index
    %c0_9 = arith.constant 0 : index
    %c0_10 = arith.constant 0 : index
    %c0_11 = arith.constant 0 : index
    %6 = vector.load %arg4[%c0_8, %c0_9, %c0_10, %c0_11] : memref<1x1x16x64xbf16, #tpu.memory_space<vmem>>, vector<1x1x16x64xbf16>
    %7 = vector.shape_cast %6 : vector<1x1x16x64xbf16> to vector<16x64xbf16>
    %c80 = arith.constant 80 : index
    %c64_12 = arith.constant 64 : index
    %8 = vector.load %arg9[%c80, %c64_12] : memref<96x192xbf16, #tpu.memory_space<vmem>>, vector<16x64xbf16>
    tpu.vector_store %arg9[%c80, %c64_12], %7 {strides = array<i32>} : memref<96x192xbf16, #tpu.memory_space<vmem>>, vector<16x64xbf16>,
    %c0_i32 = arith.constant 0 : i32
    %9 = arith.cmpi eq, %arg1, %c0_i32 : i32
    %10 = arith.extui %9 : i1 to i32
    %c0_i32_13 = arith.constant 0 : i32
    %11 = arith.cmpi ne, %10, %c0_i32_13 : i32
    scf.if %11 {
      %cst_61 = arith.constant 0.000000e+00 : bf16
      %57 = vector.broadcast %cst_61 : bf16 to vector<16x64xbf16>
      %c0_62 = arith.constant 0 : index
      %c64_63 = arith.constant 64 : index
      %58 = vector.load %arg9[%c0_62, %c64_63] : memref<96x192xbf16, #tpu.memory_space<vmem>>, vector<16x64xbf16>
      tpu.vector_store %arg9[%c0_62, %c64_63], %57 {strides = array<i32>} : memref<96x192xbf16, #tpu.memory_space<vmem>>, vector<16x64xbf16>,
    } else {
    }
    %c3_i32 = arith.constant 3 : i32
    %12 = arith.cmpi eq, %arg1, %c3_i32 : i32
    %13 = arith.extui %12 : i1 to i32
    %c0_i32_14 = arith.constant 0 : i32
    %14 = arith.cmpi ne, %13, %c0_i32_14 : i32
    scf.if %14 {
      %cst_61 = arith.constant 0.000000e+00 : bf16
      %57 = vector.broadcast %cst_61 : bf16 to vector<16x64xbf16>
      %c80_62 = arith.constant 80 : index
      %c64_63 = arith.constant 64 : index
      %58 = vector.load %arg9[%c80_62, %c64_63] : memref<96x192xbf16, #tpu.memory_space<vmem>>, vector<16x64xbf16>
      tpu.vector_store %arg9[%c80_62, %c64_63], %57 {strides = array<i32>} : memref<96x192xbf16, #tpu.memory_space<vmem>>, vector<16x64xbf16>,
    } else {
    }
    %c0_15 = arith.constant 0 : index
    %c0_16 = arith.constant 0 : index
    %15 = vector.load %arg5[%c0_15, %c0_16] : memref<95x1xbf16, #tpu.memory_space<vmem>>, vector<95x1xbf16>
    %c0_17 = arith.constant 0 : index
    %c64_18 = arith.constant 64 : index
    %16 = vector.load %arg9[%c0_17, %c64_18] : memref<96x192xbf16, #tpu.memory_space<vmem>>, vector<95x64xbf16>
    %17 = vector.broadcast %15 : vector<95x1xbf16> to vector<95x64xbf16>
    %18 = arith.mulf %16, %17 : vector<95x64xbf16>
    %c1 = arith.constant 1 : index
    %c0_19 = arith.constant 0 : index
    %19 = vector.load %arg9[%c1, %c0_19] : memref<96x192xbf16, #tpu.memory_space<vmem>>, vector<95x64xbf16>
    tpu.vector_store %arg9[%c1, %c0_19], %18 {strides = array<i32>} : memref<96x192xbf16, #tpu.memory_space<vmem>>, vector<95x64xbf16>,
    %cst = arith.constant 0.000000e+00 : bf16
    %20 = vector.broadcast %cst : bf16 to vector<1x64xbf16>
    %c0_20 = arith.constant 0 : index
    %c0_21 = arith.constant 0 : index
    %21 = vector.load %arg9[%c0_20, %c0_21] : memref<96x192xbf16, #tpu.memory_space<vmem>>, vector<1x64xbf16>
    tpu.vector_store %arg9[%c0_20, %c0_21], %20 {strides = array<i32>} : memref<96x192xbf16, #tpu.memory_space<vmem>>, vector<1x64xbf16>,
    %c1_22 = arith.constant 1 : index
    %c64_23 = arith.constant 64 : index
    %22 = vector.load %arg9[%c1_22, %c64_23] : memref<96x192xbf16, #tpu.memory_space<vmem>>, vector<95x64xbf16>
    %23 = vector.broadcast %15 : vector<95x1xbf16> to vector<95x64xbf16>
    %24 = arith.mulf %22, %23 : vector<95x64xbf16>
    %c0_24 = arith.constant 0 : index
    %c128 = arith.constant 128 : index
    %25 = vector.load %arg9[%c0_24, %c128] : memref<96x192xbf16, #tpu.memory_space<vmem>>, vector<95x64xbf16>
    tpu.vector_store %arg9[%c0_24, %c128], %24 {strides = array<i32>} : memref<96x192xbf16, #tpu.memory_space<vmem>>, vector<95x64xbf16>,
    %cst_25 = arith.constant 0.000000e+00 : bf16
    %26 = vector.broadcast %cst_25 : bf16 to vector<1x64xbf16>
    %c95 = arith.constant 95 : index
    %c128_26 = arith.constant 128 : index
    %27 = vector.load %arg9[%c95, %c128_26] : memref<96x192xbf16, #tpu.memory_space<vmem>>, vector<1x64xbf16>
    tpu.vector_store %arg9[%c95, %c128_26], %26 {strides = array<i32>} : memref<96x192xbf16, #tpu.memory_space<vmem>>, vector<1x64xbf16>,
    %c0_27 = arith.constant 0 : index
    %c0_28 = arith.constant 0 : index
    %28 = vector.load %arg9[%c0_27, %c0_28] : memref<96x192xbf16, #tpu.memory_space<vmem>>, vector<64x192xbf16>
    %c0_29 = arith.constant 0 : index
    %c0_30 = arith.constant 0 : index
    %c0_31 = arith.constant 0 : index
    %29 = vector.load %arg6[%c0_29, %c0_30, %c0_31] : memref<3x192x128xbf16, #tpu.memory_space<vmem>>, vector<1x192x128xbf16>
    %30 = vector.shape_cast %29 : vector<1x192x128xbf16> to vector<192x128xbf16>
    %cst_32 = arith.constant dense<0.000000e+00> : vector<64x128xf32>
    %31 = tpu.matmul %28, %30, %cst_32 {dimension_numbers = #tpu.dot_dimension_numbers<[1], [0], [0], [1], [0, 0, 1, 1], [], []>} : vector<64x192xbf16>, vector<192x128xbf16>, vector<64x128xf32> -> vector<64x128xf32>
    %c0_33 = arith.constant 0 : index
    %c0_34 = arith.constant 0 : index
    %32 = vector.load %arg10[%c0_33, %c0_34] : memref<64x128xf32, #tpu.memory_space<vmem>>, vector<64x128xf32>
    tpu.vector_store %arg10[%c0_33, %c0_34], %31 {strides = array<i32>} : memref<64x128xf32, #tpu.memory_space<vmem>>, vector<64x128xf32>,
    %c16_35 = arith.constant 16 : index
    %c0_36 = arith.constant 0 : index
    %33 = vector.load %arg9[%c16_35, %c0_36] : memref<96x192xbf16, #tpu.memory_space<vmem>>, vector<64x192xbf16>
    %c1_37 = arith.constant 1 : index
    %c0_38 = arith.constant 0 : index
    %c0_39 = arith.constant 0 : index
    %34 = vector.load %arg6[%c1_37, %c0_38, %c0_39] : memref<3x192x128xbf16, #tpu.memory_space<vmem>>, vector<1x192x128xbf16>
    %35 = vector.shape_cast %34 : vector<1x192x128xbf16> to vector<192x128xbf16>
    %cst_40 = arith.constant dense<0.000000e+00> : vector<64x128xf32>
    %36 = tpu.matmul %33, %35, %cst_40 {dimension_numbers = #tpu.dot_dimension_numbers<[1], [0], [0], [1], [0, 0, 1, 1], [], []>} : vector<64x192xbf16>, vector<192x128xbf16>, vector<64x128xf32> -> vector<64x128xf32>
    %c0_41 = arith.constant 0 : index
    %c0_42 = arith.constant 0 : index
    %37 = vector.load %arg10[%c0_41, %c0_42] : memref<64x128xf32, #tpu.memory_space<vmem>>, vector<64x128xf32>
    %38 = arith.addf %37, %36 : vector<64x128xf32>
    %c0_43 = arith.constant 0 : index
    %c0_44 = arith.constant 0 : index
    %39 = vector.load %arg10[%c0_43, %c0_44] : memref<64x128xf32, #tpu.memory_space<vmem>>, vector<64x128xf32>
    tpu.vector_store %arg10[%c0_43, %c0_44], %38 {strides = array<i32>} : memref<64x128xf32, #tpu.memory_space<vmem>>, vector<64x128xf32>,
    %c32 = arith.constant 32 : index
    %c0_45 = arith.constant 0 : index
    %40 = vector.load %arg9[%c32, %c0_45] : memref<96x192xbf16, #tpu.memory_space<vmem>>, vector<64x192xbf16>
    %c2 = arith.constant 2 : index
    %c0_46 = arith.constant 0 : index
    %c0_47 = arith.constant 0 : index
    %41 = vector.load %arg6[%c2, %c0_46, %c0_47] : memref<3x192x128xbf16, #tpu.memory_space<vmem>>, vector<1x192x128xbf16>
    %42 = vector.shape_cast %41 : vector<1x192x128xbf16> to vector<192x128xbf16>
    %cst_48 = arith.constant dense<0.000000e+00> : vector<64x128xf32>
    %43 = tpu.matmul %40, %42, %cst_48 {dimension_numbers = #tpu.dot_dimension_numbers<[1], [0], [0], [1], [0, 0, 1, 1], [], []>} : vector<64x192xbf16>, vector<192x128xbf16>, vector<64x128xf32> -> vector<64x128xf32>
    %c0_49 = arith.constant 0 : index
    %c0_50 = arith.constant 0 : index
    %44 = vector.load %arg10[%c0_49, %c0_50] : memref<64x128xf32, #tpu.memory_space<vmem>>, vector<64x128xf32>
    %45 = arith.addf %44, %43 : vector<64x128xf32>
    %c0_51 = arith.constant 0 : index
    %c0_52 = arith.constant 0 : index
    %46 = vector.load %arg10[%c0_51, %c0_52] : memref<64x128xf32, #tpu.memory_space<vmem>>, vector<64x128xf32>
    tpu.vector_store %arg10[%c0_51, %c0_52], %45 {strides = array<i32>} : memref<64x128xf32, #tpu.memory_space<vmem>>, vector<64x128xf32>,
    %c0_53 = arith.constant 0 : index
    %c0_54 = arith.constant 0 : index
    %47 = vector.load %arg10[%c0_53, %c0_54] : memref<64x128xf32, #tpu.memory_space<vmem>>, vector<64x128xf32>
    %c0_55 = arith.constant 0 : index
    %c0_56 = arith.constant 0 : index
    %48 = vector.load %arg7[%c0_55, %c0_56] : memref<1x128xf32, #tpu.memory_space<vmem>>, vector<1x128xf32>
    %49 = vector.broadcast %48 : vector<1x128xf32> to vector<64x128xf32>
    %50 = arith.addf %47, %49 : vector<64x128xf32>
    %cst_57 = arith.constant 0.000000e+00 : f32
    %51 = vector.broadcast %cst_57 : f32 to vector<64x128xf32>
    %52 = arith.maximumf %50, %51 : vector<64x128xf32>
    %53 = arith.truncf %52 : vector<64x128xf32> to vector<64x128xbf16>
    %c0_58 = arith.constant 0 : index
    %c0_59 = arith.constant 0 : index
    %c0_60 = arith.constant 0 : index
    %54 = vector.load %arg8[%c0_58, %c0_59, %c0_60] : memref<1x64x128xbf16, #tpu.memory_space<vmem>>, vector<1x64x128xbf16>
    %55 = vector.shape_cast %54 : vector<1x64x128xbf16> to vector<64x128xbf16>
    %56 = vector.shape_cast %53 : vector<64x128xbf16> to vector<1x64x128xbf16>
    tpu.vector_store %arg8[%c0_58, %c0_59, %c0_60], %56 {strides = array<i32>} : memref<1x64x128xbf16, #tpu.memory_space<vmem>>, vector<1x64x128xbf16>,
    return
  }
  func.func @transform_0(%arg0: i32, %arg1: i32) -> (i32, i32, i32) {
    %c0_i32 = arith.constant 0 : i32
    %c0_i32_0 = arith.constant 0 : i32
    return %arg0, %arg1, %c0_i32 : i32, i32, i32
  }
  func.func @transform_1(%arg0: i32, %arg1: i32) -> (i32, i32, i32, i32) {
    %c4_i32 = arith.constant 4 : i32
    %0 = arith.muli %arg1, %c4_i32 : i32
    %c1_i32 = arith.constant 1 : i32
    %1 = arith.subi %0, %c1_i32 : i32
    %c0_i32 = arith.constant 0 : i32
    %2 = arith.maxsi %1, %c0_i32 : i32
    %c0_i32_0 = arith.constant 0 : i32
    %c0_i32_1 = arith.constant 0 : i32
    %c0_i32_2 = arith.constant 0 : i32
    return %arg0, %2, %c0_i32_0, %c0_i32_1 : i32, i32, i32, i32
  }
  func.func @transform_2(%arg0: i32, %arg1: i32) -> (i32, i32, i32, i32) {
    %c1_i32 = arith.constant 1 : i32
    %0 = arith.addi %arg1, %c1_i32 : i32
    %c4_i32 = arith.constant 4 : i32
    %1 = arith.muli %0, %c4_i32 : i32
    %c15_i32 = arith.constant 15 : i32
    %2 = arith.minsi %1, %c15_i32 : i32
    %c0_i32 = arith.constant 0 : i32
    %c0_i32_0 = arith.constant 0 : i32
    %c0_i32_1 = arith.constant 0 : i32
    return %arg0, %2, %c0_i32, %c0_i32_0 : i32, i32, i32, i32
  }
  func.func @transform_3(%arg0: i32, %arg1: i32) -> (i32, i32) {
    %c0_i32 = arith.constant 0 : i32
    %c0_i32_0 = arith.constant 0 : i32
    %c0_i32_1 = arith.constant 0 : i32
    return %c0_i32, %c0_i32_0 : i32, i32
  }
  func.func @transform_4(%arg0: i32, %arg1: i32) -> (i32, i32, i32) {
    %c0_i32 = arith.constant 0 : i32
    %c0_i32_0 = arith.constant 0 : i32
    %c0_i32_1 = arith.constant 0 : i32
    %c0_i32_2 = arith.constant 0 : i32
    return %c0_i32, %c0_i32_0, %c0_i32_1 : i32, i32, i32
  }
  func.func @transform_5(%arg0: i32, %arg1: i32) -> (i32, i32) {
    %c0_i32 = arith.constant 0 : i32
    %c0_i32_0 = arith.constant 0 : i32
    %c0_i32_1 = arith.constant 0 : i32
    return %c0_i32, %c0_i32_0 : i32, i32
  }
  func.func @transform_6(%arg0: i32, %arg1: i32) -> (i32, i32, i32) {
    %c0_i32 = arith.constant 0 : i32
    %c0_i32_0 = arith.constant 0 : i32
    return %arg0, %arg1, %c0_i32 : i32, i32, i32
  }
}

</mosaic_0001>

<llo_original>
// kernel: tpu_custom_call.1
$region0: #{tpu_custom_call.1}
  #allocation0 [shape = 'u32[]', space=smem, size = 0x4, offset = 0x4, fixed_abs, tag = 'smem constant byte address 0x4 - core index']
  #allocation1 [shape = 'u32[144,128]{1,0:T(1,128)}', space=vmem, size = 0x12000, scoped, tag = 'internal scratch']
  #allocation2 [shape = 'bf16[96,192]{1,0:T(16,128)(2,1)}', space=vmem, size = 0xc000, scoped, tag = 'scratch operand']
  #allocation3 [shape = 'f32[64,128]{1,0:T(8,128)}', space=vmem, size = 0x8000, scoped, tag = 'scratch operand']
  %s0 = inlined_call_operand.vmem [shape: bf16[2,256,64], index: 0, kind: input, shape index: {}]
  %s1 = inlined_call_operand.hbm [shape: bf16[2,16,16,64], index: 1, kind: input, shape index: {}]
  %s2 = inlined_call_operand.hbm [shape: bf16[2,16,16,64], index: 2, kind: input, shape index: {}]
  %s3 = inlined_call_operand.vmem [shape: bf16[95,1], index: 3, kind: input, shape index: {}]
  %s4 = inlined_call_operand.vmem [shape: bf16[3,192,128], index: 4, kind: input, shape index: {}]
  %s5 = inlined_call_operand.vmem [shape: f32[1,128], index: 5, kind: input, shape index: {}]
  %s6 = inlined_call_operand.hbm [shape: bf16[2,256,128], index: 6, kind: output, shape index: {}]
  %s7 = sld [smem:[#allocation0]]
  $region73: #{tpu_custom_call.1} parent=0
    _
  %s9 = ssub.s32 1, %s7
  %s10 = scalar_select 0, %s9, %s7
  $region1: #{tpu_custom_call.1} parent=0
    #allocation4 [shape = 'u8[8192]{0}', space=vmem, size = 0x2000, scoped, tag = 'input window, operand 1']
    #allocation5 [shape = 's32[2]{0}', space=sflag, size = 0x8, scoped, tag = 'scoped memory for tpu_custom_call.1']
    #allocation6 [shape = 's32[2]{0}', space=sflag, size = 0x8, scoped, tag = 'scoped memory for tpu_custom_call.1']
    #allocation7 [shape = 'u8[8192]{0}', space=vmem, size = 0x2000, scoped, tag = 'input window, operand 2']
    #allocation8 [shape = 's32[2]{0}', space=sflag, size = 0x8, scoped, tag = 'scoped memory for tpu_custom_call.1']
    #allocation9 [shape = 'u8[32768]{0}', space=vmem, size = 0x8000, scoped, tag = 'output window, operand 0']
    %11 = vsyncpa [#allocation5], 0
    %s12 = scalar_lea.sflag [#allocation5], 1
    %13 = vsyncpa %s12, 0
    %14 = vsyncpa [#allocation8], 0
    %s15 = scalar_lea.sflag [#allocation8], 1
    %16 = vsyncpa %s15, 0
    %17 = vsyncpa [#allocation6], 0
    %s18 = scalar_lea.sflag [#allocation6], 1
    %19 = vsyncpa %s18, 0
    loop: start=0, step=1, limit=10
    $region2: #{tpu_custom_call.1} parent=1 // loop_pre_header
      _
    $region3: #{tpu_custom_call.1} parent=1 // loop_header
      %s21 = sphi 0, %s25
      %p22 = scmp.ge.s32.totalorder %s21, 10
      %s28 = sphi 0, %s40
      %s29 = sphi 0, %s36
      %s30 = sphi 0, %s28
      %s31 = sphi 0, %s29
      %s32 = sphi 0, %s30
      %s33 = sphi 0, %s31
      %s45 = sphi 0, %s47
      %s48 = sphi 0, %s45
      %s49 = sphi 0, %s48
      %s65 = sphi 0, %s49
      %s81 = sphi 0, %s83
      %s84 = sphi 0, %s81
      %s85 = sphi 0, %s84
      %s101 = sphi 0, %s85
      %s117 = sphi 0, %s119
      %s120 = sphi 0, %s117
      %s121 = sphi 0, %s120
      %s137 = sphi 0, %s121
      %s141 = sphi 0, %s141
      %s143 = sphi 0, %s141
      %s144 = sphi 0, %s143
      %s158 = sphi 0, %s144
      %s162 = sphi 0, %s162
      %s164 = sphi 0, %s162
      %s165 = sphi 0, %s164
      %s179 = sphi 0, %s165
      %s183 = sphi 0, %s183
      %s185 = sphi 0, %s183
      %s186 = sphi 0, %s185
      %s200 = sphi 0, %s186
      %s208 = sphi 0, %s210
      %s211 = sphi 0, %s208
      %s212 = sphi 0, %s211
      %s228 = sphi 0, %s212
    $region4: #{tpu_custom_call.1} parent=1 // loop_header_branch
      %24 = sbr.rel (%p22) target = $region8
    $region5: #{tpu_custom_call.1} parent=1 // loop_body
      %s26 = ssub.s32 %s21, 1
      %s27 = ssub.s32 %s21, 2
      %s34 = sadd.s32 1, %s29
      %p35 = scmp.ge.s32.totalorder %s34, 4
      %s36 = scalar_select %p35, 0, %s34
      %s37 = sadd.s32 1, %s28
      %s38 = scalar_select %p35, %s37, %s28
      %p39 = scmp.ge.s32.totalorder %s38, 2
      %s40 = scalar_select %p39, 0, %s38
      %s41 = ssub.s32 %s28, %s40
      %s42 = ssub.s32 %s29, %s36
      %s43 = sor.u32 %s41, %s42
      %p44 = scmp.eq.s32.totalorder %s43, 0
      %s46 = sadd.s32 %s45, 1
      %s47 = scalar_select %p44, %s45, %s46
      %p50 = pneg %p44
      %p51 = scmp.eq.s32.totalorder %s21, 7
      %p52 = por %p50, %p51
      %p53 = scmp.ne.s32.totalorder %s45, %s48
      %p54 = scmp.eq.s32.totalorder %s21, 0
      %p55 = por %p53, %p54
      %p56 = scmp.ne.s32.totalorder %s45, %s48
      %p57 = scmp.eq.s32.totalorder %s26, 7
      %p58 = por %p56, %p57
      %p59 = scmp.ne.s32.totalorder %s48, %s49
      %p60 = scmp.eq.s32.totalorder %s26, 0
      %p61 = por %p59, %p60
      %p62 = scmp.ne.s32.totalorder %s48, %s49
      %p63 = scmp.eq.s32.totalorder %s27, 7
      %p64 = por %p62, %p63
      %p66 = scmp.ne.s32.totalorder %s49, %s65
      %p67 = scmp.eq.s32.totalorder %s27, 0
      %p68 = por %p66, %p67
      %s69 = smul.u32 %s29, 4
      %s70 = ssub.s32 %s69, 1
      %p71 = scmp.gt.s32.totalorder %s70, 0
      %s72 = scalar_select %p71, %s70, 0
      %s73 = smul.u32 %s36, 4
      %s74 = ssub.s32 %s73, 1
      %p75 = scmp.gt.s32.totalorder %s74, 0
      %s76 = scalar_select %p75, %s74, 0
      %s77 = ssub.s32 %s28, %s40
      %s78 = ssub.s32 %s72, %s76
      %s79 = sor.u32 %s77, %s78
      %p80 = scmp.eq.s32.totalorder %s79, 0
      %s82 = sadd.s32 %s81, 1
      %s83 = scalar_select %p80, %s81, %s82
      %p86 = pneg %p80
      %p87 = scmp.eq.s32.totalorder %s21, 7
      %p88 = por %p86, %p87
      %p89 = scmp.ne.s32.totalorder %s81, %s84
      %p90 = scmp.eq.s32.totalorder %s21, 0
      %p91 = por %p89, %p90
      %p92 = scmp.ne.s32.totalorder %s81, %s84
      %p93 = scmp.eq.s32.totalorder %s26, 7
      %p94 = por %p92, %p93
      %p95 = scmp.ne.s32.totalorder %s84, %s85
      %p96 = scmp.eq.s32.totalorder %s26, 0
      %p97 = por %p95, %p96
      %p98 = scmp.ne.s32.totalorder %s84, %s85
      %p99 = scmp.eq.s32.totalorder %s27, 7
      %p100 = por %p98, %p99
      %p102 = scmp.ne.s32.totalorder %s85, %s101
      %p103 = scmp.eq.s32.totalorder %s27, 0
      %p104 = por %p102, %p103
      %s105 = sadd.s32 %s29, 1
      %s106 = smul.u32 %s105, 4
      %p107 = scmp.lt.s32.totalorder %s106, 15
      %s108 = scalar_select %p107, %s106, 15
      %s109 = sadd.s32 %s36, 1
      %s110 = smul.u32 %s109, 4
      %p111 = scmp.lt.s32.totalorder %s110, 15
      %s112 = scalar_select %p111, %s110, 15
      %s113 = ssub.s32 %s28, %s40
      %s114 = ssub.s32 %s108, %s112
      %s115 = sor.u32 %s113, %s114
      %p116 = scmp.eq.s32.totalorder %s115, 0
      %s118 = sadd.s32 %s117, 1
      %s119 = scalar_select %p116, %s117, %s118
      %p122 = pneg %p116
      %p123 = scmp.eq.s32.totalorder %s21, 7
      %p124 = por %p122, %p123
      %p125 = scmp.ne.s32.totalorder %s117, %s120
      %p126 = scmp.eq.s32.totalorder %s21, 0
      %p127 = por %p125, %p126
      %p128 = scmp.ne.s32.totalorder %s117, %s120
      %p129 = scmp.eq.s32.totalorder %s26, 7
      %p130 = por %p128, %p129
      %p131 = scmp.ne.s32.totalorder %s120, %s121
      %p132 = scmp.eq.s32.totalorder %s26, 0
      %p133 = por %p131, %p132
      %p134 = scmp.ne.s32.totalorder %s120, %s121
      %p135 = scmp.eq.s32.totalorder %s27, 7
      %p136 = por %p134, %p135
      %p138 = scmp.ne.s32.totalorder %s121, %s137
      %p139 = scmp.eq.s32.totalorder %s27, 0
      %p140 = por %p138, %p139
      %s142 = sadd.s32 %s141, 1
      %p145 = scmp.eq.s32.totalorder %s21, 7
      %p146 = scmp.ne.s32.totalorder %s141, %s143
      %p147 = scmp.eq.s32.totalorder %s21, 0
      %p148 = por %p146, %p147
      %p149 = scmp.ne.s32.totalorder %s141, %s143
      %p150 = scmp.eq.s32.totalorder %s26, 7
      %p151 = por %p149, %p150
      %p152 = scmp.ne.s32.totalorder %s143, %s144
      %p153 = scmp.eq.s32.totalorder %s26, 0
      %p154 = por %p152, %p153
      %p155 = scmp.ne.s32.totalorder %s143, %s144
      %p156 = scmp.eq.s32.totalorder %s27, 7
      %p157 = por %p155, %p156
      %p159 = scmp.ne.s32.totalorder %s144, %s158
      %p160 = scmp.eq.s32.totalorder %s27, 0
      %p161 = por %p159, %p160
      %s163 = sadd.s32 %s162, 1
      %p166 = scmp.eq.s32.totalorder %s21, 7
      %p167 = scmp.ne.s32.totalorder %s162, %s164
      %p168 = scmp.eq.s32.totalorder %s21, 0
      %p169 = por %p167, %p168
      %p170 = scmp.ne.s32.totalorder %s162, %s164
      %p171 = scmp.eq.s32.totalorder %s26, 7
      %p172 = por %p170, %p171
      %p173 = scmp.ne.s32.totalorder %s164, %s165
      %p174 = scmp.eq.s32.totalorder %s26, 0
      %p175 = por %p173, %p174
      %p176 = scmp.ne.s32.totalorder %s164, %s165
      %p177 = scmp.eq.s32.totalorder %s27, 7
      %p178 = por %p176, %p177
      %p180 = scmp.ne.s32.totalorder %s165, %s179
      %p181 = scmp.eq.s32.totalorder %s27, 0
      %p182 = por %p180, %p181
      %s184 = sadd.s32 %s183, 1
      %p187 = scmp.eq.s32.totalorder %s21, 7
      %p188 = scmp.ne.s32.totalorder %s183, %s185
      %p189 = scmp.eq.s32.totalorder %s21, 0
      %p190 = por %p188, %p189
      %p191 = scmp.ne.s32.totalorder %s183, %s185
      %p192 = scmp.eq.s32.totalorder %s26, 7
      %p193 = por %p191, %p192
      %p194 = scmp.ne.s32.totalorder %s185, %s186
      %p195 = scmp.eq.s32.totalorder %s26, 0
      %p196 = por %p194, %p195
      %p197 = scmp.ne.s32.totalorder %s185, %s186
      %p198 = scmp.eq.s32.totalorder %s27, 7
      %p199 = por %p197, %p198
      %p201 = scmp.ne.s32.totalorder %s186, %s200
      %p202 = scmp.eq.s32.totalorder %s27, 0
      %p203 = por %p201, %p202
      %s204 = ssub.s32 %s28, %s40
      %s205 = ssub.s32 %s29, %s36
      %s206 = sor.u32 %s204, %s205
      %p207 = scmp.eq.s32.totalorder %s206, 0
      %s209 = sadd.s32 %s208, 1
      %s210 = scalar_select %p207, %s208, %s209
      %p213 = pneg %p207
      %p214 = scmp.eq.s32.totalorder %s21, 7
      %p215 = por %p213, %p214
      %p216 = scmp.ne.s32.totalorder %s208, %s211
      %p217 = scmp.eq.s32.totalorder %s21, 0
      %p218 = por %p216, %p217
      %p219 = scmp.ne.s32.totalorder %s208, %s211
      %p220 = scmp.eq.s32.totalorder %s26, 7
      %p221 = por %p219, %p220
      %p222 = scmp.ne.s32.totalorder %s211, %s212
      %p223 = scmp.eq.s32.totalorder %s26, 0
      %p224 = por %p222, %p223
      %p225 = scmp.ne.s32.totalorder %s211, %s212
      %p226 = scmp.eq.s32.totalorder %s27, 7
      %p227 = por %p225, %p226
      %p229 = scmp.ne.s32.totalorder %s212, %s228
      %p230 = scmp.eq.s32.totalorder %s27, 0
      %p231 = por %p229, %p230
      %p232 = scmp.le.s32.totalorder 1, %s21
      %p233 = scmp.lt.s32.totalorder %s21, 9
      %p234 = pnand %p232, %p233
      %p235 = pneg %p234
      // Predicated region
      $region9: #{tpu_custom_call.1} parent=5 // pred_check
        _
      $region10: #{tpu_custom_call.1} parent=5 // pred_check_branch
        %237 = sbr.rel (%p234) target = $region12
      $region11: #{tpu_custom_call.1} parent=5 // pred_region
        %s238 = ssub.s32 %s21, 1
        // Predicated region
        $region13: #{tpu_custom_call.1} parent=11 // pred_check
          %p239 = pneg %p154
        $region14: #{tpu_custom_call.1} parent=11 // pred_check_branch
          %241 = sbr.rel (%p239) target = $region16
        $region15: #{tpu_custom_call.1} parent=11 // pred_region
          _
        $region16: #{tpu_custom_call.1} parent=11 // pred_fallthru
          _
        // Predicated region
        $region17: #{tpu_custom_call.1} parent=11 // pred_check
          %p242 = pneg %p175
        $region18: #{tpu_custom_call.1} parent=11 // pred_check_branch
          %244 = sbr.rel (%p242) target = $region20
        $region19: #{tpu_custom_call.1} parent=11 // pred_region
          _
        $region20: #{tpu_custom_call.1} parent=11 // pred_fallthru
          _
        // Predicated region
        $region21: #{tpu_custom_call.1} parent=11 // pred_check
          %p245 = pneg %p196
        $region22: #{tpu_custom_call.1} parent=11 // pred_check_branch
          %247 = sbr.rel (%p245) target = $region24
        $region23: #{tpu_custom_call.1} parent=11 // pred_region
          _
        $region24: #{tpu_custom_call.1} parent=11 // pred_fallthru
          _
      $region12: #{tpu_custom_call.1} parent=5 // pred_fallthru
        _
      %p248 = scmp.lt.s32.totalorder %s21, 8
      // Predicated region
      $region25: #{tpu_custom_call.1} parent=5 // pred_check
        %p249 = pneg %p248
      $region26: #{tpu_custom_call.1} parent=5 // pred_check_branch
        %251 = sbr.rel (%p249) target = $region28
      $region27: #{tpu_custom_call.1} parent=5 // pred_region
        // Predicated region
        $region29: #{tpu_custom_call.1} parent=27 // pred_check
          %p252 = pneg %p55
        $region30: #{tpu_custom_call.1} parent=27 // pred_check_branch
          %254 = sbr.rel (%p252) target = $region32
        $region31: #{tpu_custom_call.1} parent=27 // pred_region
          %s255 = smul.u32 8, %s29
          %p256 = scmp.lt.s32.totalorder %s28, 1
          %s257 = scalar_select %p256, %s28, 1
          %p258 = scmp.lt.s32.totalorder %s255, 31
          %s259 = scalar_select %p258, %s255, 31
          %s260 = smul.addr %s257, 32
          %s261 = sadd.s32 %s259, %s260
          %s262 = smul.addr %s261, 4
          %s263 = scalar_lea.vmem %s0, %s262
          %s264 = smul.u32 8, %s29
        $region32: #{tpu_custom_call.1} parent=27 // pred_fallthru
          _
        // Predicated region
        $region33: #{tpu_custom_call.1} parent=27 // pred_check
          %p265 = pneg %p91
        $region34: #{tpu_custom_call.1} parent=27 // pred_check_branch
          %267 = sbr.rel (%p265) target = $region36
        $region35: #{tpu_custom_call.1} parent=27 // pred_region
          %s268 = sand.u32 %s81, 1
          %s269 = scalar_lea.sflag [#allocation5], %s268
          %s270 = sand.u32 %s81, 1
          %s271 = smul.addr %s270, 8
          %s272 = scalar_lea.vmem [#allocation4], %s271
          %s273 = smul.u32 %s29, 4
          %s274 = ssub.s32 %s273, 1
          %p275 = scmp.gt.s32.totalorder %s274, 0
          %s276 = scalar_select %p275, %s274, 0
          %s278 = ssub.s32 128, 128
          %279 = vsyncadd %s269, %s278
          %s280 = smul.addr %s276, 2
          %s281 = smul.addr %s28, 32
          %s282 = sadd.s32 %s280, %s281
          %s283 = smul.addr %s282, 64
          %s284 = scalar_lea.hbm %s1, %s283
          %s285 = sshll.u32 %s272, 4
          %s286 = int_to_ptr.vmem [resolvable:$true] %s285
          %291 = dma.hbm_to_vmem [thread:$0]  %s284, 128, %s286, %s269, 64, 64, 4
        $region36: #{tpu_custom_call.1} parent=27 // pred_fallthru
          _
        // Predicated region
        $region37: #{tpu_custom_call.1} parent=27 // pred_check
          %p292 = pneg %p127
        $region38: #{tpu_custom_call.1} parent=27 // pred_check_branch
          %294 = sbr.rel (%p292) target = $region40
        $region39: #{tpu_custom_call.1} parent=27 // pred_region
          %s295 = sand.u32 %s117, 1
          %s296 = scalar_lea.sflag [#allocation8], %s295
          %s297 = sand.u32 %s117, 1
          %s298 = smul.addr %s297, 8
          %s299 = scalar_lea.vmem [#allocation7], %s298
          %s300 = sadd.s32 %s29, 1
          %s301 = smul.u32 %s300, 4
          %p302 = scmp.lt.s32.totalorder %s301, 15
          %s303 = scalar_select %p302, %s301, 15
          %s305 = ssub.s32 128, 128
          %306 = vsyncadd %s296, %s305
          %s307 = smul.addr %s303, 2
          %s308 = smul.addr %s28, 32
          %s309 = sadd.s32 %s307, %s308
          %s310 = smul.addr %s309, 64
          %s311 = scalar_lea.hbm %s2, %s310
          %s312 = sshll.u32 %s299, 4
          %s313 = int_to_ptr.vmem [resolvable:$true] %s312
          %318 = dma.hbm_to_vmem [thread:$0]  %s311, 128, %s313, %s296, 64, 64, 4
        $region40: #{tpu_custom_call.1} parent=27 // pred_fallthru
          _
      $region28: #{tpu_custom_call.1} parent=5 // pred_fallthru
        _
      %p319 = scmp.le.s32.totalorder 1, %s21
      %p320 = scmp.lt.s32.totalorder %s21, 9
      %p321 = pnand %p319, %p320
      %p322 = pneg %p321
      // Predicated region
      $region41: #{tpu_custom_call.1} parent=5 // pred_check
        _
      $region42: #{tpu_custom_call.1} parent=5 // pred_check_branch
        %324 = sbr.rel (%p321) target = $region44
      $region43: #{tpu_custom_call.1} parent=5 // pred_region
        %s325 = ssub.s32 %s21, 1
        %s326 = sand.u32 %s84, 1
        %s327 = scalar_lea.sflag [#allocation5], %s326
        %s328 = sand.u32 %s84, 1
        %s329 = smul.addr %s328, 8
        %s330 = scalar_lea.vmem [#allocation4], %s329
        // Predicated region
        $region45: #{tpu_custom_call.1} parent=43 // pred_check
          %p331 = pneg %p97
        $region46: #{tpu_custom_call.1} parent=43 // pred_check_branch
          %333 = sbr.rel (%p331) target = $region48
        $region47: #{tpu_custom_call.1} parent=43 // pred_region
          %334 = dma.done %s327, 128
        $region48: #{tpu_custom_call.1} parent=43 // pred_fallthru
          _
        %s335 = sand.u32 %s120, 1
        %s336 = scalar_lea.sflag [#allocation8], %s335
        %s337 = sand.u32 %s120, 1
        %s338 = smul.addr %s337, 8
        %s339 = scalar_lea.vmem [#allocation7], %s338
        // Predicated region
        $region49: #{tpu_custom_call.1} parent=43 // pred_check
          %p340 = pneg %p133
        $region50: #{tpu_custom_call.1} parent=43 // pred_check_branch
          %342 = sbr.rel (%p340) target = $region52
        $region51: #{tpu_custom_call.1} parent=43 // pred_region
          %343 = dma.done %s336, 128
        $region52: #{tpu_custom_call.1} parent=43 // pred_fallthru
          _
        %s344 = smul.u32 8, %s31
        %p345 = scmp.lt.s32.totalorder %s30, 1
        %s346 = scalar_select %p345, %s30, 1
        %p347 = scmp.lt.s32.totalorder %s344, 31
        %s348 = scalar_select %p347, %s344, 31
        %s349 = smul.addr %s346, 32
        %s350 = sadd.s32 %s348, %s349
        %s351 = smul.addr %s350, 4
        %s352 = scalar_lea.vmem %s0, %s351
        %p353 = pneg %p61
        %p354 = pneg %p58
        %s355 = sand.u32 %s84, 1
        %s356 = scalar_lea.sflag [#allocation5], %s355
        %s357 = sand.u32 %s84, 1
        %s358 = smul.addr %s357, 8
        %s359 = scalar_lea.vmem [#allocation4], %s358
        %p360 = pneg %p97
        %p361 = pneg %p94
        %s362 = sand.u32 %s120, 1
        %s363 = scalar_lea.sflag [#allocation8], %s362
        %s364 = sand.u32 %s120, 1
        %s365 = smul.addr %s364, 8
        %s366 = scalar_lea.vmem [#allocation7], %s365
        %p367 = pneg %p133
        %p368 = pneg %p130
        %p369 = pneg %p154
        %p370 = pneg %p151
        %p371 = pneg %p175
        %p372 = pneg %p172
        %p373 = pneg %p196
        %p374 = pneg %p193
        %p375 = pneg %p224
        %p376 = pneg %p221
        %s377 = sand.u32 %s211, 1
        %s378 = scalar_lea.sflag [#allocation6], %s377
        %s379 = sand.u32 %s211, 1
        %s380 = smul.addr %s379, 32
        %s381 = scalar_lea.vmem [#allocation9], %s380
        %s382 = smul.u32 8, %s31
        %p383 = scmp.lt.s32.totalorder %s30, 1
        %s384 = scalar_select %p383, %s30, 1
        %p385 = scmp.lt.s32.totalorder %s382, 31
        %s386 = scalar_select %p385, %s382, 31
        %s387 = smul.addr %s384, 32
        %s388 = sadd.s32 %s386, %s387
        %s389 = smul.addr %s388, 4
        %s390 = scalar_lea.vmem %s0, %s389
        %s391 = smul.u32 8, %s31
        %s392 = smul.u32 %s31, 4
        %s393 = ssub.s32 %s392, 1
        %p394 = scmp.gt.s32.totalorder %s393, 0
        %s395 = scalar_select %p394, %s393, 0
        %s396 = sadd.s32 %s31, 1
        %s397 = smul.u32 %s396, 4
        %p398 = scmp.lt.s32.totalorder %s397, 15
        %s399 = scalar_select %p398, %s397, 15
        %s400 = smul.u32 8, %s31
        %v402 = vld [vmem:[%s330] sm:$0xf]
        %v403 = vld [vmem:[%s330 + $0x4] sm:$0xf]
        %v406 = vunpack.c.l.b16 %v402
        %v407 = vunpack.c.l.b16 %v403
        %v408 = vpack.c.b16 %v407, %v406
        %409 = vrot.lane.b32.xlu0 %v408, 64
        %v410 = vpop.permute.xlu0 %409
        %vm412 = vcmask 1048064
        %413 = vst.msk [vmem:[#allocation2] sm:$0xff] %vm412, %v410
        %v414 = vld [vmem:[%s390] sm:$0xf]
        %v415 = vld [vmem:[%s390 + $0x4] sm:$0xf]
        %v416 = vld [vmem:[%s390 + $0x8] sm:$0xf]
        %v417 = vld [vmem:[%s390 + $0xc] sm:$0xf]
        %v418 = vld [vmem:[%s390 + $0x10] sm:$0xf]
        %v419 = vld [vmem:[%s390 + $0x14] sm:$0xf]
        %v420 = vld [vmem:[%s390 + $0x18] sm:$0xf]
        %v421 = vld [vmem:[%s390 + $0x1c] sm:$0xf]
        %v430 = vunpack.c.l.b16 %v414
        %v431 = vunpack.c.l.b16 %v415
        %v432 = vunpack.c.l.b16 %v416
        %v433 = vunpack.c.l.b16 %v417
        %v434 = vunpack.c.l.b16 %v418
        %v435 = vunpack.c.l.b16 %v419
        %v436 = vunpack.c.l.b16 %v420
        %v437 = vunpack.c.l.b16 %v421
        %v438 = vpack.c.b16 %v431, %v430
        %v439 = vpack.c.b16 %v433, %v432
        %v440 = vpack.c.b16 %v435, %v434
        %v441 = vpack.c.b16 %v437, %v436
        %442 = vrot.lane.b32.xlu0 %v438, 64
        %v443 = vpop.permute.xlu0 %442
        %444 = vrot.lane.b32.xlu0 %v439, 64
        %v445 = vpop.permute.xlu0 %444
        %446 = vrot.lane.b32.xlu0 %v440, 64
        %v447 = vpop.permute.xlu0 %446
        %448 = vrot.lane.b32.xlu0 %v441, 64
        %v449 = vpop.permute.xlu0 %448
        %454 = vst.msk [vmem:[#allocation2 + $0x10] sm:$0xff] %vm412, %v443
        %455 = vst.msk [vmem:[#allocation2 + $0x20] sm:$0xff] %vm412, %v445
        %456 = vst.msk [vmem:[#allocation2 + $0x30] sm:$0xff] %vm412, %v447
        %457 = vst.msk [vmem:[#allocation2 + $0x40] sm:$0xff] %vm412, %v449
        %v458 = vld [vmem:[%s339] sm:$0xf]
        %v459 = vld [vmem:[%s339 + $0x4] sm:$0xf]
        %v462 = vunpack.c.l.b16 %v458
        %v463 = vunpack.c.l.b16 %v459
        %v464 = vpack.c.b16 %v463, %v462
        %465 = vrot.lane.b32.xlu0 %v464, 64
        %v466 = vpop.permute.xlu0 %465
        %468 = vst.msk [vmem:[#allocation2 + $0x50] sm:$0xff] %vm412, %v466
        %p469 = scmp.eq.s32.totalorder %s31, 0
        // Predicated region
        $region53: #{tpu_custom_call.1} parent=43 // pred_check
          %p470 = pneg %p469
        $region54: #{tpu_custom_call.1} parent=43 // pred_check_branch
          %472 = sbr.rel (%p470) target = $region56
        $region55: #{tpu_custom_call.1} parent=43 // pred_region
          %473 = vst.msk [vmem:[#allocation2] sm:$0xff] %vm412, 0
        $region56: #{tpu_custom_call.1} parent=43 // pred_fallthru
          _
        %p474 = scmp.eq.s32.totalorder %s31, 3
        // Predicated region
        $region57: #{tpu_custom_call.1} parent=43 // pred_check
          %p475 = pneg %p474
        $region58: #{tpu_custom_call.1} parent=43 // pred_check_branch
          %477 = sbr.rel (%p475) target = $region60
        $region59: #{tpu_custom_call.1} parent=43 // pred_region
          %478 = vst.msk [vmem:[#allocation2 + $0x50] sm:$0xff] %vm412, 0
        $region60: #{tpu_custom_call.1} parent=43 // pred_fallthru
          _
        %v479 = vld [vmem:[%s3] sm:$0xf]
        %v480 = vld [vmem:[%s3 + $0x4] sm:$0xf]
        %v481 = vld [vmem:[%s3 + $0x8] sm:$0xf]
        %v482 = vld [vmem:[%s3 + $0xc] sm:$0xf]
        %v483 = vld [vmem:[%s3 + $0x10] sm:$0xf]
        %v484 = vld [vmem:[%s3 + $0x14] sm:$0xf]
        %v485 = vld [vmem:[%s3 + $0x18] sm:$0xf]
        %v486 = vld [vmem:[%s3 + $0x1c] sm:$0xf]
        %v487 = vld [vmem:[%s3 + $0x20] sm:$0xf]
        %v488 = vld [vmem:[%s3 + $0x24] sm:$0xf]
        %v489 = vld [vmem:[%s3 + $0x28] sm:$0xf]
        %v490 = vld [vmem:[%s3 + $0x2c] sm:$0xf]
        %v491 = vld [vmem:[#allocation2] sm:$0xff]
        %v492 = vld [vmem:[#allocation2 + $0x10] sm:$0xff]
        %v493 = vld [vmem:[#allocation2 + $0x20] sm:$0xff]
        %v494 = vld [vmem:[#allocation2 + $0x30] sm:$0xff]
        %v495 = vld [vmem:[#allocation2 + $0x40] sm:$0xff]
        %v496 = vld [vmem:[#allocation2 + $0x50] sm:$0xff]
        %498 = vset.pattern.permute.xlu0 0
        %499 = vperm.xlu0 %498, %v479
        %v500 = vpop.permute.xlu0 %499
        %v503 = vunpack.c.l.s4 839922192
        %v504 = vunpack.c.0.s8 %v503
        %v505 = vlaneseq
        %v506 = vshrl.u32 %v505, 7
        %v507 = vsub.s32 %v504, %v506
        %v508 = vrot.slane %v500, %v507
        %510 = vset.pattern.permute.xlu0 0
        %511 = vperm.xlu0 %510, %v480
        %v512 = vpop.permute.xlu0 %511
        %v515 = vunpack.c.l.s4 839922192
        %v516 = vunpack.c.0.s8 %v515
        %v517 = vlaneseq
        %v518 = vshrl.u32 %v517, 7
        %v519 = vsub.s32 %v516, %v518
        %v520 = vrot.slane %v512, %v519
        %522 = vset.pattern.permute.xlu0 0
        %523 = vperm.xlu0 %522, %v481
        %v524 = vpop.permute.xlu0 %523
        %v527 = vunpack.c.l.s4 839922192
        %v528 = vunpack.c.0.s8 %v527
        %v529 = vlaneseq
        %v530 = vshrl.u32 %v529, 7
        %v531 = vsub.s32 %v528, %v530
        %v532 = vrot.slane %v524, %v531
        %534 = vset.pattern.permute.xlu0 0
        %535 = vperm.xlu0 %534, %v482
        %v536 = vpop.permute.xlu0 %535
        %v539 = vunpack.c.l.s4 839922192
        %v540 = vunpack.c.0.s8 %v539
        %v541 = vlaneseq
        %v542 = vshrl.u32 %v541, 7
        %v543 = vsub.s32 %v540, %v542
        %v544 = vrot.slane %v536, %v543
        %546 = vset.pattern.permute.xlu0 0
        %547 = vperm.xlu0 %546, %v483
        %v548 = vpop.permute.xlu0 %547
        %v551 = vunpack.c.l.s4 839922192
        %v552 = vunpack.c.0.s8 %v551
        %v553 = vlaneseq
        %v554 = vshrl.u32 %v553, 7
        %v555 = vsub.s32 %v552, %v554
        %v556 = vrot.slane %v548, %v555
        %558 = vset.pattern.permute.xlu0 0
        %559 = vperm.xlu0 %558, %v484
        %v560 = vpop.permute.xlu0 %559
        %v563 = vunpack.c.l.s4 839922192
        %v564 = vunpack.c.0.s8 %v563
        %v565 = vlaneseq
        %v566 = vshrl.u32 %v565, 7
        %v567 = vsub.s32 %v564, %v566
        %v568 = vrot.slane %v560, %v567
        %570 = vset.pattern.permute.xlu0 0
        %571 = vperm.xlu0 %570, %v485
        %v572 = vpop.permute.xlu0 %571
        %v575 = vunpack.c.l.s4 839922192
        %v576 = vunpack.c.0.s8 %v575
        %v577 = vlaneseq
        %v578 = vshrl.u32 %v577, 7
        %v579 = vsub.s32 %v576, %v578
        %v580 = vrot.slane %v572, %v579
        %582 = vset.pattern.permute.xlu0 0
        %583 = vperm.xlu0 %582, %v486
        %v584 = vpop.permute.xlu0 %583
        %v587 = vunpack.c.l.s4 839922192
        %v588 = vunpack.c.0.s8 %v587
        %v589 = vlaneseq
        %v590 = vshrl.u32 %v589, 7
        %v591 = vsub.s32 %v588, %v590
        %v592 = vrot.slane %v584, %v591
        %594 = vset.pattern.permute.xlu0 0
        %595 = vperm.xlu0 %594, %v487
        %v596 = vpop.permute.xlu0 %595
        %v599 = vunpack.c.l.s4 839922192
        %v600 = vunpack.c.0.s8 %v599
        %v601 = vlaneseq
        %v602 = vshrl.u32 %v601, 7
        %v603 = vsub.s32 %v600, %v602
        %v604 = vrot.slane %v596, %v603
        %606 = vset.pattern.permute.xlu0 0
        %607 = vperm.xlu0 %606, %v488
        %v608 = vpop.permute.xlu0 %607
        %v611 = vunpack.c.l.s4 839922192
        %v612 = vunpack.c.0.s8 %v611
        %v613 = vlaneseq
        %v614 = vshrl.u32 %v613, 7
        %v615 = vsub.s32 %v612, %v614
        %v616 = vrot.slane %v608, %v615
        %618 = vset.pattern.permute.xlu0 0
        %619 = vperm.xlu0 %618, %v489
        %v620 = vpop.permute.xlu0 %619
        %v623 = vunpack.c.l.s4 839922192
        %v624 = vunpack.c.0.s8 %v623
        %v625 = vlaneseq
        %v626 = vshrl.u32 %v625, 7
        %v627 = vsub.s32 %v624, %v626
        %v628 = vrot.slane %v620, %v627
        %630 = vset.pattern.permute.xlu0 0
        %631 = vperm.xlu0 %630, %v490
        %v632 = vpop.permute.xlu0 %631
        %v635 = vunpack.c.l.s4 839922192
        %v636 = vunpack.c.0.s8 %v635
        %v637 = vlaneseq
        %v638 = vshrl.u32 %v637, 7
        %v639 = vsub.s32 %v636, %v638
        %v640 = vrot.slane %v632, %v639
        %v653 = vunpack.c.l.b16 %v508
        %v654 = vunpack.c.l.b16 %v520
        %v655 = vunpack.c.l.b16 %v532
        %v656 = vunpack.c.l.b16 %v544
        %v657 = vunpack.c.l.b16 %v556
        %v658 = vunpack.c.l.b16 %v568
        %v659 = vunpack.c.l.b16 %v580
        %v660 = vunpack.c.l.b16 %v592
        %v661 = vunpack.c.l.b16 %v604
        %v662 = vunpack.c.l.b16 %v616
        %v663 = vunpack.c.l.b16 %v628
        %v664 = vunpack.c.l.b16 %v640
        %v665 = vpack.c.b16 %v654, %v653
        %v666 = vpack.c.b16 %v656, %v655
        %v667 = vpack.c.b16 %v658, %v657
        %v668 = vpack.c.b16 %v660, %v659
        %v669 = vpack.c.b16 %v662, %v661
        %v670 = vpack.c.b16 %v664, %v663
        %v677 = vmul.bf16 %v491, %v665
        %v678 = vmul.bf16 %v492, %v666
        %v679 = vmul.bf16 %v493, %v667
        %v680 = vmul.bf16 %v494, %v668
        %v681 = vmul.bf16 %v495, %v669
        %v682 = vmul.bf16 %v496, %v670
        %vm683 = vsmask.f32 256
        %v685 = vshrl.u32 %v677, 16
        %v687 = vrot.slane %v685, 7
        %v688 = vshll.u32 %v677, 16
        %v690 = vor.u32 %v687, %v688
        %v692 = vshrl.u32 %v678, 16
        %v694 = vrot.slane %v692, 7
        %v695 = vshll.u32 %v678, 16
        %v697 = vor.u32 %v694, %v695
        %v698 = vsel %vm683, %v687, %v697
        %v700 = vshrl.u32 %v679, 16
        %v702 = vrot.slane %v700, 7
        %v703 = vshll.u32 %v679, 16
        %v705 = vor.u32 %v702, %v703
        %v706 = vsel %vm683, %v694, %v705
        %v708 = vshrl.u32 %v680, 16
        %v710 = vrot.slane %v708, 7
        %v711 = vshll.u32 %v680, 16
        %v713 = vor.u32 %v710, %v711
        %v714 = vsel %vm683, %v702, %v713
        %v716 = vshrl.u32 %v681, 16
        %v718 = vrot.slane %v716, 7
        %v719 = vshll.u32 %v681, 16
        %v721 = vor.u32 %v718, %v719
        %v722 = vsel %vm683, %v710, %v721
        %v724 = vshrl.u32 %v682, 16
        %v726 = vrot.slane %v724, 7
        %v727 = vshll.u32 %v682, 16
        %v729 = vor.u32 %v726, %v727
        %v730 = vsel %vm683, %v718, %v729
        %731 = vrot.lane.b32.xlu0 %v690, 64
        %v732 = vpop.permute.xlu0 %731
        %733 = vrot.lane.b32.xlu0 %v698, 64
        %v734 = vpop.permute.xlu0 %733
        %735 = vrot.lane.b32.xlu0 %v706, 64
        %v736 = vpop.permute.xlu0 %735
        %737 = vrot.lane.b32.xlu0 %v714, 64
        %v738 = vpop.permute.xlu0 %737
        %739 = vrot.lane.b32.xlu0 %v722, 64
        %v740 = vpop.permute.xlu0 %739
        %741 = vrot.lane.b32.xlu0 %v730, 64
        %v742 = vpop.permute.xlu0 %741
        %vm749 = vcmask 523264
        %vm750 = vsmask.f32 7938
        %vm751 = vmand %vm749, %vm750
        %v752 = vsel %vm751, %v732, %v491
        %753 = vst [vmem:[#allocation2] sm:$0xff] %v752
        %vm754 = vcmask 523264
        %755 = vst.msk [vmem:[#allocation2 + $0x10] sm:$0xff] %vm754, %v734
        %756 = vst.msk [vmem:[#allocation2 + $0x20] sm:$0xff] %vm754, %v736
        %757 = vst.msk [vmem:[#allocation2 + $0x30] sm:$0xff] %vm754, %v738
        %758 = vst.msk [vmem:[#allocation2 + $0x40] sm:$0xff] %vm754, %v740
        %759 = vst.msk [vmem:[#allocation2 + $0x50] sm:$0xff] %vm754, %v742
        %vm760 = vcmask 516096
        %vm761 = vmand %vm760, %vm683
        %v762 = vld [vmem:[#allocation2] sm:$0x1]
        %v763 = vsel %vm761, 0, %v762
        %764 = vst [vmem:[#allocation2] sm:$0x1] %v763
        %v765 = vld [vmem:[#allocation2] sm:$0xff]
        %v766 = vld [vmem:[#allocation2 + $0x10] sm:$0xff]
        %v767 = vld [vmem:[#allocation2 + $0x20] sm:$0xff]
        %v768 = vld [vmem:[#allocation2 + $0x30] sm:$0xff]
        %v769 = vld [vmem:[#allocation2 + $0x40] sm:$0xff]
        %v770 = vld [vmem:[#allocation2 + $0x50] sm:$0xff]
        %v772 = vshrl.u32 %v665, 16
        %v774 = vrot.slane %v772, 7
        %v775 = vshll.u32 %v665, 16
        %v777 = vor.u32 %v774, %v775
        %v779 = vshrl.u32 %v666, 16
        %v781 = vrot.slane %v779, 7
        %v782 = vshll.u32 %v666, 16
        %v784 = vor.u32 %v781, %v782
        %v785 = vsel %vm683, %v774, %v784
        %v787 = vshrl.u32 %v667, 16
        %v789 = vrot.slane %v787, 7
        %v790 = vshll.u32 %v667, 16
        %v792 = vor.u32 %v789, %v790
        %v793 = vsel %vm683, %v781, %v792
        %v795 = vshrl.u32 %v668, 16
        %v797 = vrot.slane %v795, 7
        %v798 = vshll.u32 %v668, 16
        %v800 = vor.u32 %v797, %v798
        %v801 = vsel %vm683, %v789, %v800
        %v803 = vshrl.u32 %v669, 16
        %v805 = vrot.slane %v803, 7
        %v806 = vshll.u32 %v669, 16
        %v808 = vor.u32 %v805, %v806
        %v809 = vsel %vm683, %v797, %v808
        %v811 = vshrl.u32 %v670, 16
        %v813 = vrot.slane %v811, 7
        %v814 = vshll.u32 %v670, 16
        %v816 = vor.u32 %v813, %v814
        %v817 = vsel %vm683, %v805, %v816
        %v824 = vmul.bf16 %v765, %v777
        %v825 = vmul.bf16 %v766, %v785
        %v826 = vmul.bf16 %v767, %v793
        %v827 = vmul.bf16 %v768, %v801
        %v828 = vmul.bf16 %v769, %v809
        %v829 = vmul.bf16 %v770, %v817
        %vm830 = vsmask.f32 7424
        %v832 = vshrl.u32 %v824, 16
        %v834 = vshll.u32 %v824, 16
        %v836 = vrot.slane %v834, 1
        %v837 = vor.u32 %v832, %v836
        %v839 = vshll.u32 %v825, 16
        %v841 = vrot.slane %v839, 1
        %v842 = vsel %vm830, %v837, %v841
        %v843 = vshrl.u32 %v825, 16
        %v845 = vor.u32 %v843, %v841
        %v847 = vshll.u32 %v826, 16
        %v849 = vrot.slane %v847, 1
        %v850 = vsel %vm830, %v845, %v849
        %v851 = vshrl.u32 %v826, 16
        %v853 = vor.u32 %v851, %v849
        %v855 = vshll.u32 %v827, 16
        %v857 = vrot.slane %v855, 1
        %v858 = vsel %vm830, %v853, %v857
        %v859 = vshrl.u32 %v827, 16
        %v861 = vor.u32 %v859, %v857
        %v863 = vshll.u32 %v828, 16
        %v865 = vrot.slane %v863, 1
        %v866 = vsel %vm830, %v861, %v865
        %v867 = vshrl.u32 %v828, 16
        %v869 = vor.u32 %v867, %v865
        %v871 = vshll.u32 %v829, 16
        %v873 = vrot.slane %v871, 1
        %v874 = vsel %vm830, %v869, %v873
        %v875 = vshrl.u32 %v829, 16
        %v877 = vor.u32 %v875, %v873
        %878 = vrot.lane.b32.xlu0 %v842, 64
        %v879 = vpop.permute.xlu0 %878
        %880 = vrot.lane.b32.xlu0 %v850, 64
        %v881 = vpop.permute.xlu0 %880
        %882 = vrot.lane.b32.xlu0 %v858, 64
        %v883 = vpop.permute.xlu0 %882
        %884 = vrot.lane.b32.xlu0 %v866, 64
        %v885 = vpop.permute.xlu0 %884
        %886 = vrot.lane.b32.xlu0 %v874, 64
        %v887 = vpop.permute.xlu0 %886
        %888 = vrot.lane.b32.xlu0 %v877, 64
        %v889 = vpop.permute.xlu0 %888
        %896 = vst.msk [vmem:[#allocation2 + $0x8] sm:$0xff] %vm754, %v879
        %897 = vst.msk [vmem:[#allocation2 + $0x18] sm:$0xff] %vm754, %v881
        %898 = vst.msk [vmem:[#allocation2 + $0x28] sm:$0xff] %vm754, %v883
        %899 = vst.msk [vmem:[#allocation2 + $0x38] sm:$0xff] %vm754, %v885
        %900 = vst.msk [vmem:[#allocation2 + $0x48] sm:$0xff] %vm754, %v887
        %vm901 = vmand %vm749, %vm830
        %v902 = vld [vmem:[#allocation2 + $0x58] sm:$0xff]
        %v903 = vsel %vm901, %v889, %v902
        %904 = vst [vmem:[#allocation2 + $0x58] sm:$0xff] %v903
        %vm905 = vcmask 523271
        %vm906 = vsmask.f32 7966
        %vm907 = vmand %vm905, %vm906
        %v908 = vld [vmem:[#allocation2 + $0x58] sm:$0x80]
        %v909 = vsel %vm907, 0, %v908
        %910 = vst [vmem:[#allocation2 + $0x58] sm:$0x80] %v909
        %v911 = vld [vmem:[#allocation2] sm:$0xff]
        %v912 = vld [vmem:[#allocation2 + $0x8] sm:$0xff]
        %v913 = vld [vmem:[#allocation2 + $0x10] sm:$0xff]
        %v914 = vld [vmem:[#allocation2 + $0x18] sm:$0xff]
        %v915 = vld [vmem:[#allocation2 + $0x20] sm:$0xff]
        %v916 = vld [vmem:[#allocation2 + $0x28] sm:$0xff]
        %v917 = vld [vmem:[#allocation2 + $0x30] sm:$0xff]
        %v918 = vld [vmem:[#allocation2 + $0x38] sm:$0xff]
        %v919 = vld [vmem:[%s4] sm:$0xf]
        %v920 = vld [vmem:[%s4 + $0x4] sm:$0xf]
        %v921 = vld [vmem:[%s4 + $0x8] sm:$0xf]
        %v922 = vld [vmem:[%s4 + $0xc] sm:$0xf]
        %v923 = vld [vmem:[%s4 + $0x10] sm:$0xf]
        %v924 = vld [vmem:[%s4 + $0x14] sm:$0xf]
        %v925 = vld [vmem:[%s4 + $0x18] sm:$0xf]
        %v926 = vld [vmem:[%s4 + $0x1c] sm:$0xf]
        %v927 = vld [vmem:[%s4 + $0x20] sm:$0xf]
        %v928 = vld [vmem:[%s4 + $0x24] sm:$0xf]
        %v929 = vld [vmem:[%s4 + $0x28] sm:$0xf]
        %v930 = vld [vmem:[%s4 + $0x2c] sm:$0xf]
        %v931 = vld [vmem:[%s4 + $0x30] sm:$0xf]
        %v932 = vld [vmem:[%s4 + $0x34] sm:$0xf]
        %v933 = vld [vmem:[%s4 + $0x38] sm:$0xf]
        %v934 = vld [vmem:[%s4 + $0x3c] sm:$0xf]
        %v935 = vld [vmem:[%s4 + $0x40] sm:$0xf]
        %v936 = vld [vmem:[%s4 + $0x44] sm:$0xf]
        %v937 = vld [vmem:[%s4 + $0x48] sm:$0xf]
        %v938 = vld [vmem:[%s4 + $0x4c] sm:$0xf]
        %v939 = vld [vmem:[%s4 + $0x50] sm:$0xf]
        %v940 = vld [vmem:[%s4 + $0x54] sm:$0xf]
        %v941 = vld [vmem:[%s4 + $0x58] sm:$0xf]
        %v942 = vld [vmem:[%s4 + $0x5c] sm:$0xf]
        %v967 = vunpack.c.l.b16 %v919
        %v968 = vunpack.c.l.b16 %v920
        %v969 = vunpack.c.l.b16 %v921
        %v970 = vunpack.c.l.b16 %v922
        %v971 = vunpack.c.l.b16 %v923
        %v972 = vunpack.c.l.b16 %v924
        %v973 = vunpack.c.l.b16 %v925
        %v974 = vunpack.c.l.b16 %v926
        %v975 = vunpack.c.l.b16 %v927
        %v976 = vunpack.c.l.b16 %v928
        %v977 = vunpack.c.l.b16 %v929
        %v978 = vunpack.c.l.b16 %v930
        %v979 = vunpack.c.l.b16 %v931
        %v980 = vunpack.c.l.b16 %v932
        %v981 = vunpack.c.l.b16 %v933
        %v982 = vunpack.c.l.b16 %v934
        %v983 = vunpack.c.l.b16 %v935
        %v984 = vunpack.c.l.b16 %v936
        %v985 = vunpack.c.l.b16 %v937
        %v986 = vunpack.c.l.b16 %v938
        %v987 = vunpack.c.l.b16 %v939
        %v988 = vunpack.c.l.b16 %v940
        %v989 = vunpack.c.l.b16 %v941
        %v990 = vunpack.c.l.b16 %v942
        %v991 = vpack.c.b16 %v968, %v967
        %v992 = vpack.c.b16 %v970, %v969
        %v993 = vpack.c.b16 %v972, %v971
        %v994 = vpack.c.b16 %v974, %v973
        %v995 = vpack.c.b16 %v976, %v975
        %v996 = vpack.c.b16 %v978, %v977
        %v997 = vpack.c.b16 %v980, %v979
        %v998 = vpack.c.b16 %v982, %v981
        %v999 = vpack.c.b16 %v984, %v983
        %v1000 = vpack.c.b16 %v986, %v985
        %v1001 = vpack.c.b16 %v988, %v987
        %v1002 = vpack.c.b16 %v990, %v989
        %v1016 = vsel %vm754, %v912, 0
        %v1019 = vsel %vm754, %v914, 0
        %v1022 = vsel %vm754, %v916, 0
        %v1025 = vsel %vm754, %v918, 0
        %1027 = vmatprep.subr.bf16.mxu0 0
        %1028 = vmatpush1.bf16.msra.mxu0 %v991
        %1029 = vmatprep.subr.bf16.mxu0 0
        %1030 = vmatpush1.bf16.msra.mxu0 %v992
        %1031 = vmatprep.subr.bf16.mxu0 0
        %1032 = vmatpush1.bf16.msra.mxu0 %v993
        %1033 = vmatprep.subr.bf16.mxu0 0
        %1034 = vmatpush1.bf16.msra.mxu0 %v994
        %1035 = vmatprep.subr.bf16.mxu0 0
        %1036 = vmatpush1.bf16.msra.mxu0 %v995
        %1037 = vmatprep.subr.bf16.mxu0 0
        %1038 = vmatpush1.bf16.msra.mxu0 %v996
        %1039 = vmatprep.subr.bf16.mxu0 0
        %1040 = vmatpush1.bf16.msra.mxu0 %v997
        %1041 = vmatprep.subr.bf16.mxu0 0
        %1042 = vmatpush1.bf16.msra.mxu0 %v998
        %1043 = vmatprep.subr.bf16.mxu0 0
        %1044 = vmatpush1.bf16.msra.mxu0 %v999
        %1045 = vmatprep.subr.bf16.mxu0 0
        %1046 = vmatpush1.bf16.msra.mxu0 %v1000
        %1047 = vmatprep.subr.bf16.mxu0 0
        %1048 = vmatpush1.bf16.msra.mxu0 %v1001
        %1049 = vmatprep.subr.bf16.mxu0 0
        %1050 = vmatpush1.bf16.msra.mxu0 %v1002
        %1051 = vmatprep.subr.bf16.mxu0 0
        %1052 = vmatpush1.bf16.msra.mxu0 0
        %1053 = vmatprep.subr.bf16.mxu0 0
        %1054 = vmatpush1.bf16.msra.mxu0 0
        %1055 = vmatprep.subr.bf16.mxu0 0
        %1056 = vmatpush1.bf16.msra.mxu0 0
        %1057 = vmatprep.subr.bf16.mxu0 0
        %1058 = vmatpush1.bf16.msra.mxu0 0
        %1059 = vmatprep.mubr.bf16.mxu0 %v1016
        %1060 = vmatmul.mubr.bf16.gmra.mrb[0].mxu0 %v911
        %v1061 = vpop.f32.mrb[0].mxu0
        %v1062 = vadd.f32 0.0, %v1061
        %v1063 = vpop.f32.mrb[0].mxu0
        %v1064 = vpop.f32.mrb[0].mxu0
        %v1065 = vadd.f32 0.0, %v1064
        %v1066 = vpop.f32.mrb[0].mxu0
        %1067 = vmatprep.mubr.bf16.mxu0 %v1019
        %1068 = vmatmul.mubr.bf16.gmra.mrb[0].mxu0 %v913
        %v1069 = vpop.f32.mrb[0].mxu0
        %v1070 = vadd.f32 0.0, %v1069
        %v1071 = vpop.f32.mrb[0].mxu0
        %v1072 = vpop.f32.mrb[0].mxu0
        %v1073 = vadd.f32 0.0, %v1072
        %v1074 = vpop.f32.mrb[0].mxu0
        %1075 = vmatprep.mubr.bf16.mxu0 %v1022
        %1076 = vmatmul.mubr.bf16.gmra.mrb[0].mxu0 %v915
        %v1077 = vpop.f32.mrb[0].mxu0
        %v1078 = vadd.f32 0.0, %v1077
        %v1079 = vpop.f32.mrb[0].mxu0
        %v1080 = vpop.f32.mrb[0].mxu0
        %v1081 = vadd.f32 0.0, %v1080
        %v1082 = vpop.f32.mrb[0].mxu0
        %1083 = vmatprep.mubr.bf16.mxu0 %v1025
        %1084 = vmatmul.mubr.bf16.gmra.mrb[0].mxu0 %v917
        %v1085 = vpop.f32.mrb[0].mxu0
        %v1086 = vadd.f32 0.0, %v1085
        %v1087 = vpop.f32.mrb[0].mxu0
        %v1088 = vpop.f32.mrb[0].mxu0
        %v1089 = vadd.f32 0.0, %v1088
        %v1090 = vpop.f32.mrb[0].mxu0
        %1091 = vdwg.mxu0
        %1092 = vst [vmem:[#allocation3] sm:$0xff] %v1062
        %1093 = vst [vmem:[#allocation3 + $0x8] sm:$0xff] %v1065
        %1094 = vst [vmem:[#allocation3 + $0x10] sm:$0xff] %v1070
        %1095 = vst [vmem:[#allocation3 + $0x18] sm:$0xff] %v1073
        %1096 = vst [vmem:[#allocation3 + $0x20] sm:$0xff] %v1078
        %1097 = vst [vmem:[#allocation3 + $0x28] sm:$0xff] %v1081
        %1098 = vst [vmem:[#allocation3 + $0x30] sm:$0xff] %v1086
        %1099 = vst [vmem:[#allocation3 + $0x38] sm:$0xff] %v1089
        %v1100 = vld [vmem:[#allocation2 + $0x10] sm:$0xff]
        %v1101 = vld [vmem:[#allocation2 + $0x18] sm:$0xff]
        %v1102 = vld [vmem:[#allocation2 + $0x20] sm:$0xff]
        %v1103 = vld [vmem:[#allocation2 + $0x28] sm:$0xff]
        %v1104 = vld [vmem:[#allocation2 + $0x30] sm:$0xff]
        %v1105 = vld [vmem:[#allocation2 + $0x38] sm:$0xff]
        %v1106 = vld [vmem:[#allocation2 + $0x40] sm:$0xff]
        %v1107 = vld [vmem:[#allocation2 + $0x48] sm:$0xff]
        %s1108 = scalar_lea.vmem %s4, 96
        %v1109 = vld [vmem:[%s1108] sm:$0xf]
        %v1110 = vld [vmem:[%s1108 + $0x4] sm:$0xf]
        %v1111 = vld [vmem:[%s1108 + $0x8] sm:$0xf]
        %v1112 = vld [vmem:[%s1108 + $0xc] sm:$0xf]
        %v1113 = vld [vmem:[%s1108 + $0x10] sm:$0xf]
        %v1114 = vld [vmem:[%s1108 + $0x14] sm:$0xf]
        %v1115 = vld [vmem:[%s1108 + $0x18] sm:$0xf]
        %v1116 = vld [vmem:[%s1108 + $0x1c] sm:$0xf]
        %v1117 = vld [vmem:[%s1108 + $0x20] sm:$0xf]
        %v1118 = vld [vmem:[%s1108 + $0x24] sm:$0xf]
        %v1119 = vld [vmem:[%s1108 + $0x28] sm:$0xf]
        %v1120 = vld [vmem:[%s1108 + $0x2c] sm:$0xf]
        %v1121 = vld [vmem:[%s1108 + $0x30] sm:$0xf]
        %v1122 = vld [vmem:[%s1108 + $0x34] sm:$0xf]
        %v1123 = vld [vmem:[%s1108 + $0x38] sm:$0xf]
        %v1124 = vld [vmem:[%s1108 + $0x3c] sm:$0xf]
        %v1125 = vld [vmem:[%s1108 + $0x40] sm:$0xf]
        %v1126 = vld [vmem:[%s1108 + $0x44] sm:$0xf]
        %v1127 = vld [vmem:[%s1108 + $0x48] sm:$0xf]
        %v1128 = vld [vmem:[%s1108 + $0x4c] sm:$0xf]
        %v1129 = vld [vmem:[%s1108 + $0x50] sm:$0xf]
        %v1130 = vld [vmem:[%s1108 + $0x54] sm:$0xf]
        %v1131 = vld [vmem:[%s1108 + $0x58] sm:$0xf]
        %v1132 = vld [vmem:[%s1108 + $0x5c] sm:$0xf]
        %v1157 = vunpack.c.l.b16 %v1109
        %v1158 = vunpack.c.l.b16 %v1110
        %v1159 = vunpack.c.l.b16 %v1111
        %v1160 = vunpack.c.l.b16 %v1112
        %v1161 = vunpack.c.l.b16 %v1113
        %v1162 = vunpack.c.l.b16 %v1114
        %v1163 = vunpack.c.l.b16 %v1115
        %v1164 = vunpack.c.l.b16 %v1116
        %v1165 = vunpack.c.l.b16 %v1117
        %v1166 = vunpack.c.l.b16 %v1118
        %v1167 = vunpack.c.l.b16 %v1119
        %v1168 = vunpack.c.l.b16 %v1120
        %v1169 = vunpack.c.l.b16 %v1121
        %v1170 = vunpack.c.l.b16 %v1122
        %v1171 = vunpack.c.l.b16 %v1123
        %v1172 = vunpack.c.l.b16 %v1124
        %v1173 = vunpack.c.l.b16 %v1125
        %v1174 = vunpack.c.l.b16 %v1126
        %v1175 = vunpack.c.l.b16 %v1127
        %v1176 = vunpack.c.l.b16 %v1128
        %v1177 = vunpack.c.l.b16 %v1129
        %v1178 = vunpack.c.l.b16 %v1130
        %v1179 = vunpack.c.l.b16 %v1131
        %v1180 = vunpack.c.l.b16 %v1132
        %v1181 = vpack.c.b16 %v1158, %v1157
        %v1182 = vpack.c.b16 %v1160, %v1159
        %v1183 = vpack.c.b16 %v1162, %v1161
        %v1184 = vpack.c.b16 %v1164, %v1163
        %v1185 = vpack.c.b16 %v1166, %v1165
        %v1186 = vpack.c.b16 %v1168, %v1167
        %v1187 = vpack.c.b16 %v1170, %v1169
        %v1188 = vpack.c.b16 %v1172, %v1171
        %v1189 = vpack.c.b16 %v1174, %v1173
        %v1190 = vpack.c.b16 %v1176, %v1175
        %v1191 = vpack.c.b16 %v1178, %v1177
        %v1192 = vpack.c.b16 %v1180, %v1179
        %v1206 = vsel %vm754, %v1101, 0
        %v1209 = vsel %vm754, %v1103, 0
        %v1212 = vsel %vm754, %v1105, 0
        %v1215 = vsel %vm754, %v1107, 0
        %1217 = vmatprep.subr.bf16.mxu0 0
        %1218 = vmatpush1.bf16.msra.mxu0 %v1181
        %1219 = vmatprep.subr.bf16.mxu0 0
        %1220 = vmatpush1.bf16.msra.mxu0 %v1182
        %1221 = vmatprep.subr.bf16.mxu0 0
        %1222 = vmatpush1.bf16.msra.mxu0 %v1183
        %1223 = vmatprep.subr.bf16.mxu0 0
        %1224 = vmatpush1.bf16.msra.mxu0 %v1184
        %1225 = vmatprep.subr.bf16.mxu0 0
        %1226 = vmatpush1.bf16.msra.mxu0 %v1185
        %1227 = vmatprep.subr.bf16.mxu0 0
        %1228 = vmatpush1.bf16.msra.mxu0 %v1186
        %1229 = vmatprep.subr.bf16.mxu0 0
        %1230 = vmatpush1.bf16.msra.mxu0 %v1187
        %1231 = vmatprep.subr.bf16.mxu0 0
        %1232 = vmatpush1.bf16.msra.mxu0 %v1188
        %1233 = vmatprep.subr.bf16.mxu0 0
        %1234 = vmatpush1.bf16.msra.mxu0 %v1189
        %1235 = vmatprep.subr.bf16.mxu0 0
        %1236 = vmatpush1.bf16.msra.mxu0 %v1190
        %1237 = vmatprep.subr.bf16.mxu0 0
        %1238 = vmatpush1.bf16.msra.mxu0 %v1191
        %1239 = vmatprep.subr.bf16.mxu0 0
        %1240 = vmatpush1.bf16.msra.mxu0 %v1192
        %1241 = vmatprep.subr.bf16.mxu0 0
        %1242 = vmatpush1.bf16.msra.mxu0 0
        %1243 = vmatprep.subr.bf16.mxu0 0
        %1244 = vmatpush1.bf16.msra.mxu0 0
        %1245 = vmatprep.subr.bf16.mxu0 0
        %1246 = vmatpush1.bf16.msra.mxu0 0
        %1247 = vmatprep.subr.bf16.mxu0 0
        %1248 = vmatpush1.bf16.msra.mxu0 0
        %1249 = vmatprep.mubr.bf16.mxu0 %v1206
        %1250 = vmatmul.mubr.bf16.gmra.mrb[0].mxu0 %v1100
        %v1251 = vpop.f32.mrb[0].mxu0
        %v1252 = vadd.f32 0.0, %v1251
        %v1253 = vpop.f32.mrb[0].mxu0
        %v1254 = vpop.f32.mrb[0].mxu0
        %v1255 = vadd.f32 0.0, %v1254
        %v1256 = vpop.f32.mrb[0].mxu0
        %1257 = vmatprep.mubr.bf16.mxu0 %v1209
        %1258 = vmatmul.mubr.bf16.gmra.mrb[0].mxu0 %v1102
        %v1259 = vpop.f32.mrb[0].mxu0
        %v1260 = vadd.f32 0.0, %v1259
        %v1261 = vpop.f32.mrb[0].mxu0
        %v1262 = vpop.f32.mrb[0].mxu0
        %v1263 = vadd.f32 0.0, %v1262
        %v1264 = vpop.f32.mrb[0].mxu0
        %1265 = vmatprep.mubr.bf16.mxu0 %v1212
        %1266 = vmatmul.mubr.bf16.gmra.mrb[0].mxu0 %v1104
        %v1267 = vpop.f32.mrb[0].mxu0
        %v1268 = vadd.f32 0.0, %v1267
        %v1269 = vpop.f32.mrb[0].mxu0
        %v1270 = vpop.f32.mrb[0].mxu0
        %v1271 = vadd.f32 0.0, %v1270
        %v1272 = vpop.f32.mrb[0].mxu0
        %1273 = vmatprep.mubr.bf16.mxu0 %v1215
        %1274 = vmatmul.mubr.bf16.gmra.mrb[0].mxu0 %v1106
        %v1275 = vpop.f32.mrb[0].mxu0
        %v1276 = vadd.f32 0.0, %v1275
        %v1277 = vpop.f32.mrb[0].mxu0
        %v1278 = vpop.f32.mrb[0].mxu0
        %v1279 = vadd.f32 0.0, %v1278
        %v1280 = vpop.f32.mrb[0].mxu0
        %1281 = vdwg.mxu0
        %v1282 = vld [vmem:[#allocation3] sm:$0xff]
        %v1283 = vld [vmem:[#allocation3 + $0x8] sm:$0xff]
        %v1284 = vld [vmem:[#allocation3 + $0x10] sm:$0xff]
        %v1285 = vld [vmem:[#allocation3 + $0x18] sm:$0xff]
        %v1286 = vld [vmem:[#allocation3 + $0x20] sm:$0xff]
        %v1287 = vld [vmem:[#allocation3 + $0x28] sm:$0xff]
        %v1288 = vld [vmem:[#allocation3 + $0x30] sm:$0xff]
        %v1289 = vld [vmem:[#allocation3 + $0x38] sm:$0xff]
        %v1290 = vadd.f32 %v1282, %v1252
        %v1291 = vadd.f32 %v1283, %v1255
        %v1292 = vadd.f32 %v1284, %v1260
        %v1293 = vadd.f32 %v1285, %v1263
        %v1294 = vadd.f32 %v1286, %v1268
        %v1295 = vadd.f32 %v1287, %v1271
        %v1296 = vadd.f32 %v1288, %v1276
        %v1297 = vadd.f32 %v1289, %v1279
        %1298 = vst [vmem:[#allocation3] sm:$0xff] %v1290
        %1299 = vst [vmem:[#allocation3 + $0x8] sm:$0xff] %v1291
        %1300 = vst [vmem:[#allocation3 + $0x10] sm:$0xff] %v1292
        %1301 = vst [vmem:[#allocation3 + $0x18] sm:$0xff] %v1293
        %1302 = vst [vmem:[#allocation3 + $0x20] sm:$0xff] %v1294
        %1303 = vst [vmem:[#allocation3 + $0x28] sm:$0xff] %v1295
        %1304 = vst [vmem:[#allocation3 + $0x30] sm:$0xff] %v1296
        %1305 = vst [vmem:[#allocation3 + $0x38] sm:$0xff] %v1297
        %v1306 = vld [vmem:[#allocation2 + $0x20] sm:$0xff]
        %v1307 = vld [vmem:[#allocation2 + $0x28] sm:$0xff]
        %v1308 = vld [vmem:[#allocation2 + $0x30] sm:$0xff]
        %v1309 = vld [vmem:[#allocation2 + $0x38] sm:$0xff]
        %v1310 = vld [vmem:[#allocation2 + $0x40] sm:$0xff]
        %v1311 = vld [vmem:[#allocation2 + $0x48] sm:$0xff]
        %v1312 = vld [vmem:[#allocation2 + $0x50] sm:$0xff]
        %v1313 = vld [vmem:[#allocation2 + $0x58] sm:$0xff]
        %s1314 = scalar_lea.vmem %s4, 192
        %v1315 = vld [vmem:[%s1314] sm:$0xf]
        %v1316 = vld [vmem:[%s1314 + $0x4] sm:$0xf]
        %v1317 = vld [vmem:[%s1314 + $0x8] sm:$0xf]
        %v1318 = vld [vmem:[%s1314 + $0xc] sm:$0xf]
        %v1319 = vld [vmem:[%s1314 + $0x10] sm:$0xf]
        %v1320 = vld [vmem:[%s1314 + $0x14] sm:$0xf]
        %v1321 = vld [vmem:[%s1314 + $0x18] sm:$0xf]
        %v1322 = vld [vmem:[%s1314 + $0x1c] sm:$0xf]
        %v1323 = vld [vmem:[%s1314 + $0x20] sm:$0xf]
        %v1324 = vld [vmem:[%s1314 + $0x24] sm:$0xf]
        %v1325 = vld [vmem:[%s1314 + $0x28] sm:$0xf]
        %v1326 = vld [vmem:[%s1314 + $0x2c] sm:$0xf]
        %v1327 = vld [vmem:[%s1314 + $0x30] sm:$0xf]
        %v1328 = vld [vmem:[%s1314 + $0x34] sm:$0xf]
        %v1329 = vld [vmem:[%s1314 + $0x38] sm:$0xf]
        %v1330 = vld [vmem:[%s1314 + $0x3c] sm:$0xf]
        %v1331 = vld [vmem:[%s1314 + $0x40] sm:$0xf]
        %v1332 = vld [vmem:[%s1314 + $0x44] sm:$0xf]
        %v1333 = vld [vmem:[%s1314 + $0x48] sm:$0xf]
        %v1334 = vld [vmem:[%s1314 + $0x4c] sm:$0xf]
        %v1335 = vld [vmem:[%s1314 + $0x50] sm:$0xf]
        %v1336 = vld [vmem:[%s1314 + $0x54] sm:$0xf]
        %v1337 = vld [vmem:[%s1314 + $0x58] sm:$0xf]
        %v1338 = vld [vmem:[%s1314 + $0x5c] sm:$0xf]
        %v1363 = vunpack.c.l.b16 %v1315
        %v1364 = vunpack.c.l.b16 %v1316
        %v1365 = vunpack.c.l.b16 %v1317
        %v1366 = vunpack.c.l.b16 %v1318
        %v1367 = vunpack.c.l.b16 %v1319
        %v1368 = vunpack.c.l.b16 %v1320
        %v1369 = vunpack.c.l.b16 %v1321
        %v1370 = vunpack.c.l.b16 %v1322
        %v1371 = vunpack.c.l.b16 %v1323
        %v1372 = vunpack.c.l.b16 %v1324
        %v1373 = vunpack.c.l.b16 %v1325
        %v1374 = vunpack.c.l.b16 %v1326
        %v1375 = vunpack.c.l.b16 %v1327
        %v1376 = vunpack.c.l.b16 %v1328
        %v1377 = vunpack.c.l.b16 %v1329
        %v1378 = vunpack.c.l.b16 %v1330
        %v1379 = vunpack.c.l.b16 %v1331
        %v1380 = vunpack.c.l.b16 %v1332
        %v1381 = vunpack.c.l.b16 %v1333
        %v1382 = vunpack.c.l.b16 %v1334
        %v1383 = vunpack.c.l.b16 %v1335
        %v1384 = vunpack.c.l.b16 %v1336
        %v1385 = vunpack.c.l.b16 %v1337
        %v1386 = vunpack.c.l.b16 %v1338
        %v1387 = vpack.c.b16 %v1364, %v1363
        %v1388 = vpack.c.b16 %v1366, %v1365
        %v1389 = vpack.c.b16 %v1368, %v1367
        %v1390 = vpack.c.b16 %v1370, %v1369
        %v1391 = vpack.c.b16 %v1372, %v1371
        %v1392 = vpack.c.b16 %v1374, %v1373
        %v1393 = vpack.c.b16 %v1376, %v1375
        %v1394 = vpack.c.b16 %v1378, %v1377
        %v1395 = vpack.c.b16 %v1380, %v1379
        %v1396 = vpack.c.b16 %v1382, %v1381
        %v1397 = vpack.c.b16 %v1384, %v1383
        %v1398 = vpack.c.b16 %v1386, %v1385
        %v1412 = vsel %vm754, %v1307, 0
        %v1415 = vsel %vm754, %v1309, 0
        %v1418 = vsel %vm754, %v1311, 0
        %v1421 = vsel %vm754, %v1313, 0
        %1423 = vmatprep.subr.bf16.mxu0 0
        %1424 = vmatpush1.bf16.msra.mxu0 %v1387
        %1425 = vmatprep.subr.bf16.mxu0 0
        %1426 = vmatpush1.bf16.msra.mxu0 %v1388
        %1427 = vmatprep.subr.bf16.mxu0 0
        %1428 = vmatpush1.bf16.msra.mxu0 %v1389
        %1429 = vmatprep.subr.bf16.mxu0 0
        %1430 = vmatpush1.bf16.msra.mxu0 %v1390
        %1431 = vmatprep.subr.bf16.mxu0 0
        %1432 = vmatpush1.bf16.msra.mxu0 %v1391
        %1433 = vmatprep.subr.bf16.mxu0 0
        %1434 = vmatpush1.bf16.msra.mxu0 %v1392
        %1435 = vmatprep.subr.bf16.mxu0 0
        %1436 = vmatpush1.bf16.msra.mxu0 %v1393
        %1437 = vmatprep.subr.bf16.mxu0 0
        %1438 = vmatpush1.bf16.msra.mxu0 %v1394
        %1439 = vmatprep.subr.bf16.mxu0 0
        %1440 = vmatpush1.bf16.msra.mxu0 %v1395
        %1441 = vmatprep.subr.bf16.mxu0 0
        %1442 = vmatpush1.bf16.msra.mxu0 %v1396
        %1443 = vmatprep.subr.bf16.mxu0 0
        %1444 = vmatpush1.bf16.msra.mxu0 %v1397
        %1445 = vmatprep.subr.bf16.mxu0 0
        %1446 = vmatpush1.bf16.msra.mxu0 %v1398
        %1447 = vmatprep.subr.bf16.mxu0 0
        %1448 = vmatpush1.bf16.msra.mxu0 0
        %1449 = vmatprep.subr.bf16.mxu0 0
        %1450 = vmatpush1.bf16.msra.mxu0 0
        %1451 = vmatprep.subr.bf16.mxu0 0
        %1452 = vmatpush1.bf16.msra.mxu0 0
        %1453 = vmatprep.subr.bf16.mxu0 0
        %1454 = vmatpush1.bf16.msra.mxu0 0
        %1455 = vmatprep.mubr.bf16.mxu0 %v1412
        %1456 = vmatmul.mubr.bf16.gmra.mrb[0].mxu0 %v1306
        %v1457 = vpop.f32.mrb[0].mxu0
        %v1458 = vadd.f32 0.0, %v1457
        %v1459 = vpop.f32.mrb[0].mxu0
        %v1460 = vpop.f32.mrb[0].mxu0
        %v1461 = vadd.f32 0.0, %v1460
        %v1462 = vpop.f32.mrb[0].mxu0
        %1463 = vmatprep.mubr.bf16.mxu0 %v1415
        %1464 = vmatmul.mubr.bf16.gmra.mrb[0].mxu0 %v1308
        %v1465 = vpop.f32.mrb[0].mxu0
        %v1466 = vadd.f32 0.0, %v1465
        %v1467 = vpop.f32.mrb[0].mxu0
        %v1468 = vpop.f32.mrb[0].mxu0
        %v1469 = vadd.f32 0.0, %v1468
        %v1470 = vpop.f32.mrb[0].mxu0
        %1471 = vmatprep.mubr.bf16.mxu0 %v1418
        %1472 = vmatmul.mubr.bf16.gmra.mrb[0].mxu0 %v1310
        %v1473 = vpop.f32.mrb[0].mxu0
        %v1474 = vadd.f32 0.0, %v1473
        %v1475 = vpop.f32.mrb[0].mxu0
        %v1476 = vpop.f32.mrb[0].mxu0
        %v1477 = vadd.f32 0.0, %v1476
        %v1478 = vpop.f32.mrb[0].mxu0
        %1479 = vmatprep.mubr.bf16.mxu0 %v1421
        %1480 = vmatmul.mubr.bf16.gmra.mrb[0].mxu0 %v1312
        %v1481 = vpop.f32.mrb[0].mxu0
        %v1482 = vadd.f32 0.0, %v1481
        %v1483 = vpop.f32.mrb[0].mxu0
        %v1484 = vpop.f32.mrb[0].mxu0
        %v1485 = vadd.f32 0.0, %v1484
        %v1486 = vpop.f32.mrb[0].mxu0
        %1487 = vdwg.mxu0
        %v1488 = vld [vmem:[#allocation3] sm:$0xff]
        %v1489 = vld [vmem:[#allocation3 + $0x8] sm:$0xff]
        %v1490 = vld [vmem:[#allocation3 + $0x10] sm:$0xff]
        %v1491 = vld [vmem:[#allocation3 + $0x18] sm:$0xff]
        %v1492 = vld [vmem:[#allocation3 + $0x20] sm:$0xff]
        %v1493 = vld [vmem:[#allocation3 + $0x28] sm:$0xff]
        %v1494 = vld [vmem:[#allocation3 + $0x30] sm:$0xff]
        %v1495 = vld [vmem:[#allocation3 + $0x38] sm:$0xff]
        %v1496 = vadd.f32 %v1488, %v1458
        %v1497 = vadd.f32 %v1489, %v1461
        %v1498 = vadd.f32 %v1490, %v1466
        %v1499 = vadd.f32 %v1491, %v1469
        %v1500 = vadd.f32 %v1492, %v1474
        %v1501 = vadd.f32 %v1493, %v1477
        %v1502 = vadd.f32 %v1494, %v1482
        %v1503 = vadd.f32 %v1495, %v1485
        %1504 = vst [vmem:[#allocation3] sm:$0xff] %v1496
        %1505 = vst [vmem:[#allocation3 + $0x8] sm:$0xff] %v1497
        %1506 = vst [vmem:[#allocation3 + $0x10] sm:$0xff] %v1498
        %1507 = vst [vmem:[#allocation3 + $0x18] sm:$0xff] %v1499
        %1508 = vst [vmem:[#allocation3 + $0x20] sm:$0xff] %v1500
        %1509 = vst [vmem:[#allocation3 + $0x28] sm:$0xff] %v1501
        %1510 = vst [vmem:[#allocation3 + $0x30] sm:$0xff] %v1502
        %1511 = vst [vmem:[#allocation3 + $0x38] sm:$0xff] %v1503
        %v1512 = vld [vmem:[#allocation3] sm:$0xff]
        %v1513 = vld [vmem:[#allocation3 + $0x8] sm:$0xff]
        %v1514 = vld [vmem:[#allocation3 + $0x10] sm:$0xff]
        %v1515 = vld [vmem:[#allocation3 + $0x18] sm:$0xff]
        %v1516 = vld [vmem:[#allocation3 + $0x20] sm:$0xff]
        %v1517 = vld [vmem:[#allocation3 + $0x28] sm:$0xff]
        %v1518 = vld [vmem:[#allocation3 + $0x30] sm:$0xff]
        %v1519 = vld [vmem:[#allocation3 + $0x38] sm:$0xff]
        %v1520 = vld [vmem:[%s5] sm:$0x1]
        %v1522 = vlaneseq
        %v1523 = vshrl.u32 %v1522, 7
        %v1524 = vsub.s32 0, %v1523
        %v1525 = vrot.slane %v1520, %v1524
        %v1527 = vadd.f32 %v1512, %v1525
        %v1528 = vadd.f32 %v1513, %v1525
        %v1529 = vadd.f32 %v1514, %v1525
        %v1530 = vadd.f32 %v1515, %v1525
        %v1531 = vadd.f32 %v1516, %v1525
        %v1532 = vadd.f32 %v1517, %v1525
        %v1533 = vadd.f32 %v1518, %v1525
        %v1534 = vadd.f32 %v1519, %v1525
        %v1535 = vmax.f32 %v1527, 0.0
        %v1536 = vmax.f32 %v1528, 0.0
        %v1537 = vmax.f32 %v1529, 0.0
        %v1538 = vmax.f32 %v1530, 0.0
        %v1539 = vmax.f32 %v1531, 0.0
        %v1540 = vmax.f32 %v1532, 0.0
        %v1541 = vmax.f32 %v1533, 0.0
        %v1542 = vmax.f32 %v1534, 0.0
        %v1543 = vpack.c.bf16 %v1536, %v1535
        %v1544 = vpack.c.bf16 %v1538, %v1537
        %v1545 = vpack.c.bf16 %v1540, %v1539
        %v1546 = vpack.c.bf16 %v1542, %v1541
        %v1551 = vunpack.c.l.b16 %v1543
        %v1552 = vunpack.c.h.b16 %v1543
        %v1553 = vunpack.c.l.b16 %v1544
        %v1554 = vunpack.c.h.b16 %v1544
        %v1555 = vunpack.c.l.b16 %v1545
        %v1556 = vunpack.c.h.b16 %v1545
        %v1557 = vunpack.c.l.b16 %v1546
        %v1558 = vunpack.c.h.b16 %v1546
        %v1559 = vpack.c.b16 %v1551, %v1551
        %v1560 = vpack.c.b16 %v1552, %v1552
        %v1561 = vpack.c.b16 %v1553, %v1553
        %v1562 = vpack.c.b16 %v1554, %v1554
        %v1563 = vpack.c.b16 %v1555, %v1555
        %v1564 = vpack.c.b16 %v1556, %v1556
        %v1565 = vpack.c.b16 %v1557, %v1557
        %v1566 = vpack.c.b16 %v1558, %v1558
        %1575 = vst [vmem:[%s381] sm:$0xf] %v1559
        %1576 = vst [vmem:[%s381 + $0x4] sm:$0xf] %v1560
        %1577 = vst [vmem:[%s381 + $0x8] sm:$0xf] %v1561
        %1578 = vst [vmem:[%s381 + $0xc] sm:$0xf] %v1562
        %1579 = vst [vmem:[%s381 + $0x10] sm:$0xf] %v1563
        %1580 = vst [vmem:[%s381 + $0x14] sm:$0xf] %v1564
        %1581 = vst [vmem:[%s381 + $0x18] sm:$0xf] %v1565
        %1582 = vst [vmem:[%s381 + $0x1c] sm:$0xf] %v1566
        %s1583 = sand.u32 %s211, 1
        %s1584 = scalar_lea.sflag [#allocation6], %s1583
        %s1585 = sand.u32 %s211, 1
        %s1586 = smul.addr %s1585, 32
        %s1587 = scalar_lea.vmem [#allocation9], %s1586
        // Predicated region
        $region61: #{tpu_custom_call.1} parent=43 // pred_check
          %p1588 = pneg %p221
        $region62: #{tpu_custom_call.1} parent=43 // pred_check_branch
          %1590 = sbr.rel (%p1588) target = $region64
        $region63: #{tpu_custom_call.1} parent=43 // pred_region
          %s1591 = smul.u32 8, %s31
          %s1593 = ssub.s32 512, 512
          %1594 = vsyncadd %s1584, %s1593
          %s1595 = smul.addr %s30, 32
          %s1596 = sadd.s32 %s1591, %s1595
          %s1597 = smul.addr %s1596, 64
          %s1598 = scalar_lea.hbm %s6, %s1597
          %s1599 = sshll.u32 %s1587, 4
          %s1600 = int_to_ptr.vmem [resolvable:$true] %s1599
          %1605 = dma.vmem_to_hbm [thread:$0]  %s1600, 512, %s1598, %s1584, 64, 64, 4
        $region64: #{tpu_custom_call.1} parent=43 // pred_fallthru
          _
      $region44: #{tpu_custom_call.1} parent=5 // pred_fallthru
        _
      %p1606 = scmp.le.s32.totalorder 2, %s21
      // Predicated region
      $region65: #{tpu_custom_call.1} parent=5 // pred_check
        %p1607 = pneg %p1606
      $region66: #{tpu_custom_call.1} parent=5 // pred_check_branch
        %1609 = sbr.rel (%p1607) target = $region68
      $region67: #{tpu_custom_call.1} parent=5 // pred_region
        %s1610 = ssub.s32 %s21, 2
        // Predicated region
        $region69: #{tpu_custom_call.1} parent=67 // pred_check
          %p1611 = pneg %p227
        $region70: #{tpu_custom_call.1} parent=67 // pred_check_branch
          %1613 = sbr.rel (%p1611) target = $region72
        $region71: #{tpu_custom_call.1} parent=67 // pred_region
          %s1614 = sand.u32 %s212, 1
          %s1615 = scalar_lea.sflag [#allocation6], %s1614
          %s1616 = sand.u32 %s212, 1
          %s1617 = smul.addr %s1616, 32
          %s1618 = scalar_lea.vmem [#allocation9], %s1617
          %1619 = dma.done %s1615, 512
        $region72: #{tpu_custom_call.1} parent=67 // pred_fallthru
          _
      $region68: #{tpu_custom_call.1} parent=5 // pred_fallthru
        _
    $region6: #{tpu_custom_call.1} parent=1 // loop_footer
      %s25 = sadd.s32 1, %s21
    $region7: #{tpu_custom_call.1} parent=1 // loop_footer_branch
      %20 = sbr.rel target = $region3
    $region8: #{tpu_custom_call.1} parent=1 // loop_exit
      _
    %1620 = vsyncpa [#allocation5], 1
    %s1621 = scalar_lea.sflag [#allocation5], 1
    %1622 = vsyncpa %s1621, 1
    %1623 = vsyncpa [#allocation8], 1
    %s1624 = scalar_lea.sflag [#allocation8], 1
    %1625 = vsyncpa %s1624, 1
    %1626 = vsyncpa [#allocation6], 1
    %s1627 = scalar_lea.sflag [#allocation6], 1
    %1628 = vsyncpa %s1627, 1

// kernel: tpu_custom_call.1
$region0: #{tpu_custom_call.1}
  #allocation0 [shape = 'u32[]', space=smem, size = 0x4, offset = 0x4, fixed_abs, tag = 'smem constant byte address 0x4 - core index']
  #allocation1 [shape = 'u32[144,128]{1,0:T(1,128)}', space=vmem, size = 0x12000, scoped, tag = 'internal scratch']
  #allocation2 [shape = 'bf16[96,192]{1,0:T(16,128)(2,1)}', space=vmem, size = 0xc000, scoped, tag = 'scratch operand']
  #allocation3 [shape = 'f32[64,128]{1,0:T(8,128)}', space=vmem, size = 0x8000, scoped, tag = 'scratch operand']
  %s0 = inlined_call_operand.vmem [shape: bf16[2,256,64], index: 0, kind: input, shape index: {}]
  %s1 = inlined_call_operand.hbm [shape: bf16[2,16,16,64], index: 1, kind: input, shape index: {}]
  %s2 = inlined_call_operand.hbm [shape: bf16[2,16,16,64], index: 2, kind: input, shape index: {}]
  %s3 = inlined_call_operand.vmem [shape: bf16[95,1], index: 3, kind: input, shape index: {}]
  %s4 = inlined_call_operand.vmem [shape: bf16[3,192,128], index: 4, kind: input, shape index: {}]
  %s5 = inlined_call_operand.vmem [shape: f32[1,128], index: 5, kind: input, shape index: {}]
  %s6 = inlined_call_operand.hbm [shape: bf16[2,256,128], index: 6, kind: output, shape index: {}]
  %s7 = sld [smem:[#allocation0]]
  $region73: #{tpu_custom_call.1} parent=0
    _
  %s9 = ssub.s32 1, %s7
  %s10 = scalar_select 0, %s9, %s7
  $region1: #{tpu_custom_call.1} parent=0
    #allocation4 [shape = 'u8[8192]{0}', space=vmem, size = 0x2000, scoped, tag = 'input window, operand 1']
    #allocation5 [shape = 's32[2]{0}', space=sflag, size = 0x8, scoped, tag = 'scoped memory for tpu_custom_call.1']
    #allocation6 [shape = 's32[2]{0}', space=sflag, size = 0x8, scoped, tag = 'scoped memory for tpu_custom_call.1']
    #allocation7 [shape = 'u8[8192]{0}', space=vmem, size = 0x2000, scoped, tag = 'input window, operand 2']
    #allocation8 [shape = 's32[2]{0}', space=sflag, size = 0x8, scoped, tag = 'scoped memory for tpu_custom_call.1']
    #allocation9 [shape = 'u8[32768]{0}', space=vmem, size = 0x8000, scoped, tag = 'output window, operand 0']
    %11 = vsyncpa [#allocation5], 0
    %s12 = scalar_lea.sflag [#allocation5], 1
    %13 = vsyncpa %s12, 0
    %14 = vsyncpa [#allocation8], 0
    %s15 = scalar_lea.sflag [#allocation8], 1
    %16 = vsyncpa %s15, 0
    %17 = vsyncpa [#allocation6], 0
    %s18 = scalar_lea.sflag [#allocation6], 1
    %19 = vsyncpa %s18, 0
    loop: start=0, step=1, limit=10
    $region2: #{tpu_custom_call.1} parent=1 // loop_pre_header
      _
    $region3: #{tpu_custom_call.1} parent=1 // loop_header
      %s21 = sphi 0, %s25
      %p22 = scmp.ge.s32.totalorder %s21, 10
      %s28 = sphi 0, %s40
      %s29 = sphi 0, %s36
      %s30 = sphi 0, %s28
      %s31 = sphi 0, %s29
      %s32 = sphi 0, %s30
      %s33 = sphi 0, %s31
      %s45 = sphi 0, %s47
      %s48 = sphi 0, %s45
      %s49 = sphi 0, %s48
      %s65 = sphi 0, %s49
      %s81 = sphi 0, %s83
      %s84 = sphi 0, %s81
      %s85 = sphi 0, %s84
      %s101 = sphi 0, %s85
      %s117 = sphi 0, %s119
      %s120 = sphi 0, %s117
      %s121 = sphi 0, %s120
      %s137 = sphi 0, %s121
      %s141 = sphi 0, %s141
      %s143 = sphi 0, %s141
      %s144 = sphi 0, %s143
      %s158 = sphi 0, %s144
      %s162 = sphi 0, %s162
      %s164 = sphi 0, %s162
      %s165 = sphi 0, %s164
      %s179 = sphi 0, %s165
      %s183 = sphi 0, %s183
      %s185 = sphi 0, %s183
      %s186 = sphi 0, %s185
      %s200 = sphi 0, %s186
      %s208 = sphi 0, %s210
      %s211 = sphi 0, %s208
      %s212 = sphi 0, %s211
      %s228 = sphi 0, %s212
    $region4: #{tpu_custom_call.1} parent=1 // loop_header_branch
      %24 = sbr.rel (%p22) target = $region8
    $region5: #{tpu_custom_call.1} parent=1 // loop_body
      %s26 = ssub.s32 %s21, 1
      %s27 = ssub.s32 %s21, 2
      %s34 = sadd.s32 1, %s29
      %p35 = scmp.ge.s32.totalorder %s34, 4
      %s36 = scalar_select %p35, 0, %s34
      %s37 = sadd.s32 1, %s28
      %s38 = scalar_select %p35, %s37, %s28
      %p39 = scmp.ge.s32.totalorder %s38, 2
      %s40 = scalar_select %p39, 0, %s38
      %s41 = ssub.s32 %s28, %s40
      %s42 = ssub.s32 %s29, %s36
      %s43 = sor.u32 %s41, %s42
      %p44 = scmp.eq.s32.totalorder %s43, 0
      %s46 = sadd.s32 %s45, 1
      %s47 = scalar_select %p44, %s45, %s46
      %p50 = pneg %p44
      %p51 = scmp.eq.s32.totalorder %s21, 7
      %p52 = por %p50, %p51
      %p53 = scmp.ne.s32.totalorder %s45, %s48
      %p54 = scmp.eq.s32.totalorder %s21, 0
      %p55 = por %p53, %p54
      %p56 = scmp.ne.s32.totalorder %s45, %s48
      %p57 = scmp.eq.s32.totalorder %s26, 7
      %p58 = por %p56, %p57
      %p59 = scmp.ne.s32.totalorder %s48, %s49
      %p60 = scmp.eq.s32.totalorder %s26, 0
      %p61 = por %p59, %p60
      %p62 = scmp.ne.s32.totalorder %s48, %s49
      %p63 = scmp.eq.s32.totalorder %s27, 7
      %p64 = por %p62, %p63
      %p66 = scmp.ne.s32.totalorder %s49, %s65
      %p67 = scmp.eq.s32.totalorder %s27, 0
      %p68 = por %p66, %p67
      %s69 = smul.u32 %s29, 4
      %s70 = ssub.s32 %s69, 1
      %p71 = scmp.gt.s32.totalorder %s70, 0
      %s72 = scalar_select %p71, %s70, 0
      %s73 = smul.u32 %s36, 4
      %s74 = ssub.s32 %s73, 1
      %p75 = scmp.gt.s32.totalorder %s74, 0
      %s76 = scalar_select %p75, %s74, 0
      %s77 = ssub.s32 %s28, %s40
      %s78 = ssub.s32 %s72, %s76
      %s79 = sor.u32 %s77, %s78
      %p80 = scmp.eq.s32.totalorder %s79, 0
      %s82 = sadd.s32 %s81, 1
      %s83 = scalar_select %p80, %s81, %s82
      %p86 = pneg %p80
      %p87 = scmp.eq.s32.totalorder %s21, 7
      %p88 = por %p86, %p87
      %p89 = scmp.ne.s32.totalorder %s81, %s84
      %p90 = scmp.eq.s32.totalorder %s21, 0
      %p91 = por %p89, %p90
      %p92 = scmp.ne.s32.totalorder %s81, %s84
      %p93 = scmp.eq.s32.totalorder %s26, 7
      %p94 = por %p92, %p93
      %p95 = scmp.ne.s32.totalorder %s84, %s85
      %p96 = scmp.eq.s32.totalorder %s26, 0
      %p97 = por %p95, %p96
      %p98 = scmp.ne.s32.totalorder %s84, %s85
      %p99 = scmp.eq.s32.totalorder %s27, 7
      %p100 = por %p98, %p99
      %p102 = scmp.ne.s32.totalorder %s85, %s101
      %p103 = scmp.eq.s32.totalorder %s27, 0
      %p104 = por %p102, %p103
      %s105 = sadd.s32 %s29, 1
      %s106 = smul.u32 %s105, 4
      %p107 = scmp.lt.s32.totalorder %s106, 15
      %s108 = scalar_select %p107, %s106, 15
      %s109 = sadd.s32 %s36, 1
      %s110 = smul.u32 %s109, 4
      %p111 = scmp.lt.s32.totalorder %s110, 15
      %s112 = scalar_select %p111, %s110, 15
      %s113 = ssub.s32 %s28, %s40
      %s114 = ssub.s32 %s108, %s112
      %s115 = sor.u32 %s113, %s114
      %p116 = scmp.eq.s32.totalorder %s115, 0
      %s118 = sadd.s32 %s117, 1
      %s119 = scalar_select %p116, %s117, %s118
      %p122 = pneg %p116
      %p123 = scmp.eq.s32.totalorder %s21, 7
      %p124 = por %p122, %p123
      %p125 = scmp.ne.s32.totalorder %s117, %s120
      %p126 = scmp.eq.s32.totalorder %s21, 0
      %p127 = por %p125, %p126
      %p128 = scmp.ne.s32.totalorder %s117, %s120
      %p129 = scmp.eq.s32.totalorder %s26, 7
      %p130 = por %p128, %p129
      %p131 = scmp.ne.s32.totalorder %s120, %s121
      %p132 = scmp.eq.s32.totalorder %s26, 0
      %p133 = por %p131, %p132
      %p134 = scmp.ne.s32.totalorder %s120, %s121
      %p135 = scmp.eq.s32.totalorder %s27, 7
      %p136 = por %p134, %p135
      %p138 = scmp.ne.s32.totalorder %s121, %s137
      %p139 = scmp.eq.s32.totalorder %s27, 0
      %p140 = por %p138, %p139
      %s142 = sadd.s32 %s141, 1
      %p145 = scmp.eq.s32.totalorder %s21, 7
      %p146 = scmp.ne.s32.totalorder %s141, %s143
      %p147 = scmp.eq.s32.totalorder %s21, 0
      %p148 = por %p146, %p147
      %p149 = scmp.ne.s32.totalorder %s141, %s143
      %p150 = scmp.eq.s32.totalorder %s26, 7
      %p151 = por %p149, %p150
      %p152 = scmp.ne.s32.totalorder %s143, %s144
      %p153 = scmp.eq.s32.totalorder %s26, 0
      %p154 = por %p152, %p153
      %p155 = scmp.ne.s32.totalorder %s143, %s144
      %p156 = scmp.eq.s32.totalorder %s27, 7
      %p157 = por %p155, %p156
      %p159 = scmp.ne.s32.totalorder %s144, %s158
      %p160 = scmp.eq.s32.totalorder %s27, 0
      %p161 = por %p159, %p160
      %s163 = sadd.s32 %s162, 1
      %p166 = scmp.eq.s32.totalorder %s21, 7
      %p167 = scmp.ne.s32.totalorder %s162, %s164
      %p168 = scmp.eq.s32.totalorder %s21, 0
      %p169 = por %p167, %p168
      %p170 = scmp.ne.s32.totalorder %s162, %s164
      %p171 = scmp.eq.s32.totalorder %s26, 7
      %p172 = por %p170, %p171
      %p173 = scmp.ne.s32.totalorder %s164, %s165
      %p174 = scmp.eq.s32.totalorder %s26, 0
      %p175 = por %p173, %p174
      %p176 = scmp.ne.s32.totalorder %s164, %s165
      %p177 = scmp.eq.s32.totalorder %s27, 7
      %p178 = por %p176, %p177
      %p180 = scmp.ne.s32.totalorder %s165, %s179
      %p181 = scmp.eq.s32.totalorder %s27, 0
      %p182 = por %p180, %p181
      %s184 = sadd.s32 %s183, 1
      %p187 = scmp.eq.s32.totalorder %s21, 7
      %p188 = scmp.ne.s32.totalorder %s183, %s185
      %p189 = scmp.eq.s32.totalorder %s21, 0
      %p190 = por %p188, %p189
      %p191 = scmp.ne.s32.totalorder %s183, %s185
      %p192 = scmp.eq.s32.totalorder %s26, 7
      %p193 = por %p191, %p192
      %p194 = scmp.ne.s32.totalorder %s185, %s186
      %p195 = scmp.eq.s32.totalorder %s26, 0
      %p196 = por %p194, %p195
      %p197 = scmp.ne.s32.totalorder %s185, %s186
      %p198 = scmp.eq.s32.totalorder %s27, 7
      %p199 = por %p197, %p198
      %p201 = scmp.ne.s32.totalorder %s186, %s200
      %p202 = scmp.eq.s32.totalorder %s27, 0
      %p203 = por %p201, %p202
      %s204 = ssub.s32 %s28, %s40
      %s205 = ssub.s32 %s29, %s36
      %s206 = sor.u32 %s204, %s205
      %p207 = scmp.eq.s32.totalorder %s206, 0
      %s209 = sadd.s32 %s208, 1
      %s210 = scalar_select %p207, %s208, %s209
      %p213 = pneg %p207
      %p214 = scmp.eq.s32.totalorder %s21, 7
      %p215 = por %p213, %p214
      %p216 = scmp.ne.s32.totalorder %s208, %s211
      %p217 = scmp.eq.s32.totalorder %s21, 0
      %p218 = por %p216, %p217
      %p219 = scmp.ne.s32.totalorder %s208, %s211
      %p220 = scmp.eq.s32.totalorder %s26, 7
      %p221 = por %p219, %p220
      %p222 = scmp.ne.s32.totalorder %s211, %s212
      %p223 = scmp.eq.s32.totalorder %s26, 0
      %p224 = por %p222, %p223
      %p225 = scmp.ne.s32.totalorder %s211, %s212
      %p226 = scmp.eq.s32.totalorder %s27, 7
      %p227 = por %p225, %p226
      %p229 = scmp.ne.s32.totalorder %s212, %s228
      %p230 = scmp.eq.s32.totalorder %s27, 0
      %p231 = por %p229, %p230
      %p232 = scmp.le.s32.totalorder 1, %s21
      %p233 = scmp.lt.s32.totalorder %s21, 9
      %p234 = pnand %p232, %p233
      %p235 = pneg %p234
      // Predicated region
      $region9: #{tpu_custom_call.1} parent=5 // pred_check
        _
      $region10: #{tpu_custom_call.1} parent=5 // pred_check_branch
        %237 = sbr.rel (%p234) target = $region12
      $region11: #{tpu_custom_call.1} parent=5 // pred_region
        %s238 = ssub.s32 %s21, 1
        // Predicated region
        $region13: #{tpu_custom_call.1} parent=11 // pred_check
          %p239 = pneg %p154
        $region14: #{tpu_custom_call.1} parent=11 // pred_check_branch
          %241 = sbr.rel (%p239) target = $region16
        $region15: #{tpu_custom_call.1} parent=11 // pred_region
          _
        $region16: #{tpu_custom_call.1} parent=11 // pred_fallthru
          _
        // Predicated region
        $region17: #{tpu_custom_call.1} parent=11 // pred_check
          %p242 = pneg %p175
        $region18: #{tpu_custom_call.1} parent=11 // pred_check_branch
          %244 = sbr.rel (%p242) target = $region20
        $region19: #{tpu_custom_call.1} parent=11 // pred_region
          _
        $region20: #{tpu_custom_call.1} parent=11 // pred_fallthru
          _
        // Predicated region
        $region21: #{tpu_custom_call.1} parent=11 // pred_check
          %p245 = pneg %p196
        $region22: #{tpu_custom_call.1} parent=11 // pred_check_branch
          %247 = sbr.rel (%p245) target = $region24
        $region23: #{tpu_custom_call.1} parent=11 // pred_region
          _
        $region24: #{tpu_custom_call.1} parent=11 // pred_fallthru
          _
      $region12: #{tpu_custom_call.1} parent=5 // pred_fallthru
        _
      %p248 = scmp.lt.s32.totalorder %s21, 8
      // Predicated region
      $region25: #{tpu_custom_call.1} parent=5 // pred_check
        %p249 = pneg %p248
      $region26: #{tpu_custom_call.1} parent=5 // pred_check_branch
        %251 = sbr.rel (%p249) target = $region28
      $region27: #{tpu_custom_call.1} parent=5 // pred_region
        // Predicated region
        $region29: #{tpu_custom_call.1} parent=27 // pred_check
          %p252 = pneg %p55
        $region30: #{tpu_custom_call.1} parent=27 // pred_check_branch
          %254 = sbr.rel (%p252) target = $region32
        $region31: #{tpu_custom_call.1} parent=27 // pred_region
          %s255 = smul.u32 8, %s29
          %p256 = scmp.lt.s32.totalorder %s28, 1
          %s257 = scalar_select %p256, %s28, 1
          %p258 = scmp.lt.s32.totalorder %s255, 31
          %s259 = scalar_select %p258, %s255, 31
          %s260 = smul.addr %s257, 32
          %s261 = sadd.s32 %s259, %s260
          %s262 = smul.addr %s261, 4
          %s263 = scalar_lea.vmem %s0, %s262
          %s264 = smul.u32 8, %s29
        $region32: #{tpu_custom_call.1} parent=27 // pred_fallthru
          _
        // Predicated region
        $region33: #{tpu_custom_call.1} parent=27 // pred_check
          %p265 = pneg %p91
        $region34: #{tpu_custom_call.1} parent=27 // pred_check_branch
          %267 = sbr.rel (%p265) target = $region36
        $region35: #{tpu_custom_call.1} parent=27 // pred_region
          %s268 = sand.u32 %s81, 1
          %s269 = scalar_lea.sflag [#allocation5], %s268
          %s270 = sand.u32 %s81, 1
          %s271 = smul.addr %s270, 8
          %s272 = scalar_lea.vmem [#allocation4], %s271
          %s273 = smul.u32 %s29, 4
          %s274 = ssub.s32 %s273, 1
          %p275 = scmp.gt.s32.totalorder %s274, 0
          %s276 = scalar_select %p275, %s274, 0
          %s278 = ssub.s32 128, 128
          %279 = vsyncadd %s269, %s278
          %s280 = smul.addr %s276, 2
          %s281 = smul.addr %s28, 32
          %s282 = sadd.s32 %s280, %s281
          %s283 = smul.addr %s282, 64
          %s284 = scalar_lea.hbm %s1, %s283
          %s285 = sshll.u32 %s272, 4
          %s286 = int_to_ptr.vmem [resolvable:$true] %s285
          %291 = dma.hbm_to_vmem [thread:$0]  %s284, 128, %s286, %s269, 64, 64, 4
        $region36: #{tpu_custom_call.1} parent=27 // pred_fallthru
          _
        // Predicated region
        $region37: #{tpu_custom_call.1} parent=27 // pred_check
          %p292 = pneg %p127
        $region38: #{tpu_custom_call.1} parent=27 // pred_check_branch
          %294 = sbr.rel (%p292) target = $region40
        $region39: #{tpu_custom_call.1} parent=27 // pred_region
          %s295 = sand.u32 %s117, 1
          %s296 = scalar_lea.sflag [#allocation8], %s295
          %s297 = sand.u32 %s117, 1
          %s298 = smul.addr %s297, 8
          %s299 = scalar_lea.vmem [#allocation7], %s298
          %s300 = sadd.s32 %s29, 1
          %s301 = smul.u32 %s300, 4
          %p302 = scmp.lt.s32.totalorder %s301, 15
          %s303 = scalar_select %p302, %s301, 15
          %s305 = ssub.s32 128, 128
          %306 = vsyncadd %s296, %s305
          %s307 = smul.addr %s303, 2
          %s308 = smul.addr %s28, 32
          %s309 = sadd.s32 %s307, %s308
          %s310 = smul.addr %s309, 64
          %s311 = scalar_lea.hbm %s2, %s310
          %s312 = sshll.u32 %s299, 4
          %s313 = int_to_ptr.vmem [resolvable:$true] %s312
          %318 = dma.hbm_to_vmem [thread:$0]  %s311, 128, %s313, %s296, 64, 64, 4
        $region40: #{tpu_custom_call.1} parent=27 // pred_fallthru
          _
      $region28: #{tpu_custom_call.1} parent=5 // pred_fallthru
        _
      %p319 = scmp.le.s32.totalorder 1, %s21
      %p320 = scmp.lt.s32.totalorder %s21, 9
      %p321 = pnand %p319, %p320
      %p322 = pneg %p321
      // Predicated region
      $region41: #{tpu_custom_call.1} parent=5 // pred_check
        _
      $region42: #{tpu_custom_call.1} parent=5 // pred_check_branch
        %324 = sbr.rel (%p321) target = $region44
      $region43: #{tpu_custom_call.1} parent=5 // pred_region
        %s325 = ssub.s32 %s21, 1
        %s326 = sand.u32 %s84, 1
        %s327 = scalar_lea.sflag [#allocation5], %s326
        %s328 = sand.u32 %s84, 1
        %s329 = smul.addr %s328, 8
        %s330 = scalar_lea.vmem [#allocation4], %s329
        // Predicated region
        $region45: #{tpu_custom_call.1} parent=43 // pred_check
          %p331 = pneg %p97
        $region46: #{tpu_custom_call.1} parent=43 // pred_check_branch
          %333 = sbr.rel (%p331) target = $region48
        $region47: #{tpu_custom_call.1} parent=43 // pred_region
          %334 = dma.done %s327, 128
        $region48: #{tpu_custom_call.1} parent=43 // pred_fallthru
          _
        %s335 = sand.u32 %s120, 1
        %s336 = scalar_lea.sflag [#allocation8], %s335
        %s337 = sand.u32 %s120, 1
        %s338 = smul.addr %s337, 8
        %s339 = scalar_lea.vmem [#allocation7], %s338
        // Predicated region
        $region49: #{tpu_custom_call.1} parent=43 // pred_check
          %p340 = pneg %p133
        $region50: #{tpu_custom_call.1} parent=43 // pred_check_branch
          %342 = sbr.rel (%p340) target = $region52
        $region51: #{tpu_custom_call.1} parent=43 // pred_region
          %343 = dma.done %s336, 128
        $region52: #{tpu_custom_call.1} parent=43 // pred_fallthru
          _
        %s344 = smul.u32 8, %s31
        %p345 = scmp.lt.s32.totalorder %s30, 1
        %s346 = scalar_select %p345, %s30, 1
        %p347 = scmp.lt.s32.totalorder %s344, 31
        %s348 = scalar_select %p347, %s344, 31
        %s349 = smul.addr %s346, 32
        %s350 = sadd.s32 %s348, %s349
        %s351 = smul.addr %s350, 4
        %s352 = scalar_lea.vmem %s0, %s351
        %p353 = pneg %p61
        %p354 = pneg %p58
        %s355 = sand.u32 %s84, 1
        %s356 = scalar_lea.sflag [#allocation5], %s355
        %s357 = sand.u32 %s84, 1
        %s358 = smul.addr %s357, 8
        %s359 = scalar_lea.vmem [#allocation4], %s358
        %p360 = pneg %p97
        %p361 = pneg %p94
        %s362 = sand.u32 %s120, 1
        %s363 = scalar_lea.sflag [#allocation8], %s362
        %s364 = sand.u32 %s120, 1
        %s365 = smul.addr %s364, 8
        %s366 = scalar_lea.vmem [#allocation7], %s365
        %p367 = pneg %p133
        %p368 = pneg %p130
        %p369 = pneg %p154
        %p370 = pneg %p151
        %p371 = pneg %p175
        %p372 = pneg %p172
        %p373 = pneg %p196
        %p374 = pneg %p193
        %p375 = pneg %p224
        %p376 = pneg %p221
        %s377 = sand.u32 %s211, 1
        %s378 = scalar_lea.sflag [#allocation6], %s377
        %s379 = sand.u32 %s211, 1
        %s380 = smul.addr %s379, 32
        %s381 = scalar_lea.vmem [#allocation9], %s380
        %s382 = smul.u32 8, %s31
        %p383 = scmp.lt.s32.totalorder %s30, 1
        %s384 = scalar_select %p383, %s30, 1
        %p385 = scmp.lt.s32.totalorder %s382, 31
        %s386 = scalar_select %p385, %s382, 31
        %s387 = smul.addr %s384, 32
        %s388 = sadd.s32 %s386, %s387
        %s389 = smul.addr %s388, 4
        %s390 = scalar_lea.vmem %s0, %s389
        %s391 = smul.u32 8, %s31
        %s392 = smul.u32 %s31, 4
        %s393 = ssub.s32 %s392, 1
        %p394 = scmp.gt.s32.totalorder %s393, 0
        %s395 = scalar_select %p394, %s393, 0
        %s396 = sadd.s32 %s31, 1
        %s397 = smul.u32 %s396, 4
        %p398 = scmp.lt.s32.totalorder %s397, 15
        %s399 = scalar_select %p398, %s397, 15
        %s400 = smul.u32 8, %s31
        %v402 = vld [vmem:[%s330] sm:$0xf]
        %v403 = vld [vmem:[%s330 + $0x4] sm:$0xf]
        %v406 = vunpack.c.l.b16 %v402
        %v407 = vunpack.c.l.b16 %v403
        %v408 = vpack.c.b16 %v407, %v406
        %409 = vrot.lane.b32.xlu0 %v408, 64
        %v410 = vpop.permute.xlu0 %409
        %vm412 = vcmask 1048064
        %413 = vst.msk [vmem:[#allocation2] sm:$0xff] %vm412, %v410
        %v414 = vld [vmem:[%s390] sm:$0xf]
        %v415 = vld [vmem:[%s390 + $0x4] sm:$0xf]
        %v416 = vld [vmem:[%s390 + $0x8] sm:$0xf]
        %v417 = vld [vmem:[%s390 + $0xc] sm:$0xf]
        %v418 = vld [vmem:[%s390 + $0x10] sm:$0xf]
        %v419 = vld [vmem:[%s390 + $0x14] sm:$0xf]
        %v420 = vld [vmem:[%s390 + $0x18] sm:$0xf]
        %v421 = vld [vmem:[%s390 + $0x1c] sm:$0xf]
        %v430 = vunpack.c.l.b16 %v414
        %v431 = vunpack.c.l.b16 %v415
        %v432 = vunpack.c.l.b16 %v416
        %v433 = vunpack.c.l.b16 %v417
        %v434 = vunpack.c.l.b16 %v418
        %v435 = vunpack.c.l.b16 %v419
        %v436 = vunpack.c.l.b16 %v420
        %v437 = vunpack.c.l.b16 %v421
        %v438 = vpack.c.b16 %v431, %v430
        %v439 = vpack.c.b16 %v433, %v432
        %v440 = vpack.c.b16 %v435, %v434
        %v441 = vpack.c.b16 %v437, %v436
        %442 = vrot.lane.b32.xlu0 %v438, 64
        %v443 = vpop.permute.xlu0 %442
        %444 = vrot.lane.b32.xlu0 %v439, 64
        %v445 = vpop.permute.xlu0 %444
        %446 = vrot.lane.b32.xlu0 %v440, 64
        %v447 = vpop.permute.xlu0 %446
        %448 = vrot.lane.b32.xlu0 %v441, 64
        %v449 = vpop.permute.xlu0 %448
        %454 = vst.msk [vmem:[#allocation2 + $0x10] sm:$0xff] %vm412, %v443
        %455 = vst.msk [vmem:[#allocation2 + $0x20] sm:$0xff] %vm412, %v445
        %456 = vst.msk [vmem:[#allocation2 + $0x30] sm:$0xff] %vm412, %v447
        %457 = vst.msk [vmem:[#allocation2 + $0x40] sm:$0xff] %vm412, %v449
        %v458 = vld [vmem:[%s339] sm:$0xf]
        %v459 = vld [vmem:[%s339 + $0x4] sm:$0xf]
        %v462 = vunpack.c.l.b16 %v458
        %v463 = vunpack.c.l.b16 %v459
        %v464 = vpack.c.b16 %v463, %v462
        %465 = vrot.lane.b32.xlu0 %v464, 64
        %v466 = vpop.permute.xlu0 %465
        %468 = vst.msk [vmem:[#allocation2 + $0x50] sm:$0xff] %vm412, %v466
        %p469 = scmp.eq.s32.totalorder %s31, 0
        // Predicated region
        $region53: #{tpu_custom_call.1} parent=43 // pred_check
          %p470 = pneg %p469
        $region54: #{tpu_custom_call.1} parent=43 // pred_check_branch
          %472 = sbr.rel (%p470) target = $region56
        $region55: #{tpu_custom_call.1} parent=43 // pred_region
          %473 = vst.msk [vmem:[#allocation2] sm:$0xff] %vm412, 0
        $region56: #{tpu_custom_call.1} parent=43 // pred_fallthru
          _
        %p474 = scmp.eq.s32.totalorder %s31, 3
        // Predicated region
        $region57: #{tpu_custom_call.1} parent=43 // pred_check
          %p475 = pneg %p474
        $region58: #{tpu_custom_call.1} parent=43 // pred_check_branch
          %477 = sbr.rel (%p475) target = $region60
        $region59: #{tpu_custom_call.1} parent=43 // pred_region
          %478 = vst.msk [vmem:[#allocation2 + $0x50] sm:$0xff] %vm412, 0
        $region60: #{tpu_custom_call.1} parent=43 // pred_fallthru
          _
        %v479 = vld [vmem:[%s3] sm:$0xf]
        %v480 = vld [vmem:[%s3 + $0x4] sm:$0xf]
        %v481 = vld [vmem:[%s3 + $0x8] sm:$0xf]
        %v482 = vld [vmem:[%s3 + $0xc] sm:$0xf]
        %v483 = vld [vmem:[%s3 + $0x10] sm:$0xf]
        %v484 = vld [vmem:[%s3 + $0x14] sm:$0xf]
        %v485 = vld [vmem:[%s3 + $0x18] sm:$0xf]
        %v486 = vld [vmem:[%s3 + $0x1c] sm:$0xf]
        %v487 = vld [vmem:[%s3 + $0x20] sm:$0xf]
        %v488 = vld [vmem:[%s3 + $0x24] sm:$0xf]
        %v489 = vld [vmem:[%s3 + $0x28] sm:$0xf]
        %v490 = vld [vmem:[%s3 + $0x2c] sm:$0xf]
        %v491 = vld [vmem:[#allocation2] sm:$0xff]
        %v492 = vld [vmem:[#allocation2 + $0x10] sm:$0xff]
        %v493 = vld [vmem:[#allocation2 + $0x20] sm:$0xff]
        %v494 = vld [vmem:[#allocation2 + $0x30] sm:$0xff]
        %v495 = vld [vmem:[#allocation2 + $0x40] sm:$0xff]
        %v496 = vld [vmem:[#allocation2 + $0x50] sm:$0xff]
        %498 = vset.pattern.permute.xlu0 0
        %499 = vperm.xlu0 %498, %v479
        %v500 = vpop.permute.xlu0 %499
        %v503 = vunpack.c.l.s4 839922192
        %v504 = vunpack.c.0.s8 %v503
        %v505 = vlaneseq
        %v506 = vshrl.u32 %v505, 7
        %v507 = vsub.s32 %v504, %v506
        %v508 = vrot.slane %v500, %v507
        %510 = vset.pattern.permute.xlu0 0
        %511 = vperm.xlu0 %510, %v480
        %v512 = vpop.permute.xlu0 %511
        %v515 = vunpack.c.l.s4 839922192
        %v516 = vunpack.c.0.s8 %v515
        %v517 = vlaneseq
        %v518 = vshrl.u32 %v517, 7
        %v519 = vsub.s32 %v516, %v518
        %v520 = vrot.slane %v512, %v519
        %522 = vset.pattern.permute.xlu0 0
        %523 = vperm.xlu0 %522, %v481
        %v524 = vpop.permute.xlu0 %523
        %v527 = vunpack.c.l.s4 839922192
        %v528 = vunpack.c.0.s8 %v527
        %v529 = vlaneseq
        %v530 = vshrl.u32 %v529, 7
        %v531 = vsub.s32 %v528, %v530
        %v532 = vrot.slane %v524, %v531
        %534 = vset.pattern.permute.xlu0 0
        %535 = vperm.xlu0 %534, %v482
        %v536 = vpop.permute.xlu0 %535
        %v539 = vunpack.c.l.s4 839922192
        %v540 = vunpack.c.0.s8 %v539
        %v541 = vlaneseq
        %v542 = vshrl.u32 %v541, 7
        %v543 = vsub.s32 %v540, %v542
        %v544 = vrot.slane %v536, %v543
        %546 = vset.pattern.permute.xlu0 0
        %547 = vperm.xlu0 %546, %v483
        %v548 = vpop.permute.xlu0 %547
        %v551 = vunpack.c.l.s4 839922192
        %v552 = vunpack.c.0.s8 %v551
        %v553 = vlaneseq
        %v554 = vshrl.u32 %v553, 7
        %v555 = vsub.s32 %v552, %v554
        %v556 = vrot.slane %v548, %v555
        %558 = vset.pattern.permute.xlu0 0
        %559 = vperm.xlu0 %558, %v484
        %v560 = vpop.permute.xlu0 %559
        %v563 = vunpack.c.l.s4 839922192
        %v564 = vunpack.c.0.s8 %v563
        %v565 = vlaneseq
        %v566 = vshrl.u32 %v565, 7
        %v567 = vsub.s32 %v564, %v566
        %v568 = vrot.slane %v560, %v567
        %570 = vset.pattern.permute.xlu0 0
        %571 = vperm.xlu0 %570, %v485
        %v572 = vpop.permute.xlu0 %571
        %v575 = vunpack.c.l.s4 839922192
        %v576 = vunpack.c.0.s8 %v575
        %v577 = vlaneseq
        %v578 = vshrl.u32 %v577, 7
        %v579 = vsub.s32 %v576, %v578
        %v580 = vrot.slane %v572, %v579
        %582 = vset.pattern.permute.xlu0 0
        %583 = vperm.xlu0 %582, %v486
        %v584 = vpop.permute.xlu0 %583
        %v587 = vunpack.c.l.s4 839922192
        %v588 = vunpack.c.0.s8 %v587
        %v589 = vlaneseq
        %v590 = vshrl.u32 %v589, 7
        %v591 = vsub.s32 %v588, %v590
        %v592 = vrot.slane %v584, %v591
        %594 = vset.pattern.permute.xlu0 0
        %595 = vperm.xlu0 %594, %v487
        %v596 = vpop.permute.xlu0 %595
        %v599 = vunpack.c.l.s4 839922192
        %v600 = vunpack.c.0.s8 %v599
        %v601 = vlaneseq
        %v602 = vshrl.u32 %v601, 7
        %v603 = vsub.s32 %v600, %v602
        %v604 = vrot.slane %v596, %v603
        %606 = vset.pattern.permute.xlu0 0
        %607 = vperm.xlu0 %606, %v488
        %v608 = vpop.permute.xlu0 %607
        %v611 = vunpack.c.l.s4 839922192
        %v612 = vunpack.c.0.s8 %v611
        %v613 = vlaneseq
        %v614 = vshrl.u32 %v613, 7
        %v615 = vsub.s32 %v612, %v614
        %v616 = vrot.slane %v608, %v615
        %618 = vset.pattern.permute.xlu0 0
        %619 = vperm.xlu0 %618, %v489
        %v620 = vpop.permute.xlu0 %619
        %v623 = vunpack.c.l.s4 839922192
        %v624 = vunpack.c.0.s8 %v623
        %v625 = vlaneseq
        %v626 = vshrl.u32 %v625, 7
        %v627 = vsub.s32 %v624, %v626
        %v628 = vrot.slane %v620, %v627
        %630 = vset.pattern.permute.xlu0 0
        %631 = vperm.xlu0 %630, %v490
        %v632 = vpop.permute.xlu0 %631
        %v635 = vunpack.c.l.s4 839922192
        %v636 = vunpack.c.0.s8 %v635
        %v637 = vlaneseq
        %v638 = vshrl.u32 %v637, 7
        %v639 = vsub.s32 %v636, %v638
        %v640 = vrot.slane %v632, %v639
        %v653 = vunpack.c.l.b16 %v508
        %v654 = vunpack.c.l.b16 %v520
        %v655 = vunpack.c.l.b16 %v532
        %v656 = vunpack.c.l.b16 %v544
        %v657 = vunpack.c.l.b16 %v556
        %v658 = vunpack.c.l.b16 %v568
        %v659 = vunpack.c.l.b16 %v580
        %v660 = vunpack.c.l.b16 %v592
        %v661 = vunpack.c.l.b16 %v604
        %v662 = vunpack.c.l.b16 %v616
        %v663 = vunpack.c.l.b16 %v628
        %v664 = vunpack.c.l.b16 %v640
        %v665 = vpack.c.b16 %v654, %v653
        %v666 = vpack.c.b16 %v656, %v655
        %v667 = vpack.c.b16 %v658, %v657
        %v668 = vpack.c.b16 %v660, %v659
        %v669 = vpack.c.b16 %v662, %v661
        %v670 = vpack.c.b16 %v664, %v663
        %v677 = vmul.bf16 %v491, %v665
        %v678 = vmul.bf16 %v492, %v666
        %v679 = vmul.bf16 %v493, %v667
        %v680 = vmul.bf16 %v494, %v668
        %v681 = vmul.bf16 %v495, %v669
        %v682 = vmul.bf16 %v496, %v670
        %vm683 = vsmask.f32 256
        %v685 = vshrl.u32 %v677, 16
        %v687 = vrot.slane %v685, 7
        %v688 = vshll.u32 %v677, 16
        %v690 = vor.u32 %v687, %v688
        %v692 = vshrl.u32 %v678, 16
        %v694 = vrot.slane %v692, 7
        %v695 = vshll.u32 %v678, 16
        %v697 = vor.u32 %v694, %v695
        %v698 = vsel %vm683, %v687, %v697
        %v700 = vshrl.u32 %v679, 16
        %v702 = vrot.slane %v700, 7
        %v703 = vshll.u32 %v679, 16
        %v705 = vor.u32 %v702, %v703
        %v706 = vsel %vm683, %v694, %v705
        %v708 = vshrl.u32 %v680, 16
        %v710 = vrot.slane %v708, 7
        %v711 = vshll.u32 %v680, 16
        %v713 = vor.u32 %v710, %v711
        %v714 = vsel %vm683, %v702, %v713
        %v716 = vshrl.u32 %v681, 16
        %v718 = vrot.slane %v716, 7
        %v719 = vshll.u32 %v681, 16
        %v721 = vor.u32 %v718, %v719
        %v722 = vsel %vm683, %v710, %v721
        %v724 = vshrl.u32 %v682, 16
        %v726 = vrot.slane %v724, 7
        %v727 = vshll.u32 %v682, 16
        %v729 = vor.u32 %v726, %v727
        %v730 = vsel %vm683, %v718, %v729
        %731 = vrot.lane.b32.xlu0 %v690, 64
        %v732 = vpop.permute.xlu0 %731
        %733 = vrot.lane.b32.xlu0 %v698, 64
        %v734 = vpop.permute.xlu0 %733
        %735 = vrot.lane.b32.xlu0 %v706, 64
        %v736 = vpop.permute.xlu0 %735
        %737 = vrot.lane.b32.xlu0 %v714, 64
        %v738 = vpop.permute.xlu0 %737
        %739 = vrot.lane.b32.xlu0 %v722, 64
        %v740 = vpop.permute.xlu0 %739
        %741 = vrot.lane.b32.xlu0 %v730, 64
        %v742 = vpop.permute.xlu0 %741
        %vm749 = vcmask 523264
        %vm750 = vsmask.f32 7938
        %vm751 = vmand %vm749, %vm750
        %v752 = vsel %vm751, %v732, %v491
        %753 = vst [vmem:[#allocation2] sm:$0xff] %v752
        %vm754 = vcmask 523264
        %755 = vst.msk [vmem:[#allocation2 + $0x10] sm:$0xff] %vm754, %v734
        %756 = vst.msk [vmem:[#allocation2 + $0x20] sm:$0xff] %vm754, %v736
        %757 = vst.msk [vmem:[#allocation2 + $0x30] sm:$0xff] %vm754, %v738
        %758 = vst.msk [vmem:[#allocation2 + $0x40] sm:$0xff] %vm754, %v740
        %759 = vst.msk [vmem:[#allocation2 + $0x50] sm:$0xff] %vm754, %v742
        %vm760 = vcmask 516096
        %vm761 = vmand %vm760, %vm683
        %v762 = vld [vmem:[#allocation2] sm:$0x1]
        %v763 = vsel %vm761, 0, %v762
        %764 = vst [vmem:[#allocation2] sm:$0x1] %v763
        %v765 = vld [vmem:[#allocation2] sm:$0xff]
        %v766 = vld [vmem:[#allocation2 + $0x10] sm:$0xff]
        %v767 = vld [vmem:[#allocation2 + $0x20] sm:$0xff]
        %v768 = vld [vmem:[#allocation2 + $0x30] sm:$0xff]
        %v769 = vld [vmem:[#allocation2 + $0x40] sm:$0xff]
        %v770 = vld [vmem:[#allocation2 + $0x50] sm:$0xff]
        %v772 = vshrl.u32 %v665, 16
        %v774 = vrot.slane %v772, 7
        %v775 = vshll.u32 %v665, 16
        %v777 = vor.u32 %v774, %v775
        %v779 = vshrl.u32 %v666, 16
        %v781 = vrot.slane %v779, 7
        %v782 = vshll.u32 %v666, 16
        %v784 = vor.u32 %v781, %v782
        %v785 = vsel %vm683, %v774, %v784
        %v787 = vshrl.u32 %v667, 16
        %v789 = vrot.slane %v787, 7
        %v790 = vshll.u32 %v667, 16
        %v792 = vor.u32 %v789, %v790
        %v793 = vsel %vm683, %v781, %v792
        %v795 = vshrl.u32 %v668, 16
        %v797 = vrot.slane %v795, 7
        %v798 = vshll.u32 %v668, 16
        %v800 = vor.u32 %v797, %v798
        %v801 = vsel %vm683, %v789, %v800
        %v803 = vshrl.u32 %v669, 16
        %v805 = vrot.slane %v803, 7
        %v806 = vshll.u32 %v669, 16
        %v808 = vor.u32 %v805, %v806
        %v809 = vsel %vm683, %v797, %v808
        %v811 = vshrl.u32 %v670, 16
        %v813 = vrot.slane %v811, 7
        %v814 = vshll.u32 %v670, 16
        %v816 = vor.u32 %v813, %v814
        %v817 = vsel %vm683, %v805, %v816
        %v824 = vmul.bf16 %v765, %v777
        %v825 = vmul.bf16 %v766, %v785
        %v826 = vmul.bf16 %v767, %v793
        %v827 = vmul.bf16 %v768, %v801
        %v828 = vmul.bf16 %v769, %v809
        %v829 = vmul.bf16 %v770, %v817
        %vm830 = vsmask.f32 7424
        %v832 = vshrl.u32 %v824, 16
        %v834 = vshll.u32 %v824, 16
        %v836 = vrot.slane %v834, 1
        %v837 = vor.u32 %v832, %v836
        %v839 = vshll.u32 %v825, 16
        %v841 = vrot.slane %v839, 1
        %v842 = vsel %vm830, %v837, %v841
        %v843 = vshrl.u32 %v825, 16
        %v845 = vor.u32 %v843, %v841
        %v847 = vshll.u32 %v826, 16
        %v849 = vrot.slane %v847, 1
        %v850 = vsel %vm830, %v845, %v849
        %v851 = vshrl.u32 %v826, 16
        %v853 = vor.u32 %v851, %v849
        %v855 = vshll.u32 %v827, 16
        %v857 = vrot.slane %v855, 1
        %v858 = vsel %vm830, %v853, %v857
        %v859 = vshrl.u32 %v827, 16
        %v861 = vor.u32 %v859, %v857
        %v863 = vshll.u32 %v828, 16
        %v865 = vrot.slane %v863, 1
        %v866 = vsel %vm830, %v861, %v865
        %v867 = vshrl.u32 %v828, 16
        %v869 = vor.u32 %v867, %v865
        %v871 = vshll.u32 %v829, 16
        %v873 = vrot.slane %v871, 1
        %v874 = vsel %vm830, %v869, %v873
        %v875 = vshrl.u32 %v829, 16
        %v877 = vor.u32 %v875, %v873
        %878 = vrot.lane.b32.xlu0 %v842, 64
        %v879 = vpop.permute.xlu0 %878
        %880 = vrot.lane.b32.xlu0 %v850, 64
        %v881 = vpop.permute.xlu0 %880
        %882 = vrot.lane.b32.xlu0 %v858, 64
        %v883 = vpop.permute.xlu0 %882
        %884 = vrot.lane.b32.xlu0 %v866, 64
        %v885 = vpop.permute.xlu0 %884
        %886 = vrot.lane.b32.xlu0 %v874, 64
        %v887 = vpop.permute.xlu0 %886
        %888 = vrot.lane.b32.xlu0 %v877, 64
        %v889 = vpop.permute.xlu0 %888
        %896 = vst.msk [vmem:[#allocation2 + $0x8] sm:$0xff] %vm754, %v879
        %897 = vst.msk [vmem:[#allocation2 + $0x18] sm:$0xff] %vm754, %v881
        %898 = vst.msk [vmem:[#allocation2 + $0x28] sm:$0xff] %vm754, %v883
        %899 = vst.msk [vmem:[#allocation2 + $0x38] sm:$0xff] %vm754, %v885
        %900 = vst.msk [vmem:[#allocation2 + $0x48] sm:$0xff] %vm754, %v887
        %vm901 = vmand %vm749, %vm830
        %v902 = vld [vmem:[#allocation2 + $0x58] sm:$0xff]
        %v903 = vsel %vm901, %v889, %v902
        %904 = vst [vmem:[#allocation2 + $0x58] sm:$0xff] %v903
        %vm905 = vcmask 523271
        %vm906 = vsmask.f32 7966
        %vm907 = vmand %vm905, %vm906
        %v908 = vld [vmem:[#allocation2 + $0x58] sm:$0x80]
        %v909 = vsel %vm907, 0, %v908
        %910 = vst [vmem:[#allocation2 + $0x58] sm:$0x80] %v909
        %v911 = vld [vmem:[#allocation2] sm:$0xff]
        %v912 = vld [vmem:[#allocation2 + $0x8] sm:$0xff]
        %v913 = vld [vmem:[#allocation2 + $0x10] sm:$0xff]
        %v914 = vld [vmem:[#allocation2 + $0x18] sm:$0xff]
        %v915 = vld [vmem:[#allocation2 + $0x20] sm:$0xff]
        %v916 = vld [vmem:[#allocation2 + $0x28] sm:$0xff]
        %v917 = vld [vmem:[#allocation2 + $0x30] sm:$0xff]
        %v918 = vld [vmem:[#allocation2 + $0x38] sm:$0xff]
        %v919 = vld [vmem:[%s4] sm:$0xf]
        %v920 = vld [vmem:[%s4 + $0x4] sm:$0xf]
        %v921 = vld [vmem:[%s4 + $0x8] sm:$0xf]
        %v922 = vld [vmem:[%s4 + $0xc] sm:$0xf]
        %v923 = vld [vmem:[%s4 + $0x10] sm:$0xf]
        %v924 = vld [vmem:[%s4 + $0x14] sm:$0xf]
        %v925 = vld [vmem:[%s4 + $0x18] sm:$0xf]
        %v926 = vld [vmem:[%s4 + $0x1c] sm:$0xf]
        %v927 = vld [vmem:[%s4 + $0x20] sm:$0xf]
        %v928 = vld [vmem:[%s4 + $0x24] sm:$0xf]
        %v929 = vld [vmem:[%s4 + $0x28] sm:$0xf]
        %v930 = vld [vmem:[%s4 + $0x2c] sm:$0xf]
        %v931 = vld [vmem:[%s4 + $0x30] sm:$0xf]
        %v932 = vld [vmem:[%s4 + $0x34] sm:$0xf]
        %v933 = vld [vmem:[%s4 + $0x38] sm:$0xf]
        %v934 = vld [vmem:[%s4 + $0x3c] sm:$0xf]
        %v935 = vld [vmem:[%s4 + $0x40] sm:$0xf]
        %v936 = vld [vmem:[%s4 + $0x44] sm:$0xf]
        %v937 = vld [vmem:[%s4 + $0x48] sm:$0xf]
        %v938 = vld [vmem:[%s4 + $0x4c] sm:$0xf]
        %v939 = vld [vmem:[%s4 + $0x50] sm:$0xf]
        %v940 = vld [vmem:[%s4 + $0x54] sm:$0xf]
        %v941 = vld [vmem:[%s4 + $0x58] sm:$0xf]
        %v942 = vld [vmem:[%s4 + $0x5c] sm:$0xf]
        %v967 = vunpack.c.l.b16 %v919
        %v968 = vunpack.c.l.b16 %v920
        %v969 = vunpack.c.l.b16 %v921
        %v970 = vunpack.c.l.b16 %v922
        %v971 = vunpack.c.l.b16 %v923
        %v972 = vunpack.c.l.b16 %v924
        %v973 = vunpack.c.l.b16 %v925
        %v974 = vunpack.c.l.b16 %v926
        %v975 = vunpack.c.l.b16 %v927
        %v976 = vunpack.c.l.b16 %v928
        %v977 = vunpack.c.l.b16 %v929
        %v978 = vunpack.c.l.b16 %v930
        %v979 = vunpack.c.l.b16 %v931
        %v980 = vunpack.c.l.b16 %v932
        %v981 = vunpack.c.l.b16 %v933
        %v982 = vunpack.c.l.b16 %v934
        %v983 = vunpack.c.l.b16 %v935
        %v984 = vunpack.c.l.b16 %v936
        %v985 = vunpack.c.l.b16 %v937
        %v986 = vunpack.c.l.b16 %v938
        %v987 = vunpack.c.l.b16 %v939
        %v988 = vunpack.c.l.b16 %v940
        %v989 = vunpack.c.l.b16 %v941
        %v990 = vunpack.c.l.b16 %v942
        %v991 = vpack.c.b16 %v968, %v967
        %v992 = vpack.c.b16 %v970, %v969
        %v993 = vpack.c.b16 %v972, %v971
        %v994 = vpack.c.b16 %v974, %v973
        %v995 = vpack.c.b16 %v976, %v975
        %v996 = vpack.c.b16 %v978, %v977
        %v997 = vpack.c.b16 %v980, %v979
        %v998 = vpack.c.b16 %v982, %v981
        %v999 = vpack.c.b16 %v984, %v983
        %v1000 = vpack.c.b16 %v986, %v985
        %v1001 = vpack.c.b16 %v988, %v987
        %v1002 = vpack.c.b16 %v990, %v989
        %v1016 = vsel %vm754, %v912, 0
        %v1019 = vsel %vm754, %v914, 0
        %v1022 = vsel %vm754, %v916, 0
        %v1025 = vsel %vm754, %v918, 0
        %1027 = vmatprep.subr.bf16.mxu0 0
        %1028 = vmatpush1.bf16.msra.mxu0 %v991
        %1029 = vmatprep.subr.bf16.mxu0 0
        %1030 = vmatpush1.bf16.msra.mxu0 %v992
        %1031 = vmatprep.subr.bf16.mxu0 0
        %1032 = vmatpush1.bf16.msra.mxu0 %v993
        %1033 = vmatprep.subr.bf16.mxu0 0
        %1034 = vmatpush1.bf16.msra.mxu0 %v994
        %1035 = vmatprep.subr.bf16.mxu0 0
        %1036 = vmatpush1.bf16.msra.mxu0 %v995
        %1037 = vmatprep.subr.bf16.mxu0 0
        %1038 = vmatpush1.bf16.msra.mxu0 %v996
        %1039 = vmatprep.subr.bf16.mxu0 0
        %1040 = vmatpush1.bf16.msra.mxu0 %v997
        %1041 = vmatprep.subr.bf16.mxu0 0
        %1042 = vmatpush1.bf16.msra.mxu0 %v998
        %1043 = vmatprep.subr.bf16.mxu0 0
        %1044 = vmatpush1.bf16.msra.mxu0 %v999
        %1045 = vmatprep.subr.bf16.mxu0 0
        %1046 = vmatpush1.bf16.msra.mxu0 %v1000
        %1047 = vmatprep.subr.bf16.mxu0 0
        %1048 = vmatpush1.bf16.msra.mxu0 %v1001
        %1049 = vmatprep.subr.bf16.mxu0 0
        %1050 = vmatpush1.bf16.msra.mxu0 %v1002
        %1051 = vmatprep.subr.bf16.mxu0 0
        %1052 = vmatpush1.bf16.msra.mxu0 0
        %1053 = vmatprep.subr.bf16.mxu0 0
        %1054 = vmatpush1.bf16.msra.mxu0 0
        %1055 = vmatprep.subr.bf16.mxu0 0
        %1056 = vmatpush1.bf16.msra.mxu0 0
        %1057 = vmatprep.subr.bf16.mxu0 0
        %1058 = vmatpush1.bf16.msra.mxu0 0
        %1059 = vmatprep.mubr.bf16.mxu0 %v1016
        %1060 = vmatmul.mubr.bf16.gmra.mrb[0].mxu0 %v911
        %v1061 = vpop.f32.mrb[0].mxu0
        %v1062 = vadd.f32 0.0, %v1061
        %v1063 = vpop.f32.mrb[0].mxu0
        %v1064 = vpop.f32.mrb[0].mxu0
        %v1065 = vadd.f32 0.0, %v1064
        %v1066 = vpop.f32.mrb[0].mxu0
        %1067 = vmatprep.mubr.bf16.mxu0 %v1019
        %1068 = vmatmul.mubr.bf16.gmra.mrb[0].mxu0 %v913
        %v1069 = vpop.f32.mrb[0].mxu0
        %v1070 = vadd.f32 0.0, %v1069
        %v1071 = vpop.f32.mrb[0].mxu0
        %v1072 = vpop.f32.mrb[0].mxu0
        %v1073 = vadd.f32 0.0, %v1072
        %v1074 = vpop.f32.mrb[0].mxu0
        %1075 = vmatprep.mubr.bf16.mxu0 %v1022
        %1076 = vmatmul.mubr.bf16.gmra.mrb[0].mxu0 %v915
        %v1077 = vpop.f32.mrb[0].mxu0
        %v1078 = vadd.f32 0.0, %v1077
        %v1079 = vpop.f32.mrb[0].mxu0
        %v1080 = vpop.f32.mrb[0].mxu0
        %v1081 = vadd.f32 0.0, %v1080
        %v1082 = vpop.f32.mrb[0].mxu0
        %1083 = vmatprep.mubr.bf16.mxu0 %v1025
        %1084 = vmatmul.mubr.bf16.gmra.mrb[0].mxu0 %v917
        %v1085 = vpop.f32.mrb[0].mxu0
        %v1086 = vadd.f32 0.0, %v1085
        %v1087 = vpop.f32.mrb[0].mxu0
        %v1088 = vpop.f32.mrb[0].mxu0
        %v1089 = vadd.f32 0.0, %v1088
        %v1090 = vpop.f32.mrb[0].mxu0
        %1091 = vdwg.mxu0
        %1092 = vst [vmem:[#allocation3] sm:$0xff] %v1062
        %1093 = vst [vmem:[#allocation3 + $0x8] sm:$0xff] %v1065
        %1094 = vst [vmem:[#allocation3 + $0x10] sm:$0xff] %v1070
        %1095 = vst [vmem:[#allocation3 + $0x18] sm:$0xff] %v1073
        %1096 = vst [vmem:[#allocation3 + $0x20] sm:$0xff] %v1078
        %1097 = vst [vmem:[#allocation3 + $0x28] sm:$0xff] %v1081
        %1098 = vst [vmem:[#allocation3 + $0x30] sm:$0xff] %v1086
        %1099 = vst [vmem:[#allocation3 + $0x38] sm:$0xff] %v1089
        %v1100 = vld [vmem:[#allocation2 + $0x10] sm:$0xff]
        %v1101 = vld [vmem:[#allocation2 + $0x18] sm:$0xff]
        %v1102 = vld [vmem:[#allocation2 + $0x20] sm:$0xff]
        %v1103 = vld [vmem:[#allocation2 + $0x28] sm:$0xff]
        %v1104 = vld [vmem:[#allocation2 + $0x30] sm:$0xff]
        %v1105 = vld [vmem:[#allocation2 + $0x38] sm:$0xff]
        %v1106 = vld [vmem:[#allocation2 + $0x40] sm:$0xff]
        %v1107 = vld [vmem:[#allocation2 + $0x48] sm:$0xff]
        %s1108 = scalar_lea.vmem %s4, 96
        %v1109 = vld [vmem:[%s1108] sm:$0xf]
        %v1110 = vld [vmem:[%s1108 + $0x4] sm:$0xf]
        %v1111 = vld [vmem:[%s1108 + $0x8] sm:$0xf]
        %v1112 = vld [vmem:[%s1108 + $0xc] sm:$0xf]
        %v1113 = vld [vmem:[%s1108 + $0x10] sm:$0xf]
        %v1114 = vld [vmem:[%s1108 + $0x14] sm:$0xf]
        %v1115 = vld [vmem:[%s1108 + $0x18] sm:$0xf]
        %v1116 = vld [vmem:[%s1108 + $0x1c] sm:$0xf]
        %v1117 = vld [vmem:[%s1108 + $0x20] sm:$0xf]
        %v1118 = vld [vmem:[%s1108 + $0x24] sm:$0xf]
        %v1119 = vld [vmem:[%s1108 + $0x28] sm:$0xf]
        %v1120 = vld [vmem:[%s1108 + $0x2c] sm:$0xf]
        %v1121 = vld [vmem:[%s1108 + $0x30] sm:$0xf]
        %v1122 = vld [vmem:[%s1108 + $0x34] sm:$0xf]
        %v1123 = vld [vmem:[%s1108 + $0x38] sm:$0xf]
        %v1124 = vld [vmem:[%s1108 + $0x3c] sm:$0xf]
        %v1125 = vld [vmem:[%s1108 + $0x40] sm:$0xf]
        %v1126 = vld [vmem:[%s1108 + $0x44] sm:$0xf]
        %v1127 = vld [vmem:[%s1108 + $0x48] sm:$0xf]
        %v1128 = vld [vmem:[%s1108 + $0x4c] sm:$0xf]
        %v1129 = vld [vmem:[%s1108 + $0x50] sm:$0xf]
        %v1130 = vld [vmem:[%s1108 + $0x54] sm:$0xf]
        %v1131 = vld [vmem:[%s1108 + $0x58] sm:$0xf]
        %v1132 = vld [vmem:[%s1108 + $0x5c] sm:$0xf]
        %v1157 = vunpack.c.l.b16 %v1109
        %v1158 = vunpack.c.l.b16 %v1110
        %v1159 = vunpack.c.l.b16 %v1111
        %v1160 = vunpack.c.l.b16 %v1112
        %v1161 = vunpack.c.l.b16 %v1113
        %v1162 = vunpack.c.l.b16 %v1114
        %v1163 = vunpack.c.l.b16 %v1115
        %v1164 = vunpack.c.l.b16 %v1116
        %v1165 = vunpack.c.l.b16 %v1117
        %v1166 = vunpack.c.l.b16 %v1118
        %v1167 = vunpack.c.l.b16 %v1119
        %v1168 = vunpack.c.l.b16 %v1120
        %v1169 = vunpack.c.l.b16 %v1121
        %v1170 = vunpack.c.l.b16 %v1122
        %v1171 = vunpack.c.l.b16 %v1123
        %v1172 = vunpack.c.l.b16 %v1124
        %v1173 = vunpack.c.l.b16 %v1125
        %v1174 = vunpack.c.l.b16 %v1126
        %v1175 = vunpack.c.l.b16 %v1127
        %v1176 = vunpack.c.l.b16 %v1128
        %v1177 = vunpack.c.l.b16 %v1129
        %v1178 = vunpack.c.l.b16 %v1130
        %v1179 = vunpack.c.l.b16 %v1131
        %v1180 = vunpack.c.l.b16 %v1132
        %v1181 = vpack.c.b16 %v1158, %v1157
        %v1182 = vpack.c.b16 %v1160, %v1159
        %v1183 = vpack.c.b16 %v1162, %v1161
        %v1184 = vpack.c.b16 %v1164, %v1163
        %v1185 = vpack.c.b16 %v1166, %v1165
        %v1186 = vpack.c.b16 %v1168, %v1167
        %v1187 = vpack.c.b16 %v1170, %v1169
        %v1188 = vpack.c.b16 %v1172, %v1171
        %v1189 = vpack.c.b16 %v1174, %v1173
        %v1190 = vpack.c.b16 %v1176, %v1175
        %v1191 = vpack.c.b16 %v1178, %v1177
        %v1192 = vpack.c.b16 %v1180, %v1179
        %v1206 = vsel %vm754, %v1101, 0
        %v1209 = vsel %vm754, %v1103, 0
        %v1212 = vsel %vm754, %v1105, 0
        %v1215 = vsel %vm754, %v1107, 0
        %1217 = vmatprep.subr.bf16.mxu0 0
        %1218 = vmatpush1.bf16.msra.mxu0 %v1181
        %1219 = vmatprep.subr.bf16.mxu0 0
        %1220 = vmatpush1.bf16.msra.mxu0 %v1182
        %1221 = vmatprep.subr.bf16.mxu0 0
        %1222 = vmatpush1.bf16.msra.mxu0 %v1183
        %1223 = vmatprep.subr.bf16.mxu0 0
        %1224 = vmatpush1.bf16.msra.mxu0 %v1184
        %1225 = vmatprep.subr.bf16.mxu0 0
        %1226 = vmatpush1.bf16.msra.mxu0 %v1185
        %1227 = vmatprep.subr.bf16.mxu0 0
        %1228 = vmatpush1.bf16.msra.mxu0 %v1186
        %1229 = vmatprep.subr.bf16.mxu0 0
        %1230 = vmatpush1.bf16.msra.mxu0 %v1187
        %1231 = vmatprep.subr.bf16.mxu0 0
        %1232 = vmatpush1.bf16.msra.mxu0 %v1188
        %1233 = vmatprep.subr.bf16.mxu0 0
        %1234 = vmatpush1.bf16.msra.mxu0 %v1189
        %1235 = vmatprep.subr.bf16.mxu0 0
        %1236 = vmatpush1.bf16.msra.mxu0 %v1190
        %1237 = vmatprep.subr.bf16.mxu0 0
        %1238 = vmatpush1.bf16.msra.mxu0 %v1191
        %1239 = vmatprep.subr.bf16.mxu0 0
        %1240 = vmatpush1.bf16.msra.mxu0 %v1192
        %1241 = vmatprep.subr.bf16.mxu0 0
        %1242 = vmatpush1.bf16.msra.mxu0 0
        %1243 = vmatprep.subr.bf16.mxu0 0
        %1244 = vmatpush1.bf16.msra.mxu0 0
        %1245 = vmatprep.subr.bf16.mxu0 0
        %1246 = vmatpush1.bf16.msra.mxu0 0
        %1247 = vmatprep.subr.bf16.mxu0 0
        %1248 = vmatpush1.bf16.msra.mxu0 0
        %1249 = vmatprep.mubr.bf16.mxu0 %v1206
        %1250 = vmatmul.mubr.bf16.gmra.mrb[0].mxu0 %v1100
        %v1251 = vpop.f32.mrb[0].mxu0
        %v1252 = vadd.f32 0.0, %v1251
        %v1253 = vpop.f32.mrb[0].mxu0
        %v1254 = vpop.f32.mrb[0].mxu0
        %v1255 = vadd.f32 0.0, %v1254
        %v1256 = vpop.f32.mrb[0].mxu0
        %1257 = vmatprep.mubr.bf16.mxu0 %v1209
        %1258 = vmatmul.mubr.bf16.gmra.mrb[0].mxu0 %v1102
        %v1259 = vpop.f32.mrb[0].mxu0
        %v1260 = vadd.f32 0.0, %v1259
        %v1261 = vpop.f32.mrb[0].mxu0
        %v1262 = vpop.f32.mrb[0].mxu0
        %v1263 = vadd.f32 0.0, %v1262
        %v1264 = vpop.f32.mrb[0].mxu0
        %1265 = vmatprep.mubr.bf16.mxu0 %v1212
        %1266 = vmatmul.mubr.bf16.gmra.mrb[0].mxu0 %v1104
        %v1267 = vpop.f32.mrb[0].mxu0
        %v1268 = vadd.f32 0.0, %v1267
        %v1269 = vpop.f32.mrb[0].mxu0
        %v1270 = vpop.f32.mrb[0].mxu0
        %v1271 = vadd.f32 0.0, %v1270
        %v1272 = vpop.f32.mrb[0].mxu0
        %1273 = vmatprep.mubr.bf16.mxu0 %v1215
        %1274 = vmatmul.mubr.bf16.gmra.mrb[0].mxu0 %v1106
        %v1275 = vpop.f32.mrb[0].mxu0
        %v1276 = vadd.f32 0.0, %v1275
        %v1277 = vpop.f32.mrb[0].mxu0
        %v1278 = vpop.f32.mrb[0].mxu0
        %v1279 = vadd.f32 0.0, %v1278
        %v1280 = vpop.f32.mrb[0].mxu0
        %1281 = vdwg.mxu0
        %v1282 = vld [vmem:[#allocation3] sm:$0xff]
        %v1283 = vld [vmem:[#allocation3 + $0x8] sm:$0xff]
        %v1284 = vld [vmem:[#allocation3 + $0x10] sm:$0xff]
        %v1285 = vld [vmem:[#allocation3 + $0x18] sm:$0xff]
        %v1286 = vld [vmem:[#allocation3 + $0x20] sm:$0xff]
        %v1287 = vld [vmem:[#allocation3 + $0x28] sm:$0xff]
        %v1288 = vld [vmem:[#allocation3 + $0x30] sm:$0xff]
        %v1289 = vld [vmem:[#allocation3 + $0x38] sm:$0xff]
        %v1290 = vadd.f32 %v1282, %v1252
        %v1291 = vadd.f32 %v1283, %v1255
        %v1292 = vadd.f32 %v1284, %v1260
        %v1293 = vadd.f32 %v1285, %v1263
        %v1294 = vadd.f32 %v1286, %v1268
        %v1295 = vadd.f32 %v1287, %v1271
        %v1296 = vadd.f32 %v1288, %v1276
        %v1297 = vadd.f32 %v1289, %v1279
        %1298 = vst [vmem:[#allocation3] sm:$0xff] %v1290
        %1299 = vst [vmem:[#allocation3 + $0x8] sm:$0xff] %v1291
        %1300 = vst [vmem:[#allocation3 + $0x10] sm:$0xff] %v1292
        %1301 = vst [vmem:[#allocation3 + $0x18] sm:$0xff] %v1293
        %1302 = vst [vmem:[#allocation3 + $0x20] sm:$0xff] %v1294
        %1303 = vst [vmem:[#allocation3 + $0x28] sm:$0xff] %v1295
        %1304 = vst [vmem:[#allocation3 + $0x30] sm:$0xff] %v1296
        %1305 = vst [vmem:[#allocation3 + $0x38] sm:$0xff] %v1297
        %v1306 = vld [vmem:[#allocation2 + $0x20] sm:$0xff]
        %v1307 = vld [vmem:[#allocation2 + $0x28] sm:$0xff]
        %v1308 = vld [vmem:[#allocation2 + $0x30] sm:$0xff]
        %v1309 = vld [vmem:[#allocation2 + $0x38] sm:$0xff]
        %v1310 = vld [vmem:[#allocation2 + $0x40] sm:$0xff]
        %v1311 = vld [vmem:[#allocation2 + $0x48] sm:$0xff]
        %v1312 = vld [vmem:[#allocation2 + $0x50] sm:$0xff]
        %v1313 = vld [vmem:[#allocation2 + $0x58] sm:$0xff]
        %s1314 = scalar_lea.vmem %s4, 192
        %v1315 = vld [vmem:[%s1314] sm:$0xf]
        %v1316 = vld [vmem:[%s1314 + $0x4] sm:$0xf]
        %v1317 = vld [vmem:[%s1314 + $0x8] sm:$0xf]
        %v1318 = vld [vmem:[%s1314 + $0xc] sm:$0xf]
        %v1319 = vld [vmem:[%s1314 + $0x10] sm:$0xf]
        %v1320 = vld [vmem:[%s1314 + $0x14] sm:$0xf]
        %v1321 = vld [vmem:[%s1314 + $0x18] sm:$0xf]
        %v1322 = vld [vmem:[%s1314 + $0x1c] sm:$0xf]
        %v1323 = vld [vmem:[%s1314 + $0x20] sm:$0xf]
        %v1324 = vld [vmem:[%s1314 + $0x24] sm:$0xf]
        %v1325 = vld [vmem:[%s1314 + $0x28] sm:$0xf]
        %v1326 = vld [vmem:[%s1314 + $0x2c] sm:$0xf]
        %v1327 = vld [vmem:[%s1314 + $0x30] sm:$0xf]
        %v1328 = vld [vmem:[%s1314 + $0x34] sm:$0xf]
        %v1329 = vld [vmem:[%s1314 + $0x38] sm:$0xf]
        %v1330 = vld [vmem:[%s1314 + $0x3c] sm:$0xf]
        %v1331 = vld [vmem:[%s1314 + $0x40] sm:$0xf]
        %v1332 = vld [vmem:[%s1314 + $0x44] sm:$0xf]
        %v1333 = vld [vmem:[%s1314 + $0x48] sm:$0xf]
        %v1334 = vld [vmem:[%s1314 + $0x4c] sm:$0xf]
        %v1335 = vld [vmem:[%s1314 + $0x50] sm:$0xf]
        %v1336 = vld [vmem:[%s1314 + $0x54] sm:$0xf]
        %v1337 = vld [vmem:[%s1314 + $0x58] sm:$0xf]
        %v1338 = vld [vmem:[%s1314 + $0x5c] sm:$0xf]
        %v1363 = vunpack.c.l.b16 %v1315
        %v1364 = vunpack.c.l.b16 %v1316
        %v1365 = vunpack.c.l.b16 %v1317
        %v1366 = vunpack.c.l.b16 %v1318
        %v1367 = vunpack.c.l.b16 %v1319
        %v1368 = vunpack.c.l.b16 %v1320
        %v1369 = vunpack.c.l.b16 %v1321
        %v1370 = vunpack.c.l.b16 %v1322
        %v1371 = vunpack.c.l.b16 %v1323
        %v1372 = vunpack.c.l.b16 %v1324
        %v1373 = vunpack.c.l.b16 %v1325
        %v1374 = vunpack.c.l.b16 %v1326
        %v1375 = vunpack.c.l.b16 %v1327
        %v1376 = vunpack.c.l.b16 %v1328
        %v1377 = vunpack.c.l.b16 %v1329
        %v1378 = vunpack.c.l.b16 %v1330
        %v1379 = vunpack.c.l.b16 %v1331
        %v1380 = vunpack.c.l.b16 %v1332
        %v1381 = vunpack.c.l.b16 %v1333
        %v1382 = vunpack.c.l.b16 %v1334
        %v1383 = vunpack.c.l.b16 %v1335
        %v1384 = vunpack.c.l.b16 %v1336
        %v1385 = vunpack.c.l.b16 %v1337
        %v1386 = vunpack.c.l.b16 %v1338
        %v1387 = vpack.c.b16 %v1364, %v1363
        %v1388 = vpack.c.b16 %v1366, %v1365
        %v1389 = vpack.c.b16 %v1368, %v1367
        %v1390 = vpack.c.b16 %v1370, %v1369
        %v1391 = vpack.c.b16 %v1372, %v1371
        %v1392 = vpack.c.b16 %v1374, %v1373
        %v1393 = vpack.c.b16 %v1376, %v1375
        %v1394 = vpack.c.b16 %v1378, %v1377
        %v1395 = vpack.c.b16 %v1380, %v1379
        %v1396 = vpack.c.b16 %v1382, %v1381
        %v1397 = vpack.c.b16 %v1384, %v1383
        %v1398 = vpack.c.b16 %v1386, %v1385
        %v1412 = vsel %vm754, %v1307, 0
        %v1415 = vsel %vm754, %v1309, 0
        %v1418 = vsel %vm754, %v1311, 0
        %v1421 = vsel %vm754, %v1313, 0
        %1423 = vmatprep.subr.bf16.mxu0 0
        %1424 = vmatpush1.bf16.msra.mxu0 %v1387
        %1425 = vmatprep.subr.bf16.mxu0 0
        %1426 = vmatpush1.bf16.msra.mxu0 %v1388
        %1427 = vmatprep.subr.bf16.mxu0 0
        %1428 = vmatpush1.bf16.msra.mxu0 %v1389
        %1429 = vmatprep.subr.bf16.mxu0 0
        %1430 = vmatpush1.bf16.msra.mxu0 %v1390
        %1431 = vmatprep.subr.bf16.mxu0 0
        %1432 = vmatpush1.bf16.msra.mxu0 %v1391
        %1433 = vmatprep.subr.bf16.mxu0 0
        %1434 = vmatpush1.bf16.msra.mxu0 %v1392
        %1435 = vmatprep.subr.bf16.mxu0 0
        %1436 = vmatpush1.bf16.msra.mxu0 %v1393
        %1437 = vmatprep.subr.bf16.mxu0 0
        %1438 = vmatpush1.bf16.msra.mxu0 %v1394
        %1439 = vmatprep.subr.bf16.mxu0 0
        %1440 = vmatpush1.bf16.msra.mxu0 %v1395
        %1441 = vmatprep.subr.bf16.mxu0 0
        %1442 = vmatpush1.bf16.msra.mxu0 %v1396
        %1443 = vmatprep.subr.bf16.mxu0 0
        %1444 = vmatpush1.bf16.msra.mxu0 %v1397
        %1445 = vmatprep.subr.bf16.mxu0 0
        %1446 = vmatpush1.bf16.msra.mxu0 %v1398
        %1447 = vmatprep.subr.bf16.mxu0 0
        %1448 = vmatpush1.bf16.msra.mxu0 0
        %1449 = vmatprep.subr.bf16.mxu0 0
        %1450 = vmatpush1.bf16.msra.mxu0 0
        %1451 = vmatprep.subr.bf16.mxu0 0
        %1452 = vmatpush1.bf16.msra.mxu0 0
        %1453 = vmatprep.subr.bf16.mxu0 0
        %1454 = vmatpush1.bf16.msra.mxu0 0
        %1455 = vmatprep.mubr.bf16.mxu0 %v1412
        %1456 = vmatmul.mubr.bf16.gmra.mrb[0].mxu0 %v1306
        %v1457 = vpop.f32.mrb[0].mxu0
        %v1458 = vadd.f32 0.0, %v1457
        %v1459 = vpop.f32.mrb[0].mxu0
        %v1460 = vpop.f32.mrb[0].mxu0
        %v1461 = vadd.f32 0.0, %v1460
        %v1462 = vpop.f32.mrb[0].mxu0
        %1463 = vmatprep.mubr.bf16.mxu0 %v1415
        %1464 = vmatmul.mubr.bf16.gmra.mrb[0].mxu0 %v1308
        %v1465 = vpop.f32.mrb[0].mxu0
        %v1466 = vadd.f32 0.0, %v1465
        %v1467 = vpop.f32.mrb[0].mxu0
        %v1468 = vpop.f32.mrb[0].mxu0
        %v1469 = vadd.f32 0.0, %v1468
        %v1470 = vpop.f32.mrb[0].mxu0
        %1471 = vmatprep.mubr.bf16.mxu0 %v1418
        %1472 = vmatmul.mubr.bf16.gmra.mrb[0].mxu0 %v1310
        %v1473 = vpop.f32.mrb[0].mxu0
        %v1474 = vadd.f32 0.0, %v1473
        %v1475 = vpop.f32.mrb[0].mxu0
        %v1476 = vpop.f32.mrb[0].mxu0
        %v1477 = vadd.f32 0.0, %v1476
        %v1478 = vpop.f32.mrb[0].mxu0
        %1479 = vmatprep.mubr.bf16.mxu0 %v1421
        %1480 = vmatmul.mubr.bf16.gmra.mrb[0].mxu0 %v1312
        %v1481 = vpop.f32.mrb[0].mxu0
        %v1482 = vadd.f32 0.0, %v1481
        %v1483 = vpop.f32.mrb[0].mxu0
        %v1484 = vpop.f32.mrb[0].mxu0
        %v1485 = vadd.f32 0.0, %v1484
        %v1486 = vpop.f32.mrb[0].mxu0
        %1487 = vdwg.mxu0
        %v1488 = vld [vmem:[#allocation3] sm:$0xff]
        %v1489 = vld [vmem:[#allocation3 + $0x8] sm:$0xff]
        %v1490 = vld [vmem:[#allocation3 + $0x10] sm:$0xff]
        %v1491 = vld [vmem:[#allocation3 + $0x18] sm:$0xff]
        %v1492 = vld [vmem:[#allocation3 + $0x20] sm:$0xff]
        %v1493 = vld [vmem:[#allocation3 + $0x28] sm:$0xff]
        %v1494 = vld [vmem:[#allocation3 + $0x30] sm:$0xff]
        %v1495 = vld [vmem:[#allocation3 + $0x38] sm:$0xff]
        %v1496 = vadd.f32 %v1488, %v1458
        %v1497 = vadd.f32 %v1489, %v1461
        %v1498 = vadd.f32 %v1490, %v1466
        %v1499 = vadd.f32 %v1491, %v1469
        %v1500 = vadd.f32 %v1492, %v1474
        %v1501 = vadd.f32 %v1493, %v1477
        %v1502 = vadd.f32 %v1494, %v1482
        %v1503 = vadd.f32 %v1495, %v1485
        %1504 = vst [vmem:[#allocation3] sm:$0xff] %v1496
        %1505 = vst [vmem:[#allocation3 + $0x8] sm:$0xff] %v1497
        %1506 = vst [vmem:[#allocation3 + $0x10] sm:$0xff] %v1498
        %1507 = vst [vmem:[#allocation3 + $0x18] sm:$0xff] %v1499
        %1508 = vst [vmem:[#allocation3 + $0x20] sm:$0xff] %v1500
        %1509 = vst [vmem:[#allocation3 + $0x28] sm:$0xff] %v1501
        %1510 = vst [vmem:[#allocation3 + $0x30] sm:$0xff] %v1502
        %1511 = vst [vmem:[#allocation3 + $0x38] sm:$0xff] %v1503
        %v1512 = vld [vmem:[#allocation3] sm:$0xff]
        %v1513 = vld [vmem:[#allocation3 + $0x8] sm:$0xff]
        %v1514 = vld [vmem:[#allocation3 + $0x10] sm:$0xff]
        %v1515 = vld [vmem:[#allocation3 + $0x18] sm:$0xff]
        %v1516 = vld [vmem:[#allocation3 + $0x20] sm:$0xff]
        %v1517 = vld [vmem:[#allocation3 + $0x28] sm:$0xff]
        %v1518 = vld [vmem:[#allocation3 + $0x30] sm:$0xff]
        %v1519 = vld [vmem:[#allocation3 + $0x38] sm:$0xff]
        %v1520 = vld [vmem:[%s5] sm:$0x1]
        %v1522 = vlaneseq
        %v1523 = vshrl.u32 %v1522, 7
        %v1524 = vsub.s32 0, %v1523
        %v1525 = vrot.slane %v1520, %v1524
        %v1527 = vadd.f32 %v1512, %v1525
        %v1528 = vadd.f32 %v1513, %v1525
        %v1529 = vadd.f32 %v1514, %v1525
        %v1530 = vadd.f32 %v1515, %v1525
        %v1531 = vadd.f32 %v1516, %v1525
        %v1532 = vadd.f32 %v1517, %v1525
        %v1533 = vadd.f32 %v1518, %v1525
        %v1534 = vadd.f32 %v1519, %v1525
        %v1535 = vmax.f32 %v1527, 0.0
        %v1536 = vmax.f32 %v1528, 0.0
        %v1537 = vmax.f32 %v1529, 0.0
        %v1538 = vmax.f32 %v1530, 0.0
        %v1539 = vmax.f32 %v1531, 0.0
        %v1540 = vmax.f32 %v1532, 0.0
        %v1541 = vmax.f32 %v1533, 0.0
        %v1542 = vmax.f32 %v1534, 0.0
        %v1543 = vpack.c.bf16 %v1536, %v1535
        %v1544 = vpack.c.bf16 %v1538, %v1537
        %v1545 = vpack.c.bf16 %v1540, %v1539
        %v1546 = vpack.c.bf16 %v1542, %v1541
        %v1551 = vunpack.c.l.b16 %v1543
        %v1552 = vunpack.c.h.b16 %v1543
        %v1553 = vunpack.c.l.b16 %v1544
        %v1554 = vunpack.c.h.b16 %v1544
        %v1555 = vunpack.c.l.b16 %v1545
        %v1556 = vunpack.c.h.b16 %v1545
        %v1557 = vunpack.c.l.b16 %v1546
        %v1558 = vunpack.c.h.b16 %v1546
        %v1559 = vpack.c.b16 %v1551, %v1551
        %v1560 = vpack.c.b16 %v1552, %v1552
        %v1561 = vpack.c.b16 %v1553, %v1553
        %v1562 = vpack.c.b16 %v1554, %v1554
        %v1563 = vpack.c.b16 %v1555, %v1555
        %v1564 = vpack.c.b16 %v1556, %v1556
        %v1565 = vpack.c.b16 %v1557, %v1557
        %v1566 = vpack.c.b16 %v1558, %v1558
        %1575 = vst [vmem:[%s381] sm:$0xf] %v1559
        %1576 = vst [vmem:[%s381 + $0x4] sm:$0xf] %v1560
        %1577 = vst [vmem:[%s381 + $0x8] sm:$0xf] %v1561
        %1578 = vst [vmem:[%s381 + $0xc] sm:$0xf] %v1562
        %1579 = vst [vmem:[%s381 + $0x10] sm:$0xf] %v1563
        %1580 = vst [vmem:[%s381 + $0x14] sm:$0xf] %v1564
        %1581 = vst [vmem:[%s381 + $0x18] sm:$0xf] %v1565
        %1582 = vst [vmem:[%s381 + $0x1c] sm:$0xf] %v1566
        %s1583 = sand.u32 %s211, 1
        %s1584 = scalar_lea.sflag [#allocation6], %s1583
        %s1585 = sand.u32 %s211, 1
        %s1586 = smul.addr %s1585, 32
        %s1587 = scalar_lea.vmem [#allocation9], %s1586
        // Predicated region
        $region61: #{tpu_custom_call.1} parent=43 // pred_check
          %p1588 = pneg %p221
        $region62: #{tpu_custom_call.1} parent=43 // pred_check_branch
          %1590 = sbr.rel (%p1588) target = $region64
        $region63: #{tpu_custom_call.1} parent=43 // pred_region
          %s1591 = smul.u32 8, %s31
          %s1593 = ssub.s32 512, 512
          %1594 = vsyncadd %s1584, %s1593
          %s1595 = smul.addr %s30, 32
          %s1596 = sadd.s32 %s1591, %s1595
          %s1597 = smul.addr %s1596, 64
          %s1598 = scalar_lea.hbm %s6, %s1597
          %s1599 = sshll.u32 %s1587, 4
          %s1600 = int_to_ptr.vmem [resolvable:$true] %s1599
          %1605 = dma.vmem_to_hbm [thread:$0]  %s1600, 512, %s1598, %s1584, 64, 64, 4
        $region64: #{tpu_custom_call.1} parent=43 // pred_fallthru
          _
      $region44: #{tpu_custom_call.1} parent=5 // pred_fallthru
        _
      %p1606 = scmp.le.s32.totalorder 2, %s21
      // Predicated region
      $region65: #{tpu_custom_call.1} parent=5 // pred_check
        %p1607 = pneg %p1606
      $region66: #{tpu_custom_call.1} parent=5 // pred_check_branch
        %1609 = sbr.rel (%p1607) target = $region68
      $region67: #{tpu_custom_call.1} parent=5 // pred_region
        %s1610 = ssub.s32 %s21, 2
        // Predicated region
        $region69: #{tpu_custom_call.1} parent=67 // pred_check
          %p1611 = pneg %p227
        $region70: #{tpu_custom_call.1} parent=67 // pred_check_branch
          %1613 = sbr.rel (%p1611) target = $region72
        $region71: #{tpu_custom_call.1} parent=67 // pred_region
          %s1614 = sand.u32 %s212, 1
          %s1615 = scalar_lea.sflag [#allocation6], %s1614
          %s1616 = sand.u32 %s212, 1
          %s1617 = smul.addr %s1616, 32
          %s1618 = scalar_lea.vmem [#allocation9], %s1617
          %1619 = dma.done %s1615, 512
        $region72: #{tpu_custom_call.1} parent=67 // pred_fallthru
          _
      $region68: #{tpu_custom_call.1} parent=5 // pred_fallthru
        _
    $region6: #{tpu_custom_call.1} parent=1 // loop_footer
      %s25 = sadd.s32 1, %s21
    $region7: #{tpu_custom_call.1} parent=1 // loop_footer_branch
      %20 = sbr.rel target = $region3
    $region8: #{tpu_custom_call.1} parent=1 // loop_exit
      _
    %1620 = vsyncpa [#allocation5], 1
    %s1621 = scalar_lea.sflag [#allocation5], 1
    %1622 = vsyncpa %s1621, 1
    %1623 = vsyncpa [#allocation8], 1
    %s1624 = scalar_lea.sflag [#allocation8], 1
    %1625 = vsyncpa %s1624, 1
    %1626 = vsyncpa [#allocation6], 1
    %s1627 = scalar_lea.sflag [#allocation6], 1
    %1628 = vsyncpa %s1627, 1

</llo_original>
